<compile_context>
chip_gen: v7x
topology: tpu7x:2x2x1
jax: 0.10.0
libtpu: 0.0.40
codegen_flags: <defaults>
</compile_context>

<pallas_src>
import functools

import numpy as np
import jax
import jax.numpy as jnp
from jax.experimental import pallas as pl
from jax.experimental.pallas import tpu as pltpu

_K = 5        # LeNet-5 conv kernel size
_B_TILE = 8   # images per grid step (M of the conv1 matmul = 8*28 = 224)


# ----------------------------------------------------------------------------
# Host-side weight packing helpers (numpy, run once, outside jit)
# ----------------------------------------------------------------------------
def _banded_conv_weights(w, w_in):
    """(Cout,Cin,k,k) -> (k*W_in*Cin, Wout*Cout) K-folded banded weight matrix.

    With a per-image row slab L[i, kh*W_in*Cin + j*Cin + c] = act[i+kh, j, c],
    the conv output in channel-fastest layout O[i, j*Cout+co] is  L @ Wcat.
    """
    cout, cin, k, _ = w.shape
    w = np.asarray(w, np.float32)
    wo = w_in - k + 1
    out = np.zeros((k, w_in * cin, wo * cout), np.float32)
    for kh in range(k):
        for kw in range(k):
            for j in range(wo):
                out[kh, (j + kw) * cin:(j + kw + 1) * cin,
                    j * cout:(j + 1) * cout] = w[:, :, kh, kw].T
    return out.reshape(k * w_in * cin, wo * cout)


def _colpool_matrix(wo, c):
    """Right matmul averaging adjacent columns (per channel) of an (H, wo*c)
    channel-fastest map: (wo*c, (wo//2)*c), factor 0.5."""
    wp = wo // 2
    m = np.zeros((wo * c, wp * c), np.float32)
    for p in range(wp):
        for ch in range(c):
            m[(2 * p) * c + ch, p * c + ch] = 0.5
            m[(2 * p + 1) * c + ch, p * c + ch] = 0.5
    return m


def _pool_tap_matrices(b_tile, h_in, h_out, k):
    """Block-diagonal left matrices fusing the 2x1 row-average pool with the
    next conv's tap-row gather, one per tap: (k, b_tile*h_out, b_tile*h_in).

    (M[kh] @ Z)[b*h_out+i, :] =
        0.5 * (Z[b*h_in + 2*(i+kh), :] + Z[b*h_in + 2*(i+kh)+1, :])
    """
    m = np.zeros((k, b_tile * h_out, b_tile * h_in), np.float32)
    for kh in range(k):
        for b in range(b_tile):
            for i in range(h_out):
                r = b * h_out + i
                c = b * h_in + 2 * (i + kh)
                m[kh, r, c] = 0.5
                m[kh, r, c + 1] = 0.5
    return m


# ----------------------------------------------------------------------------
# Parameters (deterministic, PyTorch-default-style uniform(-1/sqrt(fan_in), +))
# ----------------------------------------------------------------------------
def init_params(key, num_classes):
    """Raw parameters in PyTorch layouts: conv (Cout,Cin,k,k), linear (out,in)."""
    def uni(k, shape, fan_in):
        b = 1.0 / float(fan_in) ** 0.5
        return jax.random.uniform(k, shape, jnp.float32, -b, b)

    ks = jax.random.split(key, 10)
    p = {}
    p["w1"], p["b1"] = uni(ks[0], (6, 1, _K, _K), 25), uni(ks[1], (6,), 25)
    p["w2"], p["b2"] = uni(ks[2], (16, 6, _K, _K), 150), uni(ks[3], (16,), 150)
    p["w3"], p["b3"] = uni(ks[4], (120, 16, _K, _K), 400), uni(ks[5], (120,), 400)
    p["w4"], p["b4"] = uni(ks[6], (84, 120), 120), uni(ks[7], (84,), 120)
    p["w5"], p["b5"] = uni(ks[8], (num_classes, 84), 84), uni(ks[9], (num_classes,), 84)
    return p


_CONST_ORDER = ("w1c", "b1r", "pw1", "ps1",
                "w2c", "b2r", "pw2", "ps2",
                "w3c", "b3r", "w4", "b4", "w5", "b5")


def pack_params(params, b_tile=_B_TILE):
    """Pack raw (torch-layout) parameters into the fused kernel's constants.

    Matmul operands are stored in bf16 (pool/select matrices are exactly
    representable); biases stay f32 (added post-accumulation on the VPU).
    """
    p = {k: np.asarray(v, np.float32) for k, v in params.items()}
    bf16, f32 = jnp.bfloat16, jnp.float32
    packed = {
        # conv1: (B*28, 160) @ (160, 168)
        "w1c": (_banded_conv_weights(p["w1"], 32), bf16),        # (160, 168)
        "b1r": (np.tile(p["b1"], 28)[None, :], f32),             # (1, 168)
        "pw1": (_colpool_matrix(28, 6), bf16),                   # (168, 84)
        "ps1": (_pool_tap_matrices(b_tile, 28, 10, _K), bf16),   # (5, B*10, B*28)
        # conv2: (B*10, 420) @ (420, 160)
        "w2c": (_banded_conv_weights(p["w2"], 14), bf16),        # (420, 160)
        "b2r": (np.tile(p["b2"], 10)[None, :], f32),             # (1, 160)
        "pw2": (_colpool_matrix(10, 16), bf16),                  # (160, 80)
        "ps2": (_pool_tap_matrices(b_tile, 10, 1, _K), bf16),    # (5, B, B*10)
        # conv3: (B, 400) @ (400, 120)
        "w3c": (_banded_conv_weights(p["w3"], 5), bf16),         # (400, 120)
        "b3r": (p["b3"][None, :], f32),                          # (1, 120)
        # classifier
        "w4": (p["w4"].T.copy(), bf16),                          # (120, 84)
        "b4": (p["b4"][None, :], f32),                           # (1, 84)
        "w5": (p["w5"].T.copy(), bf16),                          # (84, nc)
        "b5": (p["b5"][None, :], f32),                           # (1, nc)
    }
    return {k: jnp.asarray(v, dtype=d) for k, (v, d) in packed.items()}


# ----------------------------------------------------------------------------
# Fused Pallas kernel: one grid step == B_TILE images, all VMEM/vreg resident
# ----------------------------------------------------------------------------
def _lenet5_kernel(xt_ref, w1c_ref, b1r_ref, pw1_ref, ps1_ref,
                   w2c_ref, b2r_ref, pw2_ref, ps2_ref, w3c_ref, b3r_ref,
                   w4_ref, b4_ref, w5_ref, b5_ref, out_ref):
    bf16 = jnp.bfloat16
    dot = functools.partial(jnp.dot, preferred_element_type=jnp.float32)

    # conv1 (1->6, k5) + tanh: single K-folded MXU matmul, M = B_TILE*28.
    y1 = jnp.tanh(dot(xt_ref[...], w1c_ref[...]) + b1r_ref[...])      # (224, 168) f32
    z1 = dot(y1.astype(bf16), pw1_ref[...]).astype(bf16)              # (224, 84) col-pooled

    # row-pool + conv2 tap gather (block-diag, batched M), K-folded conv2 + tanh.
    l2 = jnp.concatenate([dot(ps1_ref[kh], z1) for kh in range(_K)],
                         axis=-1)                                     # (80, 420) f32
    y2 = jnp.tanh(dot(l2.astype(bf16), w2c_ref[...]) + b2r_ref[...])  # (80, 160)
    z2 = dot(y2.astype(bf16), pw2_ref[...]).astype(bf16)              # (80, 80)

    # row-pool + conv3 tap gather (conv3 output is 1x1 -> rows collapse to batch).
    l3 = jnp.concatenate([dot(ps2_ref[kh], z2) for kh in range(_K)],
                         axis=-1)                                     # (8, 400) f32
    y3 = jnp.tanh(dot(l3.astype(bf16), w3c_ref[...]) + b3r_ref[...])  # (8, 120)

    # classifier: Linear(120->84)+tanh, Linear(84->nc), softmax (exact divide).
    h = jnp.tanh(dot(y3.astype(bf16), w4_ref[...]) + b4_ref[...])     # (8, 84)
    logits = dot(h.astype(bf16), w5_ref[...]) + b5_ref[...]           # (8, nc) f32
    m = jnp.max(logits, axis=-1, keepdims=True)
    e = jnp.exp(logits - m)
    probs = e / jnp.sum(e, axis=-1, keepdims=True)

    # one lane-packed batched store per grid step: [logits | probs]
    out_ref[...] = jnp.concatenate([logits, probs], axis=-1)          # (8, 2*nc)


def lenet5_forward(x_nchw, packed):
    """x_nchw: (B, 1, 32, 32) float32 -> (logits, probs), each (B, num_classes)."""
    batch = x_nchw.shape[0]
    nc = packed["b5"].shape[1]
    bt = _B_TILE
    bp = ((batch + bt - 1) // bt) * bt          # pad batch to a tile multiple

    x = x_nchw.astype(jnp.float32).reshape(batch, 32, 32)
    if bp != batch:
        x = jnp.pad(x, ((0, bp - batch), (0, 0), (0, 0)))

    # Layout plumbing in XLA (no model arithmetic): build the K-folded conv1
    # tap slab  xt[b*28 + i, kh*32 + j] = x[b, i+kh, j]  once; lane width 160.
    xt = jnp.concatenate([x[:, kh:kh + 28, :] for kh in range(_K)], axis=-1)
    xt = xt.reshape(bp * 28, _K * 32).astype(jnp.bfloat16)

    in_specs = [pl.BlockSpec((bt * 28, _K * 32), lambda g: (g, 0))]
    for name in _CONST_ORDER:
        arr = packed[name]
        # constant block == full array, index_map never changes -> fetched once
        in_specs.append(pl.BlockSpec(arr.shape, lambda g, nd=arr.ndim: (0,) * nd))

    out = pl.pallas_call(
        _lenet5_kernel,
        grid=(bp // bt,),
        out_shape=jax.ShapeDtypeStruct((bp, 2 * nc), jnp.float32),
        in_specs=in_specs,
        out_specs=pl.BlockSpec((bt, 2 * nc), lambda g: (g, 0)),
        compiler_params=pltpu.CompilerParams(
            dimension_semantics=("parallel",),      # batch tiles across TCs
            vmem_limit_bytes=32 * 1024 * 1024),     # safe on v7x (64 MiB VMEM)
    )(xt, *[packed[name] for name in _CONST_ORDER])

    return out[:batch, :nc], out[:batch, nc:]


# ----------------------------------------------------------------------------
# Pure-JAX (XLA) reference used to validate the fused kernel
# ----------------------------------------------------------------------------
def reference_forward(x_nchw, params):
    hp = jax.lax.Precision.HIGHEST
    x = x_nchw.astype(jnp.float32)

    def conv_tanh(v, w, b):
        y = jax.lax.conv_general_dilated(
            v, w, window_strides=(1, 1), padding="VALID",
            dimension_numbers=("NCHW", "OIHW", "NCHW"), precision=hp)
        return jnp.tanh(y + b[None, :, None, None])

    def avgpool2(v):
        s = jax.lax.reduce_window(v, 0.0, jax.lax.add,
                                  (1, 1, 2, 2), (1, 1, 2, 2), "VALID")
        return s * 0.25

    y = avgpool2(conv_tanh(x, params["w1"], params["b1"]))
    y = avgpool2(conv_tanh(y, params["w2"], params["b2"]))
    y = conv_tanh(y, params["w3"], params["b3"])
    y = y.reshape(y.shape[0], -1)
    y = jnp.tanh(jnp.dot(y, params["w4"].T, precision=hp) + params["b4"])
    logits = jnp.dot(y, params["w5"].T, precision=hp) + params["b5"]
    return logits, jax.nn.softmax(logits, axis=-1)


if __name__ == "__main__":
    num_classes = 10
    batch = 16          # 2 grid steps of B_TILE=8 -> both v7x TensorCores busy

    key = jax.random.PRNGKey(0)
    k_params, k_x = jax.random.split(key)
    params = init_params(k_params, num_classes)
    packed = pack_params(params)                 # host-side packing, once
    x = jax.random.normal(k_x, (batch, 1, 32, 32), jnp.float32)  # NCHW LeNet input

    logits, probs = jax.jit(lenet5_forward)(x, packed)
    logits = jax.block_until_ready(logits)
    probs = jax.block_until_ready(probs)

    assert logits.shape == (batch, num_classes)
    assert probs.shape == (batch, num_classes)
    assert bool(jnp.all(jnp.isfinite(logits)))
    # exact softmax divide -> rows sum to 1 to f32 rounding
    assert bool(jnp.all(jnp.abs(jnp.sum(probs, axis=1) - 1.0) < 1e-5))

    ref_logits, ref_probs = jax.jit(reference_forward)(x, params)
    err_l = float(jnp.max(jnp.abs(logits - ref_logits)))
    err_p = float(jnp.max(jnp.abs(probs - ref_probs)))
    # bf16 MXU operands (f32 accumulation) introduce ~1e-2-scale error vs the
    # f32 XLA reference.
    assert bool(jnp.allclose(logits, ref_logits, atol=6e-2, rtol=6e-2)), (
        f"logits mismatch, max abs err {err_l}")
    assert bool(jnp.allclose(probs, ref_probs, atol=3e-2)), (
        f"probs mismatch, max abs err {err_p}")

    print("KERNEL_OK")
</pallas_src>

<mosaic_0001>
module attributes {stable_mosaic.version = 11 : i64} {
  func.func @_lenet5_kernel(%arg0: i32, %arg1: memref<224x160xbf16, #tpu.memory_space<vmem>>, %arg2: memref<160x168xbf16, #tpu.memory_space<vmem>>, %arg3: memref<1x168xf32, #tpu.memory_space<vmem>>, %arg4: memref<168x84xbf16, #tpu.memory_space<vmem>>, %arg5: memref<5x80x224xbf16, #tpu.memory_space<vmem>>, %arg6: memref<420x160xbf16, #tpu.memory_space<vmem>>, %arg7: memref<1x160xf32, #tpu.memory_space<vmem>>, %arg8: memref<160x80xbf16, #tpu.memory_space<vmem>>, %arg9: memref<5x8x80xbf16, #tpu.memory_space<vmem>>, %arg10: memref<400x120xbf16, #tpu.memory_space<vmem>>, %arg11: memref<1x120xf32, #tpu.memory_space<vmem>>, %arg12: memref<120x84xbf16, #tpu.memory_space<vmem>>, %arg13: memref<1x84xf32, #tpu.memory_space<vmem>>, %arg14: memref<84x10xbf16, #tpu.memory_space<vmem>>, %arg15: memref<1x10xf32, #tpu.memory_space<vmem>>, %arg16: memref<8x20xf32, #tpu.memory_space<vmem>>) attributes {dimension_semantics = [#tpu.dimension_semantics<parallel>], iteration_bounds = array<i64: 2>, scalar_prefetch = 0 : i64, scratch_operands = 0 : i64, tpu.core_type = #tpu.core_type<tc>, window_params = [{transform_indices = @transform_0, window_bounds = array<i64: 224, 160>}, {pipeline_mode = #tpu.pipeline_mode<synchronous>, transform_indices = @transform_1, window_bounds = array<i64: 160, 168>}, {pipeline_mode = #tpu.pipeline_mode<synchronous>, transform_indices = @transform_2, window_bounds = array<i64: 1, 168>}, {pipeline_mode = #tpu.pipeline_mode<synchronous>, transform_indices = @transform_3, window_bounds = array<i64: 168, 84>}, {pipeline_mode = #tpu.pipeline_mode<synchronous>, transform_indices = @transform_4, window_bounds = array<i64: 5, 80, 224>}, {pipeline_mode = #tpu.pipeline_mode<synchronous>, transform_indices = @transform_5, window_bounds = array<i64: 420, 160>}, {pipeline_mode = #tpu.pipeline_mode<synchronous>, transform_indices = @transform_6, window_bounds = array<i64: 1, 160>}, {pipeline_mode = #tpu.pipeline_mode<synchronous>, transform_indices = @transform_7, window_bounds = array<i64: 160, 80>}, {pipeline_mode = #tpu.pipeline_mode<synchronous>, transform_indices = @transform_8, window_bounds = array<i64: 5, 8, 80>}, {pipeline_mode = #tpu.pipeline_mode<synchronous>, transform_indices = @transform_9, window_bounds = array<i64: 400, 120>}, {pipeline_mode = #tpu.pipeline_mode<synchronous>, transform_indices = @transform_10, window_bounds = array<i64: 1, 120>}, {pipeline_mode = #tpu.pipeline_mode<synchronous>, transform_indices = @transform_11, window_bounds = array<i64: 120, 84>}, {pipeline_mode = #tpu.pipeline_mode<synchronous>, transform_indices = @transform_12, window_bounds = array<i64: 1, 84>}, {pipeline_mode = #tpu.pipeline_mode<synchronous>, transform_indices = @transform_13, window_bounds = array<i64: 84, 10>}, {pipeline_mode = #tpu.pipeline_mode<synchronous>, transform_indices = @transform_14, window_bounds = array<i64: 1, 10>}, {transform_indices = @transform_15, window_bounds = array<i64: 8, 20>}]} {
    %c0 = arith.constant 0 : index
    %c0_0 = arith.constant 0 : index
    %0 = vector.load %arg1[%c0, %c0_0] : memref<224x160xbf16, #tpu.memory_space<vmem>>, vector<224x160xbf16>
    %c0_1 = arith.constant 0 : index
    %c0_2 = arith.constant 0 : index
    %1 = vector.load %arg2[%c0_1, %c0_2] : memref<160x168xbf16, #tpu.memory_space<vmem>>, vector<160x168xbf16>
    %cst = arith.constant dense<0.000000e+00> : vector<224x168xf32>
    %2 = tpu.matmul %0, %1, %cst {dimension_numbers = #tpu.dot_dimension_numbers<[1], [0], [0], [1], [0, 0, 1, 1], [], []>} : vector<224x160xbf16>, vector<160x168xbf16>, vector<224x168xf32> -> vector<224x168xf32>
    %c0_3 = arith.constant 0 : index
    %c0_4 = arith.constant 0 : index
    %3 = vector.load %arg3[%c0_3, %c0_4] : memref<1x168xf32, #tpu.memory_space<vmem>>, vector<1x168xf32>
    %4 = vector.broadcast %3 : vector<1x168xf32> to vector<224x168xf32>
    %5 = arith.addf %2, %4 : vector<224x168xf32>
    %6 = math.tanh %5 : vector<224x168xf32>
    %7 = arith.truncf %6 : vector<224x168xf32> to vector<224x168xbf16>
    %c0_5 = arith.constant 0 : index
    %c0_6 = arith.constant 0 : index
    %8 = vector.load %arg4[%c0_5, %c0_6] : memref<168x84xbf16, #tpu.memory_space<vmem>>, vector<168x84xbf16>
    %cst_7 = arith.constant dense<0.000000e+00> : vector<224x84xf32>
    %9 = tpu.matmul %7, %8, %cst_7 {dimension_numbers = #tpu.dot_dimension_numbers<[1], [0], [0], [1], [0, 0, 1, 1], [], []>} : vector<224x168xbf16>, vector<168x84xbf16>, vector<224x84xf32> -> vector<224x84xf32>
    %10 = arith.truncf %9 : vector<224x84xf32> to vector<224x84xbf16>
    %c0_8 = arith.constant 0 : index
    %c0_9 = arith.constant 0 : index
    %c0_10 = arith.constant 0 : index
    %11 = vector.load %arg5[%c0_8, %c0_9, %c0_10] : memref<5x80x224xbf16, #tpu.memory_space<vmem>>, vector<1x80x224xbf16>
    %12 = vector.shape_cast %11 : vector<1x80x224xbf16> to vector<80x224xbf16>
    %cst_11 = arith.constant dense<0.000000e+00> : vector<80x84xf32>
    %13 = tpu.matmul %12, %10, %cst_11 {dimension_numbers = #tpu.dot_dimension_numbers<[1], [0], [0], [1], [0, 0, 1, 1], [], []>} : vector<80x224xbf16>, vector<224x84xbf16>, vector<80x84xf32> -> vector<80x84xf32>
    %c1 = arith.constant 1 : index
    %c0_12 = arith.constant 0 : index
    %c0_13 = arith.constant 0 : index
    %14 = vector.load %arg5[%c1, %c0_12, %c0_13] : memref<5x80x224xbf16, #tpu.memory_space<vmem>>, vector<1x80x224xbf16>
    %15 = vector.shape_cast %14 : vector<1x80x224xbf16> to vector<80x224xbf16>
    %cst_14 = arith.constant dense<0.000000e+00> : vector<80x84xf32>
    %16 = tpu.matmul %15, %10, %cst_14 {dimension_numbers = #tpu.dot_dimension_numbers<[1], [0], [0], [1], [0, 0, 1, 1], [], []>} : vector<80x224xbf16>, vector<224x84xbf16>, vector<80x84xf32> -> vector<80x84xf32>
    %c2 = arith.constant 2 : index
    %c0_15 = arith.constant 0 : index
    %c0_16 = arith.constant 0 : index
    %17 = vector.load %arg5[%c2, %c0_15, %c0_16] : memref<5x80x224xbf16, #tpu.memory_space<vmem>>, vector<1x80x224xbf16>
    %18 = vector.shape_cast %17 : vector<1x80x224xbf16> to vector<80x224xbf16>
    %cst_17 = arith.constant dense<0.000000e+00> : vector<80x84xf32>
    %19 = tpu.matmul %18, %10, %cst_17 {dimension_numbers = #tpu.dot_dimension_numbers<[1], [0], [0], [1], [0, 0, 1, 1], [], []>} : vector<80x224xbf16>, vector<224x84xbf16>, vector<80x84xf32> -> vector<80x84xf32>
    %c3 = arith.constant 3 : index
    %c0_18 = arith.constant 0 : index
    %c0_19 = arith.constant 0 : index
    %20 = vector.load %arg5[%c3, %c0_18, %c0_19] : memref<5x80x224xbf16, #tpu.memory_space<vmem>>, vector<1x80x224xbf16>
    %21 = vector.shape_cast %20 : vector<1x80x224xbf16> to vector<80x224xbf16>
    %cst_20 = arith.constant dense<0.000000e+00> : vector<80x84xf32>
    %22 = tpu.matmul %21, %10, %cst_20 {dimension_numbers = #tpu.dot_dimension_numbers<[1], [0], [0], [1], [0, 0, 1, 1], [], []>} : vector<80x224xbf16>, vector<224x84xbf16>, vector<80x84xf32> -> vector<80x84xf32>
    %c4 = arith.constant 4 : index
    %c0_21 = arith.constant 0 : index
    %c0_22 = arith.constant 0 : index
    %23 = vector.load %arg5[%c4, %c0_21, %c0_22] : memref<5x80x224xbf16, #tpu.memory_space<vmem>>, vector<1x80x224xbf16>
    %24 = vector.shape_cast %23 : vector<1x80x224xbf16> to vector<80x224xbf16>
    %cst_23 = arith.constant dense<0.000000e+00> : vector<80x84xf32>
    %25 = tpu.matmul %24, %10, %cst_23 {dimension_numbers = #tpu.dot_dimension_numbers<[1], [0], [0], [1], [0, 0, 1, 1], [], []>} : vector<80x224xbf16>, vector<224x84xbf16>, vector<80x84xf32> -> vector<80x84xf32>
    %26 = tpu.concatenate %13, %16, %19, %22, %25 in 1 : vector<80x84xf32>, vector<80x84xf32>, vector<80x84xf32>, vector<80x84xf32>, vector<80x84xf32> -> vector<80x420xf32>
    %27 = arith.truncf %26 : vector<80x420xf32> to vector<80x420xbf16>
    %c0_24 = arith.constant 0 : index
    %c0_25 = arith.constant 0 : index
    %28 = vector.load %arg6[%c0_24, %c0_25] : memref<420x160xbf16, #tpu.memory_space<vmem>>, vector<420x160xbf16>
    %cst_26 = arith.constant dense<0.000000e+00> : vector<80x160xf32>
    %29 = tpu.matmul %27, %28, %cst_26 {dimension_numbers = #tpu.dot_dimension_numbers<[1], [0], [0], [1], [0, 0, 1, 1], [], []>} : vector<80x420xbf16>, vector<420x160xbf16>, vector<80x160xf32> -> vector<80x160xf32>
    %c0_27 = arith.constant 0 : index
    %c0_28 = arith.constant 0 : index
    %30 = vector.load %arg7[%c0_27, %c0_28] : memref<1x160xf32, #tpu.memory_space<vmem>>, vector<1x160xf32>
    %31 = vector.broadcast %30 : vector<1x160xf32> to vector<80x160xf32>
    %32 = arith.addf %29, %31 : vector<80x160xf32>
    %33 = math.tanh %32 : vector<80x160xf32>
    %34 = arith.truncf %33 : vector<80x160xf32> to vector<80x160xbf16>
    %c0_29 = arith.constant 0 : index
    %c0_30 = arith.constant 0 : index
    %35 = vector.load %arg8[%c0_29, %c0_30] : memref<160x80xbf16, #tpu.memory_space<vmem>>, vector<160x80xbf16>
    %cst_31 = arith.constant dense<0.000000e+00> : vector<80x80xf32>
    %36 = tpu.matmul %34, %35, %cst_31 {dimension_numbers = #tpu.dot_dimension_numbers<[1], [0], [0], [1], [0, 0, 1, 1], [], []>} : vector<80x160xbf16>, vector<160x80xbf16>, vector<80x80xf32> -> vector<80x80xf32>
    %37 = arith.truncf %36 : vector<80x80xf32> to vector<80x80xbf16>
    %c0_32 = arith.constant 0 : index
    %c0_33 = arith.constant 0 : index
    %c0_34 = arith.constant 0 : index
    %38 = vector.load %arg9[%c0_32, %c0_33, %c0_34] : memref<5x8x80xbf16, #tpu.memory_space<vmem>>, vector<1x8x80xbf16>
    %39 = vector.shape_cast %38 : vector<1x8x80xbf16> to vector<8x80xbf16>
    %cst_35 = arith.constant dense<0.000000e+00> : vector<8x80xf32>
    %40 = tpu.matmul %39, %37, %cst_35 {dimension_numbers = #tpu.dot_dimension_numbers<[1], [0], [0], [1], [0, 0, 1, 1], [], []>} : vector<8x80xbf16>, vector<80x80xbf16>, vector<8x80xf32> -> vector<8x80xf32>
    %c1_36 = arith.constant 1 : index
    %c0_37 = arith.constant 0 : index
    %c0_38 = arith.constant 0 : index
    %41 = vector.load %arg9[%c1_36, %c0_37, %c0_38] : memref<5x8x80xbf16, #tpu.memory_space<vmem>>, vector<1x8x80xbf16>
    %42 = vector.shape_cast %41 : vector<1x8x80xbf16> to vector<8x80xbf16>
    %cst_39 = arith.constant dense<0.000000e+00> : vector<8x80xf32>
    %43 = tpu.matmul %42, %37, %cst_39 {dimension_numbers = #tpu.dot_dimension_numbers<[1], [0], [0], [1], [0, 0, 1, 1], [], []>} : vector<8x80xbf16>, vector<80x80xbf16>, vector<8x80xf32> -> vector<8x80xf32>
    %c2_40 = arith.constant 2 : index
    %c0_41 = arith.constant 0 : index
    %c0_42 = arith.constant 0 : index
    %44 = vector.load %arg9[%c2_40, %c0_41, %c0_42] : memref<5x8x80xbf16, #tpu.memory_space<vmem>>, vector<1x8x80xbf16>
    %45 = vector.shape_cast %44 : vector<1x8x80xbf16> to vector<8x80xbf16>
    %cst_43 = arith.constant dense<0.000000e+00> : vector<8x80xf32>
    %46 = tpu.matmul %45, %37, %cst_43 {dimension_numbers = #tpu.dot_dimension_numbers<[1], [0], [0], [1], [0, 0, 1, 1], [], []>} : vector<8x80xbf16>, vector<80x80xbf16>, vector<8x80xf32> -> vector<8x80xf32>
    %c3_44 = arith.constant 3 : index
    %c0_45 = arith.constant 0 : index
    %c0_46 = arith.constant 0 : index
    %47 = vector.load %arg9[%c3_44, %c0_45, %c0_46] : memref<5x8x80xbf16, #tpu.memory_space<vmem>>, vector<1x8x80xbf16>
    %48 = vector.shape_cast %47 : vector<1x8x80xbf16> to vector<8x80xbf16>
    %cst_47 = arith.constant dense<0.000000e+00> : vector<8x80xf32>
    %49 = tpu.matmul %48, %37, %cst_47 {dimension_numbers = #tpu.dot_dimension_numbers<[1], [0], [0], [1], [0, 0, 1, 1], [], []>} : vector<8x80xbf16>, vector<80x80xbf16>, vector<8x80xf32> -> vector<8x80xf32>
    %c4_48 = arith.constant 4 : index
    %c0_49 = arith.constant 0 : index
    %c0_50 = arith.constant 0 : index
    %50 = vector.load %arg9[%c4_48, %c0_49, %c0_50] : memref<5x8x80xbf16, #tpu.memory_space<vmem>>, vector<1x8x80xbf16>
    %51 = vector.shape_cast %50 : vector<1x8x80xbf16> to vector<8x80xbf16>
    %cst_51 = arith.constant dense<0.000000e+00> : vector<8x80xf32>
    %52 = tpu.matmul %51, %37, %cst_51 {dimension_numbers = #tpu.dot_dimension_numbers<[1], [0], [0], [1], [0, 0, 1, 1], [], []>} : vector<8x80xbf16>, vector<80x80xbf16>, vector<8x80xf32> -> vector<8x80xf32>
    %53 = tpu.concatenate %40, %43, %46, %49, %52 in 1 : vector<8x80xf32>, vector<8x80xf32>, vector<8x80xf32>, vector<8x80xf32>, vector<8x80xf32> -> vector<8x400xf32>
    %54 = arith.truncf %53 : vector<8x400xf32> to vector<8x400xbf16>
    %c0_52 = arith.constant 0 : index
    %c0_53 = arith.constant 0 : index
    %55 = vector.load %arg10[%c0_52, %c0_53] : memref<400x120xbf16, #tpu.memory_space<vmem>>, vector<400x120xbf16>
    %cst_54 = arith.constant dense<0.000000e+00> : vector<8x120xf32>
    %56 = tpu.matmul %54, %55, %cst_54 {dimension_numbers = #tpu.dot_dimension_numbers<[1], [0], [0], [1], [0, 0, 1, 1], [], []>} : vector<8x400xbf16>, vector<400x120xbf16>, vector<8x120xf32> -> vector<8x120xf32>
    %c0_55 = arith.constant 0 : index
    %c0_56 = arith.constant 0 : index
    %57 = vector.load %arg11[%c0_55, %c0_56] : memref<1x120xf32, #tpu.memory_space<vmem>>, vector<1x120xf32>
    %58 = vector.broadcast %57 : vector<1x120xf32> to vector<8x120xf32>
    %59 = arith.addf %56, %58 : vector<8x120xf32>
    %60 = math.tanh %59 : vector<8x120xf32>
    %61 = arith.truncf %60 : vector<8x120xf32> to vector<8x120xbf16>
    %c0_57 = arith.constant 0 : index
    %c0_58 = arith.constant 0 : index
    %62 = vector.load %arg12[%c0_57, %c0_58] : memref<120x84xbf16, #tpu.memory_space<vmem>>, vector<120x84xbf16>
    %cst_59 = arith.constant dense<0.000000e+00> : vector<8x84xf32>
    %63 = tpu.matmul %61, %62, %cst_59 {dimension_numbers = #tpu.dot_dimension_numbers<[1], [0], [0], [1], [0, 0, 1, 1], [], []>} : vector<8x120xbf16>, vector<120x84xbf16>, vector<8x84xf32> -> vector<8x84xf32>
    %c0_60 = arith.constant 0 : index
    %c0_61 = arith.constant 0 : index
    %64 = vector.load %arg13[%c0_60, %c0_61] : memref<1x84xf32, #tpu.memory_space<vmem>>, vector<1x84xf32>
    %65 = vector.broadcast %64 : vector<1x84xf32> to vector<8x84xf32>
    %66 = arith.addf %63, %65 : vector<8x84xf32>
    %67 = math.tanh %66 : vector<8x84xf32>
    %68 = arith.truncf %67 : vector<8x84xf32> to vector<8x84xbf16>
    %c0_62 = arith.constant 0 : index
    %c0_63 = arith.constant 0 : index
    %69 = vector.load %arg14[%c0_62, %c0_63] : memref<84x10xbf16, #tpu.memory_space<vmem>>, vector<84x10xbf16>
    %cst_64 = arith.constant dense<0.000000e+00> : vector<8x10xf32>
    %70 = tpu.matmul %68, %69, %cst_64 {dimension_numbers = #tpu.dot_dimension_numbers<[1], [0], [0], [1], [0, 0, 1, 1], [], []>} : vector<8x84xbf16>, vector<84x10xbf16>, vector<8x10xf32> -> vector<8x10xf32>
    %c0_65 = arith.constant 0 : index
    %c0_66 = arith.constant 0 : index
    %71 = vector.load %arg15[%c0_65, %c0_66] : memref<1x10xf32, #tpu.memory_space<vmem>>, vector<1x10xf32>
    %72 = vector.broadcast %71 : vector<1x10xf32> to vector<8x10xf32>
    %73 = arith.addf %70, %72 : vector<8x10xf32>
    %cst_67 = arith.constant dense<0xFF800000> : vector<8xf32>
    %74 = vector.multi_reduction <maximumf>, %73, %cst_67 [1] : vector<8x10xf32> to vector<8xf32>
    %75 = vector.shape_cast %74 : vector<8xf32> to vector<8x1xf32>
    %76 = vector.broadcast %75 : vector<8x1xf32> to vector<8x10xf32>
    %77 = arith.subf %73, %76 : vector<8x10xf32>
    %78 = math.exp %77 : vector<8x10xf32>
    %cst_68 = arith.constant dense<0.000000e+00> : vector<8xf32>
    %79 = vector.multi_reduction <add>, %78, %cst_68 [1] : vector<8x10xf32> to vector<8xf32>
    %80 = vector.shape_cast %79 : vector<8xf32> to vector<8x1xf32>
    %81 = vector.broadcast %80 : vector<8x1xf32> to vector<8x10xf32>
    %82 = arith.divf %78, %81 : vector<8x10xf32>
    %83 = tpu.concatenate %73, %82 in 1 : vector<8x10xf32>, vector<8x10xf32> -> vector<8x20xf32>
    %c0_69 = arith.constant 0 : index
    %c0_70 = arith.constant 0 : index
    %84 = vector.load %arg16[%c0_69, %c0_70] : memref<8x20xf32, #tpu.memory_space<vmem>>, vector<8x20xf32>
    tpu.vector_store %arg16[%c0_69, %c0_70], %83 {strides = array<i32>} : memref<8x20xf32, #tpu.memory_space<vmem>>, vector<8x20xf32>,
    return
  }
  func.func @transform_0(%arg0: i32) -> (i32, i32) {
    %c0_i32 = arith.constant 0 : i32
    %c0_i32_0 = arith.constant 0 : i32
    return %arg0, %c0_i32 : i32, i32
  }
  func.func @transform_1(%arg0: i32) -> (i32, i32) {
    %c0_i32 = arith.constant 0 : i32
    %c0_i32_0 = arith.constant 0 : i32
    %c0_i32_1 = arith.constant 0 : i32
    return %c0_i32, %c0_i32_0 : i32, i32
  }
  func.func @transform_2(%arg0: i32) -> (i32, i32) {
    %c0_i32 = arith.constant 0 : i32
    %c0_i32_0 = arith.constant 0 : i32
    %c0_i32_1 = arith.constant 0 : i32
    return %c0_i32, %c0_i32_0 : i32, i32
  }
  func.func @transform_3(%arg0: i32) -> (i32, i32) {
    %c0_i32 = arith.constant 0 : i32
    %c0_i32_0 = arith.constant 0 : i32
    %c0_i32_1 = arith.constant 0 : i32
    return %c0_i32, %c0_i32_0 : i32, i32
  }
  func.func @transform_4(%arg0: i32) -> (i32, i32, i32) {
    %c0_i32 = arith.constant 0 : i32
    %c0_i32_0 = arith.constant 0 : i32
    %c0_i32_1 = arith.constant 0 : i32
    %c0_i32_2 = arith.constant 0 : i32
    return %c0_i32, %c0_i32_0, %c0_i32_1 : i32, i32, i32
  }
  func.func @transform_5(%arg0: i32) -> (i32, i32) {
    %c0_i32 = arith.constant 0 : i32
    %c0_i32_0 = arith.constant 0 : i32
    %c0_i32_1 = arith.constant 0 : i32
    return %c0_i32, %c0_i32_0 : i32, i32
  }
  func.func @transform_6(%arg0: i32) -> (i32, i32) {
    %c0_i32 = arith.constant 0 : i32
    %c0_i32_0 = arith.constant 0 : i32
    %c0_i32_1 = arith.constant 0 : i32
    return %c0_i32, %c0_i32_0 : i32, i32
  }
  func.func @transform_7(%arg0: i32) -> (i32, i32) {
    %c0_i32 = arith.constant 0 : i32
    %c0_i32_0 = arith.constant 0 : i32
    %c0_i32_1 = arith.constant 0 : i32
    return %c0_i32, %c0_i32_0 : i32, i32
  }
  func.func @transform_8(%arg0: i32) -> (i32, i32, i32) {
    %c0_i32 = arith.constant 0 : i32
    %c0_i32_0 = arith.constant 0 : i32
    %c0_i32_1 = arith.constant 0 : i32
    %c0_i32_2 = arith.constant 0 : i32
    return %c0_i32, %c0_i32_0, %c0_i32_1 : i32, i32, i32
  }
  func.func @transform_9(%arg0: i32) -> (i32, i32) {
    %c0_i32 = arith.constant 0 : i32
    %c0_i32_0 = arith.constant 0 : i32
    %c0_i32_1 = arith.constant 0 : i32
    return %c0_i32, %c0_i32_0 : i32, i32
  }
  func.func @transform_10(%arg0: i32) -> (i32, i32) {
    %c0_i32 = arith.constant 0 : i32
    %c0_i32_0 = arith.constant 0 : i32
    %c0_i32_1 = arith.constant 0 : i32
    return %c0_i32, %c0_i32_0 : i32, i32
  }
  func.func @transform_11(%arg0: i32) -> (i32, i32) {
    %c0_i32 = arith.constant 0 : i32
    %c0_i32_0 = arith.constant 0 : i32
    %c0_i32_1 = arith.constant 0 : i32
    return %c0_i32, %c0_i32_0 : i32, i32
  }
  func.func @transform_12(%arg0: i32) -> (i32, i32) {
    %c0_i32 = arith.constant 0 : i32
    %c0_i32_0 = arith.constant 0 : i32
    %c0_i32_1 = arith.constant 0 : i32
    return %c0_i32, %c0_i32_0 : i32, i32
  }
  func.func @transform_13(%arg0: i32) -> (i32, i32) {
    %c0_i32 = arith.constant 0 : i32
    %c0_i32_0 = arith.constant 0 : i32
    %c0_i32_1 = arith.constant 0 : i32
    return %c0_i32, %c0_i32_0 : i32, i32
  }
  func.func @transform_14(%arg0: i32) -> (i32, i32) {
    %c0_i32 = arith.constant 0 : i32
    %c0_i32_0 = arith.constant 0 : i32
    %c0_i32_1 = arith.constant 0 : i32
    return %c0_i32, %c0_i32_0 : i32, i32
  }
  func.func @transform_15(%arg0: i32) -> (i32, i32) {
    %c0_i32 = arith.constant 0 : i32
    %c0_i32_0 = arith.constant 0 : i32
    return %arg0, %c0_i32 : i32, i32
  }
}

</mosaic_0001>

<llo_original>
// kernel: lenet5_forward.1
$region0: #{lenet5_forward.1}
  #allocation0 [shape = 'u32[]', space=smem, size = 0x4, offset = 0x4, fixed_abs, tag = 'smem constant byte address 0x4 - core index']
  #allocation1 [shape = 'u32[144,128]{1,0:T(1,128)}', space=vmem, size = 0x12000, scoped, tag = 'internal scratch']
  %s0 = inlined_call_operand.vmem [shape: bf16[448,160], index: 0, kind: input, shape index: {}]
  %s1 = inlined_call_operand.vmem [shape: bf16[160,168], index: 1, kind: input, shape index: {}]
  %s2 = inlined_call_operand.vmem [shape: f32[1,168], index: 2, kind: input, shape index: {}]
  %s3 = inlined_call_operand.vmem [shape: bf16[168,84], index: 3, kind: input, shape index: {}]
  %s4 = inlined_call_operand.vmem [shape: bf16[5,80,224], index: 4, kind: input, shape index: {}]
  %s5 = inlined_call_operand.vmem [shape: bf16[420,160], index: 5, kind: input, shape index: {}]
  %s6 = inlined_call_operand.vmem [shape: f32[1,160], index: 6, kind: input, shape index: {}]
  %s7 = inlined_call_operand.vmem [shape: bf16[160,80], index: 7, kind: input, shape index: {}]
  %s8 = inlined_call_operand.vmem [shape: bf16[5,8,80], index: 8, kind: input, shape index: {}]
  %s9 = inlined_call_operand.vmem [shape: bf16[400,120], index: 9, kind: input, shape index: {}]
  %s10 = inlined_call_operand.vmem [shape: f32[1,120], index: 10, kind: input, shape index: {}]
  %s11 = inlined_call_operand.vmem [shape: bf16[120,84], index: 11, kind: input, shape index: {}]
  %s12 = inlined_call_operand.vmem [shape: f32[1,84], index: 12, kind: input, shape index: {}]
  %s13 = inlined_call_operand.vmem [shape: bf16[84,10], index: 13, kind: input, shape index: {}]
  %s14 = inlined_call_operand.vmem [shape: f32[1,10], index: 14, kind: input, shape index: {}]
  %s15 = inlined_call_operand.vmem [shape: f32[16,20], index: 15, kind: output, shape index: {}]
  %s16 = sld [smem:[#allocation0]]
  $region93: #{lenet5_forward.1} parent=0
    _
  %s18 = ssub.s32 1, %s16
  %s19 = scalar_select 0, %s18, %s16
  loop: start=0, step=1, limit=4
  $region2: #{lenet5_forward.1} parent=0 // loop_pre_header
    _
  $region3: #{lenet5_forward.1} parent=0 // loop_header
    %s21 = sphi 0, %s25
    %p22 = scmp.ge.s32.totalorder %s21, 4
    %s31 = sphi 0, %s33
    %s34 = sphi 0, %s31
    %s35 = sphi 0, %s34
    %s51 = sphi 0, %s35
    %s55 = sphi 0, %s55
    %s57 = sphi 0, %s55
    %s58 = sphi 0, %s57
    %s72 = sphi 0, %s58
    %s76 = sphi 0, %s76
    %s78 = sphi 0, %s76
    %s79 = sphi 0, %s78
    %s93 = sphi 0, %s79
    %s97 = sphi 0, %s97
    %s99 = sphi 0, %s97
    %s100 = sphi 0, %s99
    %s114 = sphi 0, %s100
    %s118 = sphi 0, %s118
    %s120 = sphi 0, %s118
    %s121 = sphi 0, %s120
    %s135 = sphi 0, %s121
    %s139 = sphi 0, %s139
    %s141 = sphi 0, %s139
    %s142 = sphi 0, %s141
    %s156 = sphi 0, %s142
    %s160 = sphi 0, %s160
    %s162 = sphi 0, %s160
    %s163 = sphi 0, %s162
    %s177 = sphi 0, %s163
    %s181 = sphi 0, %s181
    %s183 = sphi 0, %s181
    %s184 = sphi 0, %s183
    %s198 = sphi 0, %s184
    %s202 = sphi 0, %s202
    %s204 = sphi 0, %s202
    %s205 = sphi 0, %s204
    %s219 = sphi 0, %s205
    %s223 = sphi 0, %s223
    %s225 = sphi 0, %s223
    %s226 = sphi 0, %s225
    %s240 = sphi 0, %s226
    %s244 = sphi 0, %s244
    %s246 = sphi 0, %s244
    %s247 = sphi 0, %s246
    %s261 = sphi 0, %s247
    %s265 = sphi 0, %s265
    %s267 = sphi 0, %s265
    %s268 = sphi 0, %s267
    %s282 = sphi 0, %s268
    %s286 = sphi 0, %s286
    %s288 = sphi 0, %s286
    %s289 = sphi 0, %s288
    %s303 = sphi 0, %s289
    %s307 = sphi 0, %s307
    %s309 = sphi 0, %s307
    %s310 = sphi 0, %s309
    %s324 = sphi 0, %s310
    %s328 = sphi 0, %s328
    %s330 = sphi 0, %s328
    %s331 = sphi 0, %s330
    %s345 = sphi 0, %s331
    %s351 = sphi 0, %s353
    %s354 = sphi 0, %s351
    %s355 = sphi 0, %s354
    %s371 = sphi 0, %s355
  $region4: #{lenet5_forward.1} parent=0 // loop_header_branch
    %24 = sbr.rel (%p22) target = $region8
  $region5: #{lenet5_forward.1} parent=0 // loop_body
    %s26 = ssub.s32 %s21, 1
    %s27 = ssub.s32 %s21, 2
    %s28 = sadd.s32 %s21, 1
    %s29 = ssub.s32 %s21, %s28
    %p30 = scmp.eq.s32.totalorder %s29, 0
    %s32 = sadd.s32 %s31, 1
    %s33 = scalar_select %p30, %s31, %s32
    %p36 = pneg %p30
    %p37 = scmp.eq.s32.totalorder %s21, 1
    %p38 = por %p36, %p37
    %p39 = scmp.ne.s32.totalorder %s31, %s34
    %p40 = scmp.eq.s32.totalorder %s21, 0
    %p41 = por %p39, %p40
    %p42 = scmp.ne.s32.totalorder %s31, %s34
    %p43 = scmp.eq.s32.totalorder %s26, 1
    %p44 = por %p42, %p43
    %p45 = scmp.ne.s32.totalorder %s34, %s35
    %p46 = scmp.eq.s32.totalorder %s26, 0
    %p47 = por %p45, %p46
    %p48 = scmp.ne.s32.totalorder %s34, %s35
    %p49 = scmp.eq.s32.totalorder %s27, 1
    %p50 = por %p48, %p49
    %p52 = scmp.ne.s32.totalorder %s35, %s51
    %p53 = scmp.eq.s32.totalorder %s27, 0
    %p54 = por %p52, %p53
    %s56 = sadd.s32 %s55, 1
    %p59 = scmp.eq.s32.totalorder %s21, 1
    %p60 = scmp.ne.s32.totalorder %s55, %s57
    %p61 = scmp.eq.s32.totalorder %s21, 0
    %p62 = por %p60, %p61
    %p63 = scmp.ne.s32.totalorder %s55, %s57
    %p64 = scmp.eq.s32.totalorder %s26, 1
    %p65 = por %p63, %p64
    %p66 = scmp.ne.s32.totalorder %s57, %s58
    %p67 = scmp.eq.s32.totalorder %s26, 0
    %p68 = por %p66, %p67
    %p69 = scmp.ne.s32.totalorder %s57, %s58
    %p70 = scmp.eq.s32.totalorder %s27, 1
    %p71 = por %p69, %p70
    %p73 = scmp.ne.s32.totalorder %s58, %s72
    %p74 = scmp.eq.s32.totalorder %s27, 0
    %p75 = por %p73, %p74
    %s77 = sadd.s32 %s76, 1
    %p80 = scmp.eq.s32.totalorder %s21, 1
    %p81 = scmp.ne.s32.totalorder %s76, %s78
    %p82 = scmp.eq.s32.totalorder %s21, 0
    %p83 = por %p81, %p82
    %p84 = scmp.ne.s32.totalorder %s76, %s78
    %p85 = scmp.eq.s32.totalorder %s26, 1
    %p86 = por %p84, %p85
    %p87 = scmp.ne.s32.totalorder %s78, %s79
    %p88 = scmp.eq.s32.totalorder %s26, 0
    %p89 = por %p87, %p88
    %p90 = scmp.ne.s32.totalorder %s78, %s79
    %p91 = scmp.eq.s32.totalorder %s27, 1
    %p92 = por %p90, %p91
    %p94 = scmp.ne.s32.totalorder %s79, %s93
    %p95 = scmp.eq.s32.totalorder %s27, 0
    %p96 = por %p94, %p95
    %s98 = sadd.s32 %s97, 1
    %p101 = scmp.eq.s32.totalorder %s21, 1
    %p102 = scmp.ne.s32.totalorder %s97, %s99
    %p103 = scmp.eq.s32.totalorder %s21, 0
    %p104 = por %p102, %p103
    %p105 = scmp.ne.s32.totalorder %s97, %s99
    %p106 = scmp.eq.s32.totalorder %s26, 1
    %p107 = por %p105, %p106
    %p108 = scmp.ne.s32.totalorder %s99, %s100
    %p109 = scmp.eq.s32.totalorder %s26, 0
    %p110 = por %p108, %p109
    %p111 = scmp.ne.s32.totalorder %s99, %s100
    %p112 = scmp.eq.s32.totalorder %s27, 1
    %p113 = por %p111, %p112
    %p115 = scmp.ne.s32.totalorder %s100, %s114
    %p116 = scmp.eq.s32.totalorder %s27, 0
    %p117 = por %p115, %p116
    %s119 = sadd.s32 %s118, 1
    %p122 = scmp.eq.s32.totalorder %s21, 1
    %p123 = scmp.ne.s32.totalorder %s118, %s120
    %p124 = scmp.eq.s32.totalorder %s21, 0
    %p125 = por %p123, %p124
    %p126 = scmp.ne.s32.totalorder %s118, %s120
    %p127 = scmp.eq.s32.totalorder %s26, 1
    %p128 = por %p126, %p127
    %p129 = scmp.ne.s32.totalorder %s120, %s121
    %p130 = scmp.eq.s32.totalorder %s26, 0
    %p131 = por %p129, %p130
    %p132 = scmp.ne.s32.totalorder %s120, %s121
    %p133 = scmp.eq.s32.totalorder %s27, 1
    %p134 = por %p132, %p133
    %p136 = scmp.ne.s32.totalorder %s121, %s135
    %p137 = scmp.eq.s32.totalorder %s27, 0
    %p138 = por %p136, %p137
    %s140 = sadd.s32 %s139, 1
    %p143 = scmp.eq.s32.totalorder %s21, 1
    %p144 = scmp.ne.s32.totalorder %s139, %s141
    %p145 = scmp.eq.s32.totalorder %s21, 0
    %p146 = por %p144, %p145
    %p147 = scmp.ne.s32.totalorder %s139, %s141
    %p148 = scmp.eq.s32.totalorder %s26, 1
    %p149 = por %p147, %p148
    %p150 = scmp.ne.s32.totalorder %s141, %s142
    %p151 = scmp.eq.s32.totalorder %s26, 0
    %p152 = por %p150, %p151
    %p153 = scmp.ne.s32.totalorder %s141, %s142
    %p154 = scmp.eq.s32.totalorder %s27, 1
    %p155 = por %p153, %p154
    %p157 = scmp.ne.s32.totalorder %s142, %s156
    %p158 = scmp.eq.s32.totalorder %s27, 0
    %p159 = por %p157, %p158
    %s161 = sadd.s32 %s160, 1
    %p164 = scmp.eq.s32.totalorder %s21, 1
    %p165 = scmp.ne.s32.totalorder %s160, %s162
    %p166 = scmp.eq.s32.totalorder %s21, 0
    %p167 = por %p165, %p166
    %p168 = scmp.ne.s32.totalorder %s160, %s162
    %p169 = scmp.eq.s32.totalorder %s26, 1
    %p170 = por %p168, %p169
    %p171 = scmp.ne.s32.totalorder %s162, %s163
    %p172 = scmp.eq.s32.totalorder %s26, 0
    %p173 = por %p171, %p172
    %p174 = scmp.ne.s32.totalorder %s162, %s163
    %p175 = scmp.eq.s32.totalorder %s27, 1
    %p176 = por %p174, %p175
    %p178 = scmp.ne.s32.totalorder %s163, %s177
    %p179 = scmp.eq.s32.totalorder %s27, 0
    %p180 = por %p178, %p179
    %s182 = sadd.s32 %s181, 1
    %p185 = scmp.eq.s32.totalorder %s21, 1
    %p186 = scmp.ne.s32.totalorder %s181, %s183
    %p187 = scmp.eq.s32.totalorder %s21, 0
    %p188 = por %p186, %p187
    %p189 = scmp.ne.s32.totalorder %s181, %s183
    %p190 = scmp.eq.s32.totalorder %s26, 1
    %p191 = por %p189, %p190
    %p192 = scmp.ne.s32.totalorder %s183, %s184
    %p193 = scmp.eq.s32.totalorder %s26, 0
    %p194 = por %p192, %p193
    %p195 = scmp.ne.s32.totalorder %s183, %s184
    %p196 = scmp.eq.s32.totalorder %s27, 1
    %p197 = por %p195, %p196
    %p199 = scmp.ne.s32.totalorder %s184, %s198
    %p200 = scmp.eq.s32.totalorder %s27, 0
    %p201 = por %p199, %p200
    %s203 = sadd.s32 %s202, 1
    %p206 = scmp.eq.s32.totalorder %s21, 1
    %p207 = scmp.ne.s32.totalorder %s202, %s204
    %p208 = scmp.eq.s32.totalorder %s21, 0
    %p209 = por %p207, %p208
    %p210 = scmp.ne.s32.totalorder %s202, %s204
    %p211 = scmp.eq.s32.totalorder %s26, 1
    %p212 = por %p210, %p211
    %p213 = scmp.ne.s32.totalorder %s204, %s205
    %p214 = scmp.eq.s32.totalorder %s26, 0
    %p215 = por %p213, %p214
    %p216 = scmp.ne.s32.totalorder %s204, %s205
    %p217 = scmp.eq.s32.totalorder %s27, 1
    %p218 = por %p216, %p217
    %p220 = scmp.ne.s32.totalorder %s205, %s219
    %p221 = scmp.eq.s32.totalorder %s27, 0
    %p222 = por %p220, %p221
    %s224 = sadd.s32 %s223, 1
    %p227 = scmp.eq.s32.totalorder %s21, 1
    %p228 = scmp.ne.s32.totalorder %s223, %s225
    %p229 = scmp.eq.s32.totalorder %s21, 0
    %p230 = por %p228, %p229
    %p231 = scmp.ne.s32.totalorder %s223, %s225
    %p232 = scmp.eq.s32.totalorder %s26, 1
    %p233 = por %p231, %p232
    %p234 = scmp.ne.s32.totalorder %s225, %s226
    %p235 = scmp.eq.s32.totalorder %s26, 0
    %p236 = por %p234, %p235
    %p237 = scmp.ne.s32.totalorder %s225, %s226
    %p238 = scmp.eq.s32.totalorder %s27, 1
    %p239 = por %p237, %p238
    %p241 = scmp.ne.s32.totalorder %s226, %s240
    %p242 = scmp.eq.s32.totalorder %s27, 0
    %p243 = por %p241, %p242
    %s245 = sadd.s32 %s244, 1
    %p248 = scmp.eq.s32.totalorder %s21, 1
    %p249 = scmp.ne.s32.totalorder %s244, %s246
    %p250 = scmp.eq.s32.totalorder %s21, 0
    %p251 = por %p249, %p250
    %p252 = scmp.ne.s32.totalorder %s244, %s246
    %p253 = scmp.eq.s32.totalorder %s26, 1
    %p254 = por %p252, %p253
    %p255 = scmp.ne.s32.totalorder %s246, %s247
    %p256 = scmp.eq.s32.totalorder %s26, 0
    %p257 = por %p255, %p256
    %p258 = scmp.ne.s32.totalorder %s246, %s247
    %p259 = scmp.eq.s32.totalorder %s27, 1
    %p260 = por %p258, %p259
    %p262 = scmp.ne.s32.totalorder %s247, %s261
    %p263 = scmp.eq.s32.totalorder %s27, 0
    %p264 = por %p262, %p263
    %s266 = sadd.s32 %s265, 1
    %p269 = scmp.eq.s32.totalorder %s21, 1
    %p270 = scmp.ne.s32.totalorder %s265, %s267
    %p271 = scmp.eq.s32.totalorder %s21, 0
    %p272 = por %p270, %p271
    %p273 = scmp.ne.s32.totalorder %s265, %s267
    %p274 = scmp.eq.s32.totalorder %s26, 1
    %p275 = por %p273, %p274
    %p276 = scmp.ne.s32.totalorder %s267, %s268
    %p277 = scmp.eq.s32.totalorder %s26, 0
    %p278 = por %p276, %p277
    %p279 = scmp.ne.s32.totalorder %s267, %s268
    %p280 = scmp.eq.s32.totalorder %s27, 1
    %p281 = por %p279, %p280
    %p283 = scmp.ne.s32.totalorder %s268, %s282
    %p284 = scmp.eq.s32.totalorder %s27, 0
    %p285 = por %p283, %p284
    %s287 = sadd.s32 %s286, 1
    %p290 = scmp.eq.s32.totalorder %s21, 1
    %p291 = scmp.ne.s32.totalorder %s286, %s288
    %p292 = scmp.eq.s32.totalorder %s21, 0
    %p293 = por %p291, %p292
    %p294 = scmp.ne.s32.totalorder %s286, %s288
    %p295 = scmp.eq.s32.totalorder %s26, 1
    %p296 = por %p294, %p295
    %p297 = scmp.ne.s32.totalorder %s288, %s289
    %p298 = scmp.eq.s32.totalorder %s26, 0
    %p299 = por %p297, %p298
    %p300 = scmp.ne.s32.totalorder %s288, %s289
    %p301 = scmp.eq.s32.totalorder %s27, 1
    %p302 = por %p300, %p301
    %p304 = scmp.ne.s32.totalorder %s289, %s303
    %p305 = scmp.eq.s32.totalorder %s27, 0
    %p306 = por %p304, %p305
    %s308 = sadd.s32 %s307, 1
    %p311 = scmp.eq.s32.totalorder %s21, 1
    %p312 = scmp.ne.s32.totalorder %s307, %s309
    %p313 = scmp.eq.s32.totalorder %s21, 0
    %p314 = por %p312, %p313
    %p315 = scmp.ne.s32.totalorder %s307, %s309
    %p316 = scmp.eq.s32.totalorder %s26, 1
    %p317 = por %p315, %p316
    %p318 = scmp.ne.s32.totalorder %s309, %s310
    %p319 = scmp.eq.s32.totalorder %s26, 0
    %p320 = por %p318, %p319
    %p321 = scmp.ne.s32.totalorder %s309, %s310
    %p322 = scmp.eq.s32.totalorder %s27, 1
    %p323 = por %p321, %p322
    %p325 = scmp.ne.s32.totalorder %s310, %s324
    %p326 = scmp.eq.s32.totalorder %s27, 0
    %p327 = por %p325, %p326
    %s329 = sadd.s32 %s328, 1
    %p332 = scmp.eq.s32.totalorder %s21, 1
    %p333 = scmp.ne.s32.totalorder %s328, %s330
    %p334 = scmp.eq.s32.totalorder %s21, 0
    %p335 = por %p333, %p334
    %p336 = scmp.ne.s32.totalorder %s328, %s330
    %p337 = scmp.eq.s32.totalorder %s26, 1
    %p338 = por %p336, %p337
    %p339 = scmp.ne.s32.totalorder %s330, %s331
    %p340 = scmp.eq.s32.totalorder %s26, 0
    %p341 = por %p339, %p340
    %p342 = scmp.ne.s32.totalorder %s330, %s331
    %p343 = scmp.eq.s32.totalorder %s27, 1
    %p344 = por %p342, %p343
    %p346 = scmp.ne.s32.totalorder %s331, %s345
    %p347 = scmp.eq.s32.totalorder %s27, 0
    %p348 = por %p346, %p347
    %s349 = ssub.s32 %s21, %s28
    %p350 = scmp.eq.s32.totalorder %s349, 0
    %s352 = sadd.s32 %s351, 1
    %s353 = scalar_select %p350, %s351, %s352
    %p356 = pneg %p350
    %p357 = scmp.eq.s32.totalorder %s21, 1
    %p358 = por %p356, %p357
    %p359 = scmp.ne.s32.totalorder %s351, %s354
    %p360 = scmp.eq.s32.totalorder %s21, 0
    %p361 = por %p359, %p360
    %p362 = scmp.ne.s32.totalorder %s351, %s354
    %p363 = scmp.eq.s32.totalorder %s26, 1
    %p364 = por %p362, %p363
    %p365 = scmp.ne.s32.totalorder %s354, %s355
    %p366 = scmp.eq.s32.totalorder %s26, 0
    %p367 = por %p365, %p366
    %p368 = scmp.ne.s32.totalorder %s354, %s355
    %p369 = scmp.eq.s32.totalorder %s27, 1
    %p370 = por %p368, %p369
    %p372 = scmp.ne.s32.totalorder %s355, %s371
    %p373 = scmp.eq.s32.totalorder %s27, 0
    %p374 = por %p372, %p373
    %p375 = scmp.le.s32.totalorder 1, %s21
    %p376 = scmp.lt.s32.totalorder %s21, 3
    %p377 = pnand %p375, %p376
    %p378 = pneg %p377
    // Predicated region
    $region9: #{lenet5_forward.1} parent=5 // pred_check
      _
    $region10: #{lenet5_forward.1} parent=5 // pred_check_branch
      %380 = sbr.rel (%p377) target = $region12
    $region11: #{lenet5_forward.1} parent=5 // pred_region
      %s381 = ssub.s32 %s21, 1
      // Predicated region
      $region13: #{lenet5_forward.1} parent=11 // pred_check
        %p382 = pneg %p68
      $region14: #{lenet5_forward.1} parent=11 // pred_check_branch
        %384 = sbr.rel (%p382) target = $region16
      $region15: #{lenet5_forward.1} parent=11 // pred_region
        _
      $region16: #{lenet5_forward.1} parent=11 // pred_fallthru
        _
      // Predicated region
      $region17: #{lenet5_forward.1} parent=11 // pred_check
        %p385 = pneg %p89
      $region18: #{lenet5_forward.1} parent=11 // pred_check_branch
        %387 = sbr.rel (%p385) target = $region20
      $region19: #{lenet5_forward.1} parent=11 // pred_region
        _
      $region20: #{lenet5_forward.1} parent=11 // pred_fallthru
        _
      // Predicated region
      $region21: #{lenet5_forward.1} parent=11 // pred_check
        %p388 = pneg %p110
      $region22: #{lenet5_forward.1} parent=11 // pred_check_branch
        %390 = sbr.rel (%p388) target = $region24
      $region23: #{lenet5_forward.1} parent=11 // pred_region
        _
      $region24: #{lenet5_forward.1} parent=11 // pred_fallthru
        _
      // Predicated region
      $region25: #{lenet5_forward.1} parent=11 // pred_check
        %p391 = pneg %p131
      $region26: #{lenet5_forward.1} parent=11 // pred_check_branch
        %393 = sbr.rel (%p391) target = $region28
      $region27: #{lenet5_forward.1} parent=11 // pred_region
        _
      $region28: #{lenet5_forward.1} parent=11 // pred_fallthru
        _
      // Predicated region
      $region29: #{lenet5_forward.1} parent=11 // pred_check
        %p394 = pneg %p152
      $region30: #{lenet5_forward.1} parent=11 // pred_check_branch
        %396 = sbr.rel (%p394) target = $region32
      $region31: #{lenet5_forward.1} parent=11 // pred_region
        _
      $region32: #{lenet5_forward.1} parent=11 // pred_fallthru
        _
      // Predicated region
      $region33: #{lenet5_forward.1} parent=11 // pred_check
        %p397 = pneg %p173
      $region34: #{lenet5_forward.1} parent=11 // pred_check_branch
        %399 = sbr.rel (%p397) target = $region36
      $region35: #{lenet5_forward.1} parent=11 // pred_region
        _
      $region36: #{lenet5_forward.1} parent=11 // pred_fallthru
        _
      // Predicated region
      $region37: #{lenet5_forward.1} parent=11 // pred_check
        %p400 = pneg %p194
      $region38: #{lenet5_forward.1} parent=11 // pred_check_branch
        %402 = sbr.rel (%p400) target = $region40
      $region39: #{lenet5_forward.1} parent=11 // pred_region
        _
      $region40: #{lenet5_forward.1} parent=11 // pred_fallthru
        _
      // Predicated region
      $region41: #{lenet5_forward.1} parent=11 // pred_check
        %p403 = pneg %p215
      $region42: #{lenet5_forward.1} parent=11 // pred_check_branch
        %405 = sbr.rel (%p403) target = $region44
      $region43: #{lenet5_forward.1} parent=11 // pred_region
        _
      $region44: #{lenet5_forward.1} parent=11 // pred_fallthru
        _
      // Predicated region
      $region45: #{lenet5_forward.1} parent=11 // pred_check
        %p406 = pneg %p236
      $region46: #{lenet5_forward.1} parent=11 // pred_check_branch
        %408 = sbr.rel (%p406) target = $region48
      $region47: #{lenet5_forward.1} parent=11 // pred_region
        _
      $region48: #{lenet5_forward.1} parent=11 // pred_fallthru
        _
      // Predicated region
      $region49: #{lenet5_forward.1} parent=11 // pred_check
        %p409 = pneg %p257
      $region50: #{lenet5_forward.1} parent=11 // pred_check_branch
        %411 = sbr.rel (%p409) target = $region52
      $region51: #{lenet5_forward.1} parent=11 // pred_region
        _
      $region52: #{lenet5_forward.1} parent=11 // pred_fallthru
        _
      // Predicated region
      $region53: #{lenet5_forward.1} parent=11 // pred_check
        %p412 = pneg %p278
      $region54: #{lenet5_forward.1} parent=11 // pred_check_branch
        %414 = sbr.rel (%p412) target = $region56
      $region55: #{lenet5_forward.1} parent=11 // pred_region
        _
      $region56: #{lenet5_forward.1} parent=11 // pred_fallthru
        _
      // Predicated region
      $region57: #{lenet5_forward.1} parent=11 // pred_check
        %p415 = pneg %p299
      $region58: #{lenet5_forward.1} parent=11 // pred_check_branch
        %417 = sbr.rel (%p415) target = $region60
      $region59: #{lenet5_forward.1} parent=11 // pred_region
        _
      $region60: #{lenet5_forward.1} parent=11 // pred_fallthru
        _
      // Predicated region
      $region61: #{lenet5_forward.1} parent=11 // pred_check
        %p418 = pneg %p320
      $region62: #{lenet5_forward.1} parent=11 // pred_check_branch
        %420 = sbr.rel (%p418) target = $region64
      $region63: #{lenet5_forward.1} parent=11 // pred_region
        _
      $region64: #{lenet5_forward.1} parent=11 // pred_fallthru
        _
      // Predicated region
      $region65: #{lenet5_forward.1} parent=11 // pred_check
        %p421 = pneg %p341
      $region66: #{lenet5_forward.1} parent=11 // pred_check_branch
        %423 = sbr.rel (%p421) target = $region68
      $region67: #{lenet5_forward.1} parent=11 // pred_region
        _
      $region68: #{lenet5_forward.1} parent=11 // pred_fallthru
        _
    $region12: #{lenet5_forward.1} parent=5 // pred_fallthru
      _
    %p424 = scmp.lt.s32.totalorder %s21, 2
    // Predicated region
    $region69: #{lenet5_forward.1} parent=5 // pred_check
      %p425 = pneg %p424
    $region70: #{lenet5_forward.1} parent=5 // pred_check_branch
      %427 = sbr.rel (%p425) target = $region72
    $region71: #{lenet5_forward.1} parent=5 // pred_region
      // Predicated region
      $region73: #{lenet5_forward.1} parent=71 // pred_check
        %p428 = pneg %p41
      $region74: #{lenet5_forward.1} parent=71 // pred_check_branch
        %430 = sbr.rel (%p428) target = $region76
      $region75: #{lenet5_forward.1} parent=71 // pred_region
        %s431 = smul.u32 28, %s21
        %p432 = scmp.lt.s32.totalorder %s431, 55
        %s433 = scalar_select %p432, %s431, 55
        %s434 = smul.addr %s433, 2
        %s435 = smul.addr %s434, 4
        %s436 = scalar_lea.vmem %s0, %s435
        %s437 = smul.u32 28, %s21
      $region76: #{lenet5_forward.1} parent=71 // pred_fallthru
        _
    $region72: #{lenet5_forward.1} parent=5 // pred_fallthru
      _
    %p438 = scmp.le.s32.totalorder 1, %s21
    %p439 = scmp.lt.s32.totalorder %s21, 3
    %p440 = pnand %p438, %p439
    %p441 = pneg %p440
    // Predicated region
    $region77: #{lenet5_forward.1} parent=5 // pred_check
      _
    $region78: #{lenet5_forward.1} parent=5 // pred_check_branch
      %443 = sbr.rel (%p440) target = $region80
    $region79: #{lenet5_forward.1} parent=5 // pred_region
      %s444 = ssub.s32 %s21, 1
      %s445 = smul.u32 28, %s26
      %p446 = scmp.lt.s32.totalorder %s445, 55
      %s447 = scalar_select %p446, %s445, 55
      %s448 = smul.addr %s447, 2
      %s449 = smul.addr %s448, 4
      %s450 = scalar_lea.vmem %s0, %s449
      %p451 = pneg %p47
      %p452 = pneg %p44
      %p453 = pneg %p68
      %p454 = pneg %p65
      %p455 = pneg %p89
      %p456 = pneg %p86
      %p457 = pneg %p110
      %p458 = pneg %p107
      %p459 = pneg %p131
      %p460 = pneg %p128
      %p461 = pneg %p152
      %p462 = pneg %p149
      %p463 = pneg %p173
      %p464 = pneg %p170
      %p465 = pneg %p194
      %p466 = pneg %p191
      %p467 = pneg %p215
      %p468 = pneg %p212
      %p469 = pneg %p236
      %p470 = pneg %p233
      %p471 = pneg %p257
      %p472 = pneg %p254
      %p473 = pneg %p278
      %p474 = pneg %p275
      %p475 = pneg %p299
      %p476 = pneg %p296
      %p477 = pneg %p320
      %p478 = pneg %p317
      %p479 = pneg %p341
      %p480 = pneg %p338
      %p481 = pneg %p367
      %p482 = pneg %p364
      %p483 = scmp.lt.s32.totalorder %s26, 1
      %s484 = scalar_select %p483, %s26, 1
      %s485 = smul.addr %s484, 8
      %s486 = scalar_lea.vmem %s15, %s485
      %s487 = smul.u32 28, %s26
      %p488 = scmp.lt.s32.totalorder %s487, 55
      %s489 = scalar_select %p488, %s487, 55
      %s490 = smul.addr %s489, 2
      %s491 = smul.addr %s490, 4
      %s492 = scalar_lea.vmem %s0, %s491
      %s493 = smul.u32 28, %s26
      %p494 = scmp.lt.s32.totalorder %s26, 1
      %s495 = scalar_select %p494, %s26, 1
      %s496 = smul.addr %s495, 8
      %s497 = scalar_lea.vmem %s15, %s496
      %v499 = vld [vmem:[%s492] sm:$0xff]
      %v500 = vld [vmem:[%s492 + $0x8] sm:$0xff]
      %v501 = vld [vmem:[%s492 + $0x10] sm:$0xff]
      %v502 = vld [vmem:[%s492 + $0x18] sm:$0xff]
      %v503 = vld [vmem:[%s492 + $0x20] sm:$0xff]
      %v504 = vld [vmem:[%s492 + $0x28] sm:$0xff]
      %v505 = vld [vmem:[%s492 + $0x30] sm:$0xff]
      %v506 = vld [vmem:[%s492 + $0x38] sm:$0xff]
      %v507 = vld [vmem:[%s492 + $0x40] sm:$0xff]
      %v508 = vld [vmem:[%s492 + $0x48] sm:$0xff]
      %v509 = vld [vmem:[%s492 + $0x50] sm:$0xff]
      %v510 = vld [vmem:[%s492 + $0x58] sm:$0xff]
      %v511 = vld [vmem:[%s492 + $0x60] sm:$0xff]
      %v512 = vld [vmem:[%s492 + $0x68] sm:$0xff]
      %v513 = vld [vmem:[%s492 + $0x70] sm:$0xff]
      %v514 = vld [vmem:[%s492 + $0x78] sm:$0xff]
      %v515 = vld [vmem:[%s492 + $0x80] sm:$0xff]
      %v516 = vld [vmem:[%s492 + $0x88] sm:$0xff]
      %v517 = vld [vmem:[%s492 + $0x90] sm:$0xff]
      %v518 = vld [vmem:[%s492 + $0x98] sm:$0xff]
      %v519 = vld [vmem:[%s492 + $0xa0] sm:$0xff]
      %v520 = vld [vmem:[%s492 + $0xa8] sm:$0xff]
      %v521 = vld [vmem:[%s492 + $0xb0] sm:$0xff]
      %v522 = vld [vmem:[%s492 + $0xb8] sm:$0xff]
      %v523 = vld [vmem:[%s492 + $0xc0] sm:$0xff]
      %v524 = vld [vmem:[%s492 + $0xc8] sm:$0xff]
      %v525 = vld [vmem:[%s492 + $0xd0] sm:$0xff]
      %v526 = vld [vmem:[%s492 + $0xd8] sm:$0xff]
      %v527 = vld [vmem:[%s1] sm:$0xff]
      %v528 = vld [vmem:[%s1 + $0x8] sm:$0xff]
      %v529 = vld [vmem:[%s1 + $0x10] sm:$0xff]
      %v530 = vld [vmem:[%s1 + $0x18] sm:$0xff]
      %v531 = vld [vmem:[%s1 + $0x20] sm:$0xff]
      %v532 = vld [vmem:[%s1 + $0x28] sm:$0xff]
      %v533 = vld [vmem:[%s1 + $0x30] sm:$0xff]
      %v534 = vld [vmem:[%s1 + $0x38] sm:$0xff]
      %v535 = vld [vmem:[%s1 + $0x40] sm:$0xff]
      %v536 = vld [vmem:[%s1 + $0x48] sm:$0xff]
      %v537 = vld [vmem:[%s1 + $0x50] sm:$0xff]
      %v538 = vld [vmem:[%s1 + $0x58] sm:$0xff]
      %v539 = vld [vmem:[%s1 + $0x60] sm:$0xff]
      %v540 = vld [vmem:[%s1 + $0x68] sm:$0xff]
      %v541 = vld [vmem:[%s1 + $0x70] sm:$0xff]
      %v542 = vld [vmem:[%s1 + $0x78] sm:$0xff]
      %v543 = vld [vmem:[%s1 + $0x80] sm:$0xff]
      %v544 = vld [vmem:[%s1 + $0x88] sm:$0xff]
      %v545 = vld [vmem:[%s1 + $0x90] sm:$0xff]
      %v546 = vld [vmem:[%s1 + $0x98] sm:$0xff]
      %v547 = vld [vmem:[%s2] sm:$0x3]
      %v549 = vlaneseq
      %v550 = vshrl.u32 %v549, 7
      %v551 = vsub.s32 0, %v550
      %v552 = vrot.slane %v547, %v551
      %v553 = vlaneseq
      %v554 = vshrl.u32 %v553, 7
      %v555 = vsub.s32 1, %v554
      %v556 = vrot.slane %v547, %v555
      %v587 = vunpack.c.l.b16 %v499
      %v588 = vunpack.c.h.b16 %v499
      %v589 = vunpack.c.l.b16 %v500
      %v590 = vunpack.c.h.b16 %v500
      %v591 = vunpack.c.l.b16 %v501
      %v592 = vunpack.c.h.b16 %v501
      %v593 = vunpack.c.l.b16 %v502
      %v594 = vunpack.c.h.b16 %v502
      %v595 = vunpack.c.l.b16 %v503
      %v596 = vunpack.c.h.b16 %v503
      %v597 = vunpack.c.l.b16 %v504
      %v598 = vunpack.c.h.b16 %v504
      %v599 = vunpack.c.l.b16 %v505
      %v600 = vunpack.c.h.b16 %v505
      %v601 = vunpack.c.l.b16 %v506
      %v602 = vunpack.c.h.b16 %v506
      %v603 = vunpack.c.l.b16 %v507
      %v604 = vunpack.c.h.b16 %v507
      %v605 = vunpack.c.l.b16 %v508
      %v606 = vunpack.c.h.b16 %v508
      %v607 = vunpack.c.l.b16 %v509
      %v608 = vunpack.c.h.b16 %v509
      %v609 = vunpack.c.l.b16 %v510
      %v610 = vunpack.c.h.b16 %v510
      %v611 = vunpack.c.l.b16 %v511
      %v612 = vunpack.c.h.b16 %v511
      %v613 = vunpack.c.l.b16 %v512
      %v614 = vunpack.c.h.b16 %v512
      %v615 = vunpack.c.l.b16 %v513
      %v616 = vunpack.c.h.b16 %v513
      %v617 = vunpack.c.l.b16 %v514
      %v618 = vunpack.c.h.b16 %v514
      %v619 = vunpack.c.l.b16 %v515
      %v620 = vunpack.c.h.b16 %v515
      %v621 = vunpack.c.l.b16 %v516
      %v622 = vunpack.c.h.b16 %v516
      %v623 = vunpack.c.l.b16 %v517
      %v624 = vunpack.c.h.b16 %v517
      %v625 = vunpack.c.l.b16 %v518
      %v626 = vunpack.c.h.b16 %v518
      %v627 = vunpack.c.l.b16 %v519
      %v628 = vunpack.c.h.b16 %v519
      %v629 = vunpack.c.l.b16 %v520
      %v630 = vunpack.c.h.b16 %v520
      %v631 = vunpack.c.l.b16 %v521
      %v632 = vunpack.c.h.b16 %v521
      %v633 = vunpack.c.l.b16 %v522
      %v634 = vunpack.c.h.b16 %v522
      %v635 = vunpack.c.l.b16 %v523
      %v636 = vunpack.c.h.b16 %v523
      %v637 = vunpack.c.l.b16 %v524
      %v638 = vunpack.c.h.b16 %v524
      %v639 = vunpack.c.l.b16 %v525
      %v640 = vunpack.c.h.b16 %v525
      %v641 = vunpack.c.l.b16 %v526
      %v642 = vunpack.c.h.b16 %v526
      %v643 = vpack.c.b16 %v589, %v587
      %v644 = vpack.c.b16 %v590, %v588
      %v645 = vpack.c.b16 %v593, %v591
      %v646 = vpack.c.b16 %v594, %v592
      %v647 = vpack.c.b16 %v597, %v595
      %v648 = vpack.c.b16 %v598, %v596
      %v649 = vpack.c.b16 %v601, %v599
      %v650 = vpack.c.b16 %v602, %v600
      %v651 = vpack.c.b16 %v605, %v603
      %v652 = vpack.c.b16 %v606, %v604
      %v653 = vpack.c.b16 %v609, %v607
      %v654 = vpack.c.b16 %v610, %v608
      %v655 = vpack.c.b16 %v613, %v611
      %v656 = vpack.c.b16 %v614, %v612
      %v657 = vpack.c.b16 %v617, %v615
      %v658 = vpack.c.b16 %v618, %v616
      %v659 = vpack.c.b16 %v621, %v619
      %v660 = vpack.c.b16 %v622, %v620
      %v661 = vpack.c.b16 %v625, %v623
      %v662 = vpack.c.b16 %v626, %v624
      %v663 = vpack.c.b16 %v629, %v627
      %v664 = vpack.c.b16 %v630, %v628
      %v665 = vpack.c.b16 %v633, %v631
      %v666 = vpack.c.b16 %v634, %v632
      %v667 = vpack.c.b16 %v637, %v635
      %v668 = vpack.c.b16 %v638, %v636
      %v669 = vpack.c.b16 %v641, %v639
      %v670 = vpack.c.b16 %v642, %v640
      %v705 = vunpack.c.l.b16 %v527
      %v706 = vunpack.c.h.b16 %v527
      %v707 = vunpack.c.l.b16 %v528
      %v708 = vunpack.c.h.b16 %v528
      %v709 = vunpack.c.l.b16 %v529
      %v710 = vunpack.c.h.b16 %v529
      %v711 = vunpack.c.l.b16 %v530
      %v712 = vunpack.c.h.b16 %v530
      %v713 = vunpack.c.l.b16 %v531
      %v714 = vunpack.c.h.b16 %v531
      %v715 = vunpack.c.l.b16 %v532
      %v716 = vunpack.c.h.b16 %v532
      %v717 = vunpack.c.l.b16 %v533
      %v718 = vunpack.c.h.b16 %v533
      %v719 = vunpack.c.l.b16 %v534
      %v720 = vunpack.c.h.b16 %v534
      %v721 = vunpack.c.l.b16 %v535
      %v722 = vunpack.c.h.b16 %v535
      %v723 = vunpack.c.l.b16 %v536
      %v724 = vunpack.c.h.b16 %v536
      %v725 = vunpack.c.l.b16 %v537
      %v726 = vunpack.c.h.b16 %v537
      %v727 = vunpack.c.l.b16 %v538
      %v728 = vunpack.c.h.b16 %v538
      %v729 = vunpack.c.l.b16 %v539
      %v730 = vunpack.c.h.b16 %v539
      %v731 = vunpack.c.l.b16 %v540
      %v732 = vunpack.c.h.b16 %v540
      %v733 = vunpack.c.l.b16 %v541
      %v734 = vunpack.c.h.b16 %v541
      %v735 = vunpack.c.l.b16 %v542
      %v736 = vunpack.c.h.b16 %v542
      %v737 = vunpack.c.l.b16 %v543
      %v738 = vunpack.c.h.b16 %v543
      %v739 = vunpack.c.l.b16 %v544
      %v740 = vunpack.c.h.b16 %v544
      %v741 = vunpack.c.l.b16 %v545
      %v742 = vunpack.c.h.b16 %v545
      %v743 = vunpack.c.l.b16 %v546
      %v744 = vunpack.c.h.b16 %v546
      %v745 = vpack.c.b16 %v707, %v705
      %v746 = vpack.c.b16 %v708, %v706
      %v747 = vpack.c.b16 %v711, %v709
      %v748 = vpack.c.b16 %v712, %v710
      %v749 = vpack.c.b16 %v715, %v713
      %v750 = vpack.c.b16 %v716, %v714
      %v751 = vpack.c.b16 %v719, %v717
      %v752 = vpack.c.b16 %v720, %v718
      %v753 = vpack.c.b16 %v723, %v721
      %v754 = vpack.c.b16 %v724, %v722
      %v755 = vpack.c.b16 %v727, %v725
      %v756 = vpack.c.b16 %v728, %v726
      %v757 = vpack.c.b16 %v731, %v729
      %v758 = vpack.c.b16 %v732, %v730
      %v759 = vpack.c.b16 %v735, %v733
      %v760 = vpack.c.b16 %v736, %v734
      %v761 = vpack.c.b16 %v739, %v737
      %v762 = vpack.c.b16 %v740, %v738
      %v763 = vpack.c.b16 %v743, %v741
      %v764 = vpack.c.b16 %v744, %v742
      %vm785 = vcmask 261120
      %v787 = vsel %vm785, %v644, 0
      %v790 = vsel %vm785, %v646, 0
      %v793 = vsel %vm785, %v648, 0
      %v796 = vsel %vm785, %v650, 0
      %v799 = vsel %vm785, %v652, 0
      %v802 = vsel %vm785, %v654, 0
      %v805 = vsel %vm785, %v656, 0
      %v808 = vsel %vm785, %v658, 0
      %v811 = vsel %vm785, %v660, 0
      %v814 = vsel %vm785, %v662, 0
      %v817 = vsel %vm785, %v664, 0
      %v820 = vsel %vm785, %v666, 0
      %v823 = vsel %vm785, %v668, 0
      %v826 = vsel %vm785, %v670, 0
      %828 = vmatprep.subr.bf16.mxu0 %v746
      %829 = vmatpush1.bf16.msra.mxu0 %v745
      %830 = vmatprep.subr.bf16.mxu0 %v748
      %831 = vmatpush1.bf16.msra.mxu0 %v747
      %832 = vmatprep.subr.bf16.mxu0 %v750
      %833 = vmatpush1.bf16.msra.mxu0 %v749
      %834 = vmatprep.subr.bf16.mxu0 %v752
      %835 = vmatpush1.bf16.msra.mxu0 %v751
      %836 = vmatprep.subr.bf16.mxu0 %v754
      %837 = vmatpush1.bf16.msra.mxu0 %v753
      %838 = vmatprep.subr.bf16.mxu0 %v756
      %839 = vmatpush1.bf16.msra.mxu0 %v755
      %840 = vmatprep.subr.bf16.mxu0 %v758
      %841 = vmatpush1.bf16.msra.mxu0 %v757
      %842 = vmatprep.subr.bf16.mxu0 %v760
      %843 = vmatpush1.bf16.msra.mxu0 %v759
      %844 = vmatprep.subr.bf16.mxu0 %v762
      %845 = vmatpush1.bf16.msra.mxu0 %v761
      %846 = vmatprep.subr.bf16.mxu0 %v764
      %847 = vmatpush1.bf16.msra.mxu0 %v763
      %848 = vmatprep.subr.bf16.mxu0 0
      %849 = vmatpush1.bf16.msra.mxu0 0
      %850 = vmatprep.subr.bf16.mxu0 0
      %851 = vmatpush1.bf16.msra.mxu0 0
      %852 = vmatprep.subr.bf16.mxu0 0
      %853 = vmatpush1.bf16.msra.mxu0 0
      %854 = vmatprep.subr.bf16.mxu0 0
      %855 = vmatpush1.bf16.msra.mxu0 0
      %856 = vmatprep.subr.bf16.mxu0 0
      %857 = vmatpush1.bf16.msra.mxu0 0
      %858 = vmatprep.subr.bf16.mxu0 0
      %859 = vmatpush1.bf16.msra.mxu0 0
      %860 = vmatprep.mubr.bf16.mxu0 %v787
      %861 = vmatmul.mubr.bf16.gmra.mrb[0].mxu0 %v643
      %v862 = vpop.f32.mrb[0].mxu0
      %v863 = vadd.f32 %v552, %v862
      %v864 = vpop.f32.mrb[0].mxu0
      %v865 = vadd.f32 %v556, %v864
      %v866 = vpop.f32.mrb[0].mxu0
      %v867 = vadd.f32 %v552, %v866
      %v868 = vpop.f32.mrb[0].mxu0
      %v869 = vadd.f32 %v556, %v868
      %870 = vmatprep.mubr.bf16.mxu0 %v790
      %871 = vmatmul.mubr.bf16.gmra.mrb[0].mxu0 %v645
      %v872 = vpop.f32.mrb[0].mxu0
      %v873 = vadd.f32 %v552, %v872
      %v874 = vpop.f32.mrb[0].mxu0
      %v875 = vadd.f32 %v556, %v874
      %v876 = vpop.f32.mrb[0].mxu0
      %v877 = vadd.f32 %v552, %v876
      %v878 = vpop.f32.mrb[0].mxu0
      %v879 = vadd.f32 %v556, %v878
      %880 = vmatprep.mubr.bf16.mxu0 %v793
      %881 = vmatmul.mubr.bf16.gmra.mrb[0].mxu0 %v647
      %v882 = vpop.f32.mrb[0].mxu0
      %v883 = vadd.f32 %v552, %v882
      %v884 = vpop.f32.mrb[0].mxu0
      %v885 = vadd.f32 %v556, %v884
      %v886 = vpop.f32.mrb[0].mxu0
      %v887 = vadd.f32 %v552, %v886
      %v888 = vpop.f32.mrb[0].mxu0
      %v889 = vadd.f32 %v556, %v888
      %890 = vmatprep.mubr.bf16.mxu0 %v796
      %891 = vmatmul.mubr.bf16.gmra.mrb[0].mxu0 %v649
      %v892 = vpop.f32.mrb[0].mxu0
      %v893 = vadd.f32 %v552, %v892
      %v894 = vpop.f32.mrb[0].mxu0
      %v895 = vadd.f32 %v556, %v894
      %v896 = vpop.f32.mrb[0].mxu0
      %v897 = vadd.f32 %v552, %v896
      %v898 = vpop.f32.mrb[0].mxu0
      %v899 = vadd.f32 %v556, %v898
      %900 = vmatprep.mubr.bf16.mxu0 %v799
      %901 = vmatmul.mubr.bf16.gmra.mrb[0].mxu0 %v651
      %v902 = vpop.f32.mrb[0].mxu0
      %v903 = vadd.f32 %v552, %v902
      %v904 = vpop.f32.mrb[0].mxu0
      %v905 = vadd.f32 %v556, %v904
      %v906 = vpop.f32.mrb[0].mxu0
      %v907 = vadd.f32 %v552, %v906
      %v908 = vpop.f32.mrb[0].mxu0
      %v909 = vadd.f32 %v556, %v908
      %910 = vmatprep.mubr.bf16.mxu0 %v802
      %911 = vmatmul.mubr.bf16.gmra.mrb[0].mxu0 %v653
      %v912 = vpop.f32.mrb[0].mxu0
      %v913 = vadd.f32 %v552, %v912
      %v914 = vpop.f32.mrb[0].mxu0
      %v915 = vadd.f32 %v556, %v914
      %v916 = vpop.f32.mrb[0].mxu0
      %v917 = vadd.f32 %v552, %v916
      %v918 = vpop.f32.mrb[0].mxu0
      %v919 = vadd.f32 %v556, %v918
      %920 = vmatprep.mubr.bf16.mxu0 %v805
      %921 = vmatmul.mubr.bf16.gmra.mrb[0].mxu0 %v655
      %v922 = vpop.f32.mrb[0].mxu0
      %v923 = vadd.f32 %v552, %v922
      %v924 = vpop.f32.mrb[0].mxu0
      %v925 = vadd.f32 %v556, %v924
      %v926 = vpop.f32.mrb[0].mxu0
      %v927 = vadd.f32 %v552, %v926
      %v928 = vpop.f32.mrb[0].mxu0
      %v929 = vadd.f32 %v556, %v928
      %930 = vmatprep.mubr.bf16.mxu0 %v808
      %931 = vmatmul.mubr.bf16.gmra.mrb[0].mxu0 %v657
      %v932 = vpop.f32.mrb[0].mxu0
      %v933 = vadd.f32 %v552, %v932
      %v934 = vpop.f32.mrb[0].mxu0
      %v935 = vadd.f32 %v556, %v934
      %v936 = vpop.f32.mrb[0].mxu0
      %v937 = vadd.f32 %v552, %v936
      %v938 = vpop.f32.mrb[0].mxu0
      %v939 = vadd.f32 %v556, %v938
      %940 = vmatprep.mubr.bf16.mxu0 %v811
      %941 = vmatmul.mubr.bf16.gmra.mrb[0].mxu0 %v659
      %v942 = vpop.f32.mrb[0].mxu0
      %v943 = vadd.f32 %v552, %v942
      %v944 = vpop.f32.mrb[0].mxu0
      %v945 = vadd.f32 %v556, %v944
      %v946 = vpop.f32.mrb[0].mxu0
      %v947 = vadd.f32 %v552, %v946
      %v948 = vpop.f32.mrb[0].mxu0
      %v949 = vadd.f32 %v556, %v948
      %950 = vmatprep.mubr.bf16.mxu0 %v814
      %951 = vmatmul.mubr.bf16.gmra.mrb[0].mxu0 %v661
      %v952 = vpop.f32.mrb[0].mxu0
      %v953 = vadd.f32 %v552, %v952
      %v954 = vpop.f32.mrb[0].mxu0
      %v955 = vadd.f32 %v556, %v954
      %v956 = vpop.f32.mrb[0].mxu0
      %v957 = vadd.f32 %v552, %v956
      %v958 = vpop.f32.mrb[0].mxu0
      %v959 = vadd.f32 %v556, %v958
      %960 = vmatprep.mubr.bf16.mxu0 %v817
      %961 = vmatmul.mubr.bf16.gmra.mrb[0].mxu0 %v663
      %v962 = vpop.f32.mrb[0].mxu0
      %v963 = vadd.f32 %v552, %v962
      %v964 = vpop.f32.mrb[0].mxu0
      %v965 = vadd.f32 %v556, %v964
      %v966 = vpop.f32.mrb[0].mxu0
      %v967 = vadd.f32 %v552, %v966
      %v968 = vpop.f32.mrb[0].mxu0
      %v969 = vadd.f32 %v556, %v968
      %970 = vmatprep.mubr.bf16.mxu0 %v820
      %971 = vmatmul.mubr.bf16.gmra.mrb[0].mxu0 %v665
      %v972 = vpop.f32.mrb[0].mxu0
      %v973 = vadd.f32 %v552, %v972
      %v974 = vpop.f32.mrb[0].mxu0
      %v975 = vadd.f32 %v556, %v974
      %v976 = vpop.f32.mrb[0].mxu0
      %v977 = vadd.f32 %v552, %v976
      %v978 = vpop.f32.mrb[0].mxu0
      %v979 = vadd.f32 %v556, %v978
      %980 = vmatprep.mubr.bf16.mxu0 %v823
      %981 = vmatmul.mubr.bf16.gmra.mrb[0].mxu0 %v667
      %v982 = vpop.f32.mrb[0].mxu0
      %v983 = vadd.f32 %v552, %v982
      %v984 = vpop.f32.mrb[0].mxu0
      %v985 = vadd.f32 %v556, %v984
      %v986 = vpop.f32.mrb[0].mxu0
      %v987 = vadd.f32 %v552, %v986
      %v988 = vpop.f32.mrb[0].mxu0
      %v989 = vadd.f32 %v556, %v988
      %990 = vmatprep.mubr.bf16.mxu0 %v826
      %991 = vmatmul.mubr.bf16.gmra.mrb[0].mxu0 %v669
      %v992 = vpop.f32.mrb[0].mxu0
      %v993 = vadd.f32 %v552, %v992
      %v994 = vpop.f32.mrb[0].mxu0
      %v995 = vadd.f32 %v556, %v994
      %v996 = vpop.f32.mrb[0].mxu0
      %v997 = vadd.f32 %v552, %v996
      %v998 = vpop.f32.mrb[0].mxu0
      %v999 = vadd.f32 %v556, %v998
      %1000 = vdwg.mxu0
      %v1001 = vtanh.pop %v863
      %v1002 = vtanh.pop %v865
      %v1003 = vtanh.pop %v867
      %v1004 = vtanh.pop %v869
      %v1005 = vtanh.pop %v873
      %v1006 = vtanh.pop %v875
      %v1007 = vtanh.pop %v877
      %v1008 = vtanh.pop %v879
      %v1009 = vtanh.pop %v883
      %v1010 = vtanh.pop %v885
      %v1011 = vtanh.pop %v887
      %v1012 = vtanh.pop %v889
      %v1013 = vtanh.pop %v893
      %v1014 = vtanh.pop %v895
      %v1015 = vtanh.pop %v897
      %v1016 = vtanh.pop %v899
      %v1017 = vtanh.pop %v903
      %v1018 = vtanh.pop %v905
      %v1019 = vtanh.pop %v907
      %v1020 = vtanh.pop %v909
      %v1021 = vtanh.pop %v913
      %v1022 = vtanh.pop %v915
      %v1023 = vtanh.pop %v917
      %v1024 = vtanh.pop %v919
      %v1025 = vtanh.pop %v923
      %v1026 = vtanh.pop %v925
      %v1027 = vtanh.pop %v927
      %v1028 = vtanh.pop %v929
      %v1029 = vtanh.pop %v933
      %v1030 = vtanh.pop %v935
      %v1031 = vtanh.pop %v937
      %v1032 = vtanh.pop %v939
      %v1033 = vtanh.pop %v943
      %v1034 = vtanh.pop %v945
      %v1035 = vtanh.pop %v947
      %v1036 = vtanh.pop %v949
      %v1037 = vtanh.pop %v953
      %v1038 = vtanh.pop %v955
      %v1039 = vtanh.pop %v957
      %v1040 = vtanh.pop %v959
      %v1041 = vtanh.pop %v963
      %v1042 = vtanh.pop %v965
      %v1043 = vtanh.pop %v967
      %v1044 = vtanh.pop %v969
      %v1045 = vtanh.pop %v973
      %v1046 = vtanh.pop %v975
      %v1047 = vtanh.pop %v977
      %v1048 = vtanh.pop %v979
      %v1049 = vtanh.pop %v983
      %v1050 = vtanh.pop %v985
      %v1051 = vtanh.pop %v987
      %v1052 = vtanh.pop %v989
      %v1053 = vtanh.pop %v993
      %v1054 = vtanh.pop %v995
      %v1055 = vtanh.pop %v997
      %v1056 = vtanh.pop %v999
      %v1057 = vpack.c.bf16 %v1003, %v1001
      %v1058 = vpack.c.bf16 %v1004, %v1002
      %v1059 = vpack.c.bf16 %v1007, %v1005
      %v1060 = vpack.c.bf16 %v1008, %v1006
      %v1061 = vpack.c.bf16 %v1011, %v1009
      %v1062 = vpack.c.bf16 %v1012, %v1010
      %v1063 = vpack.c.bf16 %v1015, %v1013
      %v1064 = vpack.c.bf16 %v1016, %v1014
      %v1065 = vpack.c.bf16 %v1019, %v1017
      %v1066 = vpack.c.bf16 %v1020, %v1018
      %v1067 = vpack.c.bf16 %v1023, %v1021
      %v1068 = vpack.c.bf16 %v1024, %v1022
      %v1069 = vpack.c.bf16 %v1027, %v1025
      %v1070 = vpack.c.bf16 %v1028, %v1026
      %v1071 = vpack.c.bf16 %v1031, %v1029
      %v1072 = vpack.c.bf16 %v1032, %v1030
      %v1073 = vpack.c.bf16 %v1035, %v1033
      %v1074 = vpack.c.bf16 %v1036, %v1034
      %v1075 = vpack.c.bf16 %v1039, %v1037
      %v1076 = vpack.c.bf16 %v1040, %v1038
      %v1077 = vpack.c.bf16 %v1043, %v1041
      %v1078 = vpack.c.bf16 %v1044, %v1042
      %v1079 = vpack.c.bf16 %v1047, %v1045
      %v1080 = vpack.c.bf16 %v1048, %v1046
      %v1081 = vpack.c.bf16 %v1051, %v1049
      %v1082 = vpack.c.bf16 %v1052, %v1050
      %v1083 = vpack.c.bf16 %v1055, %v1053
      %v1084 = vpack.c.bf16 %v1056, %v1054
      %v1085 = vld [vmem:[%s3] sm:$0xf]
      %v1086 = vld [vmem:[%s3 + $0x4] sm:$0xf]
      %v1087 = vld [vmem:[%s3 + $0x8] sm:$0xf]
      %v1088 = vld [vmem:[%s3 + $0xc] sm:$0xf]
      %v1089 = vld [vmem:[%s3 + $0x10] sm:$0xf]
      %v1090 = vld [vmem:[%s3 + $0x14] sm:$0xf]
      %v1091 = vld [vmem:[%s3 + $0x18] sm:$0xf]
      %v1092 = vld [vmem:[%s3 + $0x1c] sm:$0xf]
      %v1093 = vld [vmem:[%s3 + $0x20] sm:$0xf]
      %v1094 = vld [vmem:[%s3 + $0x24] sm:$0xf]
      %v1095 = vld [vmem:[%s3 + $0x28] sm:$0xf]
      %v1096 = vld [vmem:[%s3 + $0x2c] sm:$0xf]
      %v1097 = vld [vmem:[%s3 + $0x30] sm:$0xf]
      %v1098 = vld [vmem:[%s3 + $0x34] sm:$0xf]
      %v1099 = vld [vmem:[%s3 + $0x38] sm:$0xf]
      %v1100 = vld [vmem:[%s3 + $0x3c] sm:$0xf]
      %v1101 = vld [vmem:[%s3 + $0x40] sm:$0xf]
      %v1102 = vld [vmem:[%s3 + $0x44] sm:$0xf]
      %v1103 = vld [vmem:[%s3 + $0x48] sm:$0xf]
      %v1104 = vld [vmem:[%s3 + $0x4c] sm:$0xf]
      %v1105 = vld [vmem:[%s3 + $0x50] sm:$0xf]
      %v1127 = vunpack.c.l.b16 %v1085
      %v1128 = vunpack.c.l.b16 %v1086
      %v1129 = vunpack.c.l.b16 %v1087
      %v1130 = vunpack.c.l.b16 %v1088
      %v1131 = vunpack.c.l.b16 %v1089
      %v1132 = vunpack.c.l.b16 %v1090
      %v1133 = vunpack.c.l.b16 %v1091
      %v1134 = vunpack.c.l.b16 %v1092
      %v1135 = vunpack.c.l.b16 %v1093
      %v1136 = vunpack.c.l.b16 %v1094
      %v1137 = vunpack.c.l.b16 %v1095
      %v1138 = vunpack.c.l.b16 %v1096
      %v1139 = vunpack.c.l.b16 %v1097
      %v1140 = vunpack.c.l.b16 %v1098
      %v1141 = vunpack.c.l.b16 %v1099
      %v1142 = vunpack.c.l.b16 %v1100
      %v1143 = vunpack.c.l.b16 %v1101
      %v1144 = vunpack.c.l.b16 %v1102
      %v1145 = vunpack.c.l.b16 %v1103
      %v1146 = vunpack.c.l.b16 %v1104
      %v1147 = vunpack.c.l.b16 %v1105
      %v1148 = vpack.c.b16 %v1128, %v1127
      %v1149 = vpack.c.b16 %v1130, %v1129
      %v1150 = vpack.c.b16 %v1132, %v1131
      %v1151 = vpack.c.b16 %v1134, %v1133
      %v1152 = vpack.c.b16 %v1136, %v1135
      %v1153 = vpack.c.b16 %v1138, %v1137
      %v1154 = vpack.c.b16 %v1140, %v1139
      %v1155 = vpack.c.b16 %v1142, %v1141
      %v1156 = vpack.c.b16 %v1144, %v1143
      %v1157 = vpack.c.b16 %v1146, %v1145
      %v1158 = vpack.c.b16 %v1147, %v1147
      %vm1169 = vcmask 326656
      %v1171 = vsel %vm1169, %v1058, 0
      %v1174 = vsel %vm1169, %v1060, 0
      %v1177 = vsel %vm1169, %v1062, 0
      %v1180 = vsel %vm1169, %v1064, 0
      %v1183 = vsel %vm1169, %v1066, 0
      %v1186 = vsel %vm1169, %v1068, 0
      %v1189 = vsel %vm1169, %v1070, 0
      %v1192 = vsel %vm1169, %v1072, 0
      %v1195 = vsel %vm1169, %v1074, 0
      %v1198 = vsel %vm1169, %v1076, 0
      %v1201 = vsel %vm1169, %v1078, 0
      %v1204 = vsel %vm1169, %v1080, 0
      %v1207 = vsel %vm1169, %v1082, 0
      %v1210 = vsel %vm1169, %v1084, 0
      %vm1212 = vcmask 1043456
      %v1214 = vsel %vm1212, %v1158, 0
      %1216 = vmatprep.subr.bf16.mxu0 0
      %1217 = vmatpush1.bf16.msra.mxu0 %v1148
      %1218 = vmatprep.subr.bf16.mxu0 0
      %1219 = vmatpush1.bf16.msra.mxu0 %v1149
      %1220 = vmatprep.subr.bf16.mxu0 0
      %1221 = vmatpush1.bf16.msra.mxu0 %v1150
      %1222 = vmatprep.subr.bf16.mxu0 0
      %1223 = vmatpush1.bf16.msra.mxu0 %v1151
      %1224 = vmatprep.subr.bf16.mxu0 0
      %1225 = vmatpush1.bf16.msra.mxu0 %v1152
      %1226 = vmatprep.subr.bf16.mxu0 0
      %1227 = vmatpush1.bf16.msra.mxu0 %v1153
      %1228 = vmatprep.subr.bf16.mxu0 0
      %1229 = vmatpush1.bf16.msra.mxu0 %v1154
      %1230 = vmatprep.subr.bf16.mxu0 0
      %1231 = vmatpush1.bf16.msra.mxu0 %v1155
      %1232 = vmatprep.subr.bf16.mxu0 0
      %1233 = vmatpush1.bf16.msra.mxu0 %v1156
      %1234 = vmatprep.subr.bf16.mxu0 0
      %1235 = vmatpush1.bf16.msra.mxu0 %v1157
      %1236 = vmatprep.subr.bf16.mxu0 0
      %1237 = vmatpush1.bf16.msra.mxu0 %v1214
      %1238 = vmatprep.subr.bf16.mxu0 0
      %1239 = vmatpush1.bf16.msra.mxu0 0
      %1240 = vmatprep.subr.bf16.mxu0 0
      %1241 = vmatpush1.bf16.msra.mxu0 0
      %1242 = vmatprep.subr.bf16.mxu0 0
      %1243 = vmatpush1.bf16.msra.mxu0 0
      %1244 = vmatprep.subr.bf16.mxu0 0
      %1245 = vmatpush1.bf16.msra.mxu0 0
      %1246 = vmatprep.subr.bf16.mxu0 0
      %1247 = vmatpush1.bf16.msra.mxu0 0
      %1248 = vmatprep.mubr.bf16.mxu0 %v1171
      %1249 = vmatmul.mubr.bf16.gmra.mrb[0].mxu0 %v1057
      %v1250 = vpop.f32.mrb[0].mxu0
      %v1251 = vadd.f32 0.0, %v1250
      %v1252 = vpop.f32.mrb[0].mxu0
      %v1253 = vpop.f32.mrb[0].mxu0
      %v1254 = vadd.f32 0.0, %v1253
      %v1255 = vpop.f32.mrb[0].mxu0
      %1256 = vmatprep.mubr.bf16.mxu0 %v1174
      %1257 = vmatmul.mubr.bf16.gmra.mrb[0].mxu0 %v1059
      %v1258 = vpop.f32.mrb[0].mxu0
      %v1259 = vadd.f32 0.0, %v1258
      %v1260 = vpop.f32.mrb[0].mxu0
      %v1261 = vpop.f32.mrb[0].mxu0
      %v1262 = vadd.f32 0.0, %v1261
      %v1263 = vpop.f32.mrb[0].mxu0
      %1264 = vmatprep.mubr.bf16.mxu0 %v1177
      %1265 = vmatmul.mubr.bf16.gmra.mrb[0].mxu0 %v1061
      %v1266 = vpop.f32.mrb[0].mxu0
      %v1267 = vadd.f32 0.0, %v1266
      %v1268 = vpop.f32.mrb[0].mxu0
      %v1269 = vpop.f32.mrb[0].mxu0
      %v1270 = vadd.f32 0.0, %v1269
      %v1271 = vpop.f32.mrb[0].mxu0
      %1272 = vmatprep.mubr.bf16.mxu0 %v1180
      %1273 = vmatmul.mubr.bf16.gmra.mrb[0].mxu0 %v1063
      %v1274 = vpop.f32.mrb[0].mxu0
      %v1275 = vadd.f32 0.0, %v1274
      %v1276 = vpop.f32.mrb[0].mxu0
      %v1277 = vpop.f32.mrb[0].mxu0
      %v1278 = vadd.f32 0.0, %v1277
      %v1279 = vpop.f32.mrb[0].mxu0
      %1280 = vmatprep.mubr.bf16.mxu0 %v1183
      %1281 = vmatmul.mubr.bf16.gmra.mrb[0].mxu0 %v1065
      %v1282 = vpop.f32.mrb[0].mxu0
      %v1283 = vadd.f32 0.0, %v1282
      %v1284 = vpop.f32.mrb[0].mxu0
      %v1285 = vpop.f32.mrb[0].mxu0
      %v1286 = vadd.f32 0.0, %v1285
      %v1287 = vpop.f32.mrb[0].mxu0
      %1288 = vmatprep.mubr.bf16.mxu0 %v1186
      %1289 = vmatmul.mubr.bf16.gmra.mrb[0].mxu0 %v1067
      %v1290 = vpop.f32.mrb[0].mxu0
      %v1291 = vadd.f32 0.0, %v1290
      %v1292 = vpop.f32.mrb[0].mxu0
      %v1293 = vpop.f32.mrb[0].mxu0
      %v1294 = vadd.f32 0.0, %v1293
      %v1295 = vpop.f32.mrb[0].mxu0
      %1296 = vmatprep.mubr.bf16.mxu0 %v1189
      %1297 = vmatmul.mubr.bf16.gmra.mrb[0].mxu0 %v1069
      %v1298 = vpop.f32.mrb[0].mxu0
      %v1299 = vadd.f32 0.0, %v1298
      %v1300 = vpop.f32.mrb[0].mxu0
      %v1301 = vpop.f32.mrb[0].mxu0
      %v1302 = vadd.f32 0.0, %v1301
      %v1303 = vpop.f32.mrb[0].mxu0
      %1304 = vmatprep.mubr.bf16.mxu0 %v1192
      %1305 = vmatmul.mubr.bf16.gmra.mrb[0].mxu0 %v1071
      %v1306 = vpop.f32.mrb[0].mxu0
      %v1307 = vadd.f32 0.0, %v1306
      %v1308 = vpop.f32.mrb[0].mxu0
      %v1309 = vpop.f32.mrb[0].mxu0
      %v1310 = vadd.f32 0.0, %v1309
      %v1311 = vpop.f32.mrb[0].mxu0
      %1312 = vmatprep.mubr.bf16.mxu0 %v1195
      %1313 = vmatmul.mubr.bf16.gmra.mrb[0].mxu0 %v1073
      %v1314 = vpop.f32.mrb[0].mxu0
      %v1315 = vadd.f32 0.0, %v1314
      %v1316 = vpop.f32.mrb[0].mxu0
      %v1317 = vpop.f32.mrb[0].mxu0
      %v1318 = vadd.f32 0.0, %v1317
      %v1319 = vpop.f32.mrb[0].mxu0
      %1320 = vmatprep.mubr.bf16.mxu0 %v1198
      %1321 = vmatmul.mubr.bf16.gmra.mrb[0].mxu0 %v1075
      %v1322 = vpop.f32.mrb[0].mxu0
      %v1323 = vadd.f32 0.0, %v1322
      %v1324 = vpop.f32.mrb[0].mxu0
      %v1325 = vpop.f32.mrb[0].mxu0
      %v1326 = vadd.f32 0.0, %v1325
      %v1327 = vpop.f32.mrb[0].mxu0
      %1328 = vmatprep.mubr.bf16.mxu0 %v1201
      %1329 = vmatmul.mubr.bf16.gmra.mrb[0].mxu0 %v1077
      %v1330 = vpop.f32.mrb[0].mxu0
      %v1331 = vadd.f32 0.0, %v1330
      %v1332 = vpop.f32.mrb[0].mxu0
      %v1333 = vpop.f32.mrb[0].mxu0
      %v1334 = vadd.f32 0.0, %v1333
      %v1335 = vpop.f32.mrb[0].mxu0
      %1336 = vmatprep.mubr.bf16.mxu0 %v1204
      %1337 = vmatmul.mubr.bf16.gmra.mrb[0].mxu0 %v1079
      %v1338 = vpop.f32.mrb[0].mxu0
      %v1339 = vadd.f32 0.0, %v1338
      %v1340 = vpop.f32.mrb[0].mxu0
      %v1341 = vpop.f32.mrb[0].mxu0
      %v1342 = vadd.f32 0.0, %v1341
      %v1343 = vpop.f32.mrb[0].mxu0
      %1344 = vmatprep.mubr.bf16.mxu0 %v1207
      %1345 = vmatmul.mubr.bf16.gmra.mrb[0].mxu0 %v1081
      %v1346 = vpop.f32.mrb[0].mxu0
      %v1347 = vadd.f32 0.0, %v1346
      %v1348 = vpop.f32.mrb[0].mxu0
      %v1349 = vpop.f32.mrb[0].mxu0
      %v1350 = vadd.f32 0.0, %v1349
      %v1351 = vpop.f32.mrb[0].mxu0
      %1352 = vmatprep.mubr.bf16.mxu0 %v1210
      %1353 = vmatmul.mubr.bf16.gmra.mrb[0].mxu0 %v1083
      %v1354 = vpop.f32.mrb[0].mxu0
      %v1355 = vadd.f32 0.0, %v1354
      %v1356 = vpop.f32.mrb[0].mxu0
      %v1357 = vpop.f32.mrb[0].mxu0
      %v1358 = vadd.f32 0.0, %v1357
      %v1359 = vpop.f32.mrb[0].mxu0
      %1360 = vdwg.mxu0
      %v1361 = vpack.c.bf16 %v1254, %v1251
      %v1362 = vpack.c.bf16 %v1262, %v1259
      %v1363 = vpack.c.bf16 %v1270, %v1267
      %v1364 = vpack.c.bf16 %v1278, %v1275
      %v1365 = vpack.c.bf16 %v1286, %v1283
      %v1366 = vpack.c.bf16 %v1294, %v1291
      %v1367 = vpack.c.bf16 %v1302, %v1299
      %v1368 = vpack.c.bf16 %v1310, %v1307
      %v1369 = vpack.c.bf16 %v1318, %v1315
      %v1370 = vpack.c.bf16 %v1326, %v1323
      %v1371 = vpack.c.bf16 %v1334, %v1331
      %v1372 = vpack.c.bf16 %v1342, %v1339
      %v1373 = vpack.c.bf16 %v1350, %v1347
      %v1374 = vpack.c.bf16 %v1358, %v1355
      %v1375 = vld [vmem:[%s4] sm:$0xff]
      %v1376 = vld [vmem:[%s4 + $0x8] sm:$0xff]
      %v1377 = vld [vmem:[%s4 + $0x10] sm:$0xff]
      %v1378 = vld [vmem:[%s4 + $0x18] sm:$0xff]
      %v1379 = vld [vmem:[%s4 + $0x20] sm:$0xff]
      %v1380 = vld [vmem:[%s4 + $0x28] sm:$0xff]
      %v1381 = vld [vmem:[%s4 + $0x30] sm:$0xff]
      %v1382 = vld [vmem:[%s4 + $0x38] sm:$0xff]
      %v1383 = vld [vmem:[%s4 + $0x40] sm:$0xff]
      %v1384 = vld [vmem:[%s4 + $0x48] sm:$0xff]
      %v1395 = vunpack.c.l.b16 %v1375
      %v1396 = vunpack.c.h.b16 %v1375
      %v1397 = vunpack.c.l.b16 %v1376
      %v1398 = vunpack.c.h.b16 %v1376
      %v1399 = vunpack.c.l.b16 %v1377
      %v1400 = vunpack.c.h.b16 %v1377
      %v1401 = vunpack.c.l.b16 %v1378
      %v1402 = vunpack.c.h.b16 %v1378
      %v1403 = vunpack.c.l.b16 %v1379
      %v1404 = vunpack.c.h.b16 %v1379
      %v1405 = vunpack.c.l.b16 %v1380
      %v1406 = vunpack.c.h.b16 %v1380
      %v1407 = vunpack.c.l.b16 %v1381
      %v1408 = vunpack.c.h.b16 %v1381
      %v1409 = vunpack.c.l.b16 %v1382
      %v1410 = vunpack.c.h.b16 %v1382
      %v1411 = vunpack.c.l.b16 %v1383
      %v1412 = vunpack.c.h.b16 %v1383
      %v1413 = vunpack.c.l.b16 %v1384
      %v1414 = vunpack.c.h.b16 %v1384
      %v1415 = vpack.c.b16 %v1397, %v1395
      %v1416 = vpack.c.b16 %v1398, %v1396
      %v1417 = vpack.c.b16 %v1401, %v1399
      %v1418 = vpack.c.b16 %v1402, %v1400
      %v1419 = vpack.c.b16 %v1405, %v1403
      %v1420 = vpack.c.b16 %v1406, %v1404
      %v1421 = vpack.c.b16 %v1409, %v1407
      %v1422 = vpack.c.b16 %v1410, %v1408
      %v1423 = vpack.c.b16 %v1413, %v1411
      %v1424 = vpack.c.b16 %v1414, %v1412
      %vm1430 = vcmask 785408
      %v1432 = vsel %vm1430, %v1416, 0
      %v1435 = vsel %vm1430, %v1418, 0
      %v1438 = vsel %vm1430, %v1420, 0
      %v1441 = vsel %vm1430, %v1422, 0
      %v1444 = vsel %vm1430, %v1424, 0
      %1446 = vmatprep.subr.bf16.mxu0 0
      %1447 = vmatpush1.bf16.msra.mxu0 %v1361
      %1448 = vmatprep.subr.bf16.mxu0 0
      %1449 = vmatpush1.bf16.msra.mxu0 %v1362
      %1450 = vmatprep.subr.bf16.mxu0 0
      %1451 = vmatpush1.bf16.msra.mxu0 %v1363
      %1452 = vmatprep.subr.bf16.mxu0 0
      %1453 = vmatpush1.bf16.msra.mxu0 %v1364
      %1454 = vmatprep.subr.bf16.mxu0 0
      %1455 = vmatpush1.bf16.msra.mxu0 %v1365
      %1456 = vmatprep.subr.bf16.mxu0 0
      %1457 = vmatpush1.bf16.msra.mxu0 %v1366
      %1458 = vmatprep.subr.bf16.mxu0 0
      %1459 = vmatpush1.bf16.msra.mxu0 %v1367
      %1460 = vmatprep.subr.bf16.mxu0 0
      %1461 = vmatpush1.bf16.msra.mxu0 %v1368
      %1462 = vmatprep.subr.bf16.mxu0 0
      %1463 = vmatpush1.bf16.msra.mxu0 %v1369
      %1464 = vmatprep.subr.bf16.mxu0 0
      %1465 = vmatpush1.bf16.msra.mxu0 %v1370
      %1466 = vmatprep.subr.bf16.mxu0 0
      %1467 = vmatpush1.bf16.msra.mxu0 %v1371
      %1468 = vmatprep.subr.bf16.mxu0 0
      %1469 = vmatpush1.bf16.msra.mxu0 %v1372
      %1470 = vmatprep.subr.bf16.mxu0 0
      %1471 = vmatpush1.bf16.msra.mxu0 %v1373
      %1472 = vmatprep.subr.bf16.mxu0 0
      %1473 = vmatpush1.bf16.msra.mxu0 %v1374
      %1474 = vmatprep.subr.bf16.mxu0 0
      %1475 = vmatpush1.bf16.msra.mxu0 0
      %1476 = vmatprep.subr.bf16.mxu0 0
      %1477 = vmatpush1.bf16.msra.mxu0 0
      %1478 = vmatprep.mubr.bf16.mxu0 %v1432
      %1479 = vmatmul.mubr.bf16.gmra.mrb[0].mxu0 %v1415
      %v1480 = vpop.f32.mrb[0].mxu0
      %v1481 = vadd.f32 0.0, %v1480
      %v1482 = vpop.f32.mrb[0].mxu0
      %v1483 = vpop.f32.mrb[0].mxu0
      %v1484 = vadd.f32 0.0, %v1483
      %v1485 = vpop.f32.mrb[0].mxu0
      %1486 = vmatprep.mubr.bf16.mxu0 %v1435
      %1487 = vmatmul.mubr.bf16.gmra.mrb[0].mxu0 %v1417
      %v1488 = vpop.f32.mrb[0].mxu0
      %v1489 = vadd.f32 0.0, %v1488
      %v1490 = vpop.f32.mrb[0].mxu0
      %v1491 = vpop.f32.mrb[0].mxu0
      %v1492 = vadd.f32 0.0, %v1491
      %v1493 = vpop.f32.mrb[0].mxu0
      %1494 = vmatprep.mubr.bf16.mxu0 %v1438
      %1495 = vmatmul.mubr.bf16.gmra.mrb[0].mxu0 %v1419
      %v1496 = vpop.f32.mrb[0].mxu0
      %v1497 = vadd.f32 0.0, %v1496
      %v1498 = vpop.f32.mrb[0].mxu0
      %v1499 = vpop.f32.mrb[0].mxu0
      %v1500 = vadd.f32 0.0, %v1499
      %v1501 = vpop.f32.mrb[0].mxu0
      %1502 = vmatprep.mubr.bf16.mxu0 %v1441
      %1503 = vmatmul.mubr.bf16.gmra.mrb[0].mxu0 %v1421
      %v1504 = vpop.f32.mrb[0].mxu0
      %v1505 = vadd.f32 0.0, %v1504
      %v1506 = vpop.f32.mrb[0].mxu0
      %v1507 = vpop.f32.mrb[0].mxu0
      %v1508 = vadd.f32 0.0, %v1507
      %v1509 = vpop.f32.mrb[0].mxu0
      %1510 = vmatprep.mubr.bf16.mxu0 %v1444
      %1511 = vmatmul.mubr.bf16.gmra.mrb[0].mxu0 %v1423
      %v1512 = vpop.f32.mrb[0].mxu0
      %v1513 = vadd.f32 0.0, %v1512
      %v1514 = vpop.f32.mrb[0].mxu0
      %v1515 = vpop.f32.mrb[0].mxu0
      %v1516 = vadd.f32 0.0, %v1515
      %v1517 = vpop.f32.mrb[0].mxu0
      %1518 = vdwg.mxu0
      %s1519 = scalar_lea.vmem %s4, 80
      %v1520 = vld [vmem:[%s1519] sm:$0xff]
      %v1521 = vld [vmem:[%s1519 + $0x8] sm:$0xff]
      %v1522 = vld [vmem:[%s1519 + $0x10] sm:$0xff]
      %v1523 = vld [vmem:[%s1519 + $0x18] sm:$0xff]
      %v1524 = vld [vmem:[%s1519 + $0x20] sm:$0xff]
      %v1525 = vld [vmem:[%s1519 + $0x28] sm:$0xff]
      %v1526 = vld [vmem:[%s1519 + $0x30] sm:$0xff]
      %v1527 = vld [vmem:[%s1519 + $0x38] sm:$0xff]
      %v1528 = vld [vmem:[%s1519 + $0x40] sm:$0xff]
      %v1529 = vld [vmem:[%s1519 + $0x48] sm:$0xff]
      %v1540 = vunpack.c.l.b16 %v1520
      %v1541 = vunpack.c.h.b16 %v1520
      %v1542 = vunpack.c.l.b16 %v1521
      %v1543 = vunpack.c.h.b16 %v1521
      %v1544 = vunpack.c.l.b16 %v1522
      %v1545 = vunpack.c.h.b16 %v1522
      %v1546 = vunpack.c.l.b16 %v1523
      %v1547 = vunpack.c.h.b16 %v1523
      %v1548 = vunpack.c.l.b16 %v1524
      %v1549 = vunpack.c.h.b16 %v1524
      %v1550 = vunpack.c.l.b16 %v1525
      %v1551 = vunpack.c.h.b16 %v1525
      %v1552 = vunpack.c.l.b16 %v1526
      %v1553 = vunpack.c.h.b16 %v1526
      %v1554 = vunpack.c.l.b16 %v1527
      %v1555 = vunpack.c.h.b16 %v1527
      %v1556 = vunpack.c.l.b16 %v1528
      %v1557 = vunpack.c.h.b16 %v1528
      %v1558 = vunpack.c.l.b16 %v1529
      %v1559 = vunpack.c.h.b16 %v1529
      %v1560 = vpack.c.b16 %v1542, %v1540
      %v1561 = vpack.c.b16 %v1543, %v1541
      %v1562 = vpack.c.b16 %v1546, %v1544
      %v1563 = vpack.c.b16 %v1547, %v1545
      %v1564 = vpack.c.b16 %v1550, %v1548
      %v1565 = vpack.c.b16 %v1551, %v1549
      %v1566 = vpack.c.b16 %v1554, %v1552
      %v1567 = vpack.c.b16 %v1555, %v1553
      %v1568 = vpack.c.b16 %v1558, %v1556
      %v1569 = vpack.c.b16 %v1559, %v1557
      %v1576 = vsel %vm1430, %v1561, 0
      %v1579 = vsel %vm1430, %v1563, 0
      %v1582 = vsel %vm1430, %v1565, 0
      %v1585 = vsel %vm1430, %v1567, 0
      %v1588 = vsel %vm1430, %v1569, 0
      %1590 = vmatprep.subr.bf16.mxu0 0
      %1591 = vmatpush1.bf16.msra.mxu0 %v1361
      %1592 = vmatprep.subr.bf16.mxu0 0
      %1593 = vmatpush1.bf16.msra.mxu0 %v1362
      %1594 = vmatprep.subr.bf16.mxu0 0
      %1595 = vmatpush1.bf16.msra.mxu0 %v1363
      %1596 = vmatprep.subr.bf16.mxu0 0
      %1597 = vmatpush1.bf16.msra.mxu0 %v1364
      %1598 = vmatprep.subr.bf16.mxu0 0
      %1599 = vmatpush1.bf16.msra.mxu0 %v1365
      %1600 = vmatprep.subr.bf16.mxu0 0
      %1601 = vmatpush1.bf16.msra.mxu0 %v1366
      %1602 = vmatprep.subr.bf16.mxu0 0
      %1603 = vmatpush1.bf16.msra.mxu0 %v1367
      %1604 = vmatprep.subr.bf16.mxu0 0
      %1605 = vmatpush1.bf16.msra.mxu0 %v1368
      %1606 = vmatprep.subr.bf16.mxu0 0
      %1607 = vmatpush1.bf16.msra.mxu0 %v1369
      %1608 = vmatprep.subr.bf16.mxu0 0
      %1609 = vmatpush1.bf16.msra.mxu0 %v1370
      %1610 = vmatprep.subr.bf16.mxu0 0
      %1611 = vmatpush1.bf16.msra.mxu0 %v1371
      %1612 = vmatprep.subr.bf16.mxu0 0
      %1613 = vmatpush1.bf16.msra.mxu0 %v1372
      %1614 = vmatprep.subr.bf16.mxu0 0
      %1615 = vmatpush1.bf16.msra.mxu0 %v1373
      %1616 = vmatprep.subr.bf16.mxu0 0
      %1617 = vmatpush1.bf16.msra.mxu0 %v1374
      %1618 = vmatprep.subr.bf16.mxu0 0
      %1619 = vmatpush1.bf16.msra.mxu0 0
      %1620 = vmatprep.subr.bf16.mxu0 0
      %1621 = vmatpush1.bf16.msra.mxu0 0
      %1622 = vmatprep.mubr.bf16.mxu0 %v1576
      %1623 = vmatmul.mubr.bf16.gmra.mrb[0].mxu0 %v1560
      %v1624 = vpop.f32.mrb[0].mxu0
      %v1625 = vadd.f32 0.0, %v1624
      %v1626 = vpop.f32.mrb[0].mxu0
      %v1627 = vpop.f32.mrb[0].mxu0
      %v1628 = vadd.f32 0.0, %v1627
      %v1629 = vpop.f32.mrb[0].mxu0
      %1630 = vmatprep.mubr.bf16.mxu0 %v1579
      %1631 = vmatmul.mubr.bf16.gmra.mrb[0].mxu0 %v1562
      %v1632 = vpop.f32.mrb[0].mxu0
      %v1633 = vadd.f32 0.0, %v1632
      %v1634 = vpop.f32.mrb[0].mxu0
      %v1635 = vpop.f32.mrb[0].mxu0
      %v1636 = vadd.f32 0.0, %v1635
      %v1637 = vpop.f32.mrb[0].mxu0
      %1638 = vmatprep.mubr.bf16.mxu0 %v1582
      %1639 = vmatmul.mubr.bf16.gmra.mrb[0].mxu0 %v1564
      %v1640 = vpop.f32.mrb[0].mxu0
      %v1641 = vadd.f32 0.0, %v1640
      %v1642 = vpop.f32.mrb[0].mxu0
      %v1643 = vpop.f32.mrb[0].mxu0
      %v1644 = vadd.f32 0.0, %v1643
      %v1645 = vpop.f32.mrb[0].mxu0
      %1646 = vmatprep.mubr.bf16.mxu0 %v1585
      %1647 = vmatmul.mubr.bf16.gmra.mrb[0].mxu0 %v1566
      %v1648 = vpop.f32.mrb[0].mxu0
      %v1649 = vadd.f32 0.0, %v1648
      %v1650 = vpop.f32.mrb[0].mxu0
      %v1651 = vpop.f32.mrb[0].mxu0
      %v1652 = vadd.f32 0.0, %v1651
      %v1653 = vpop.f32.mrb[0].mxu0
      %1654 = vmatprep.mubr.bf16.mxu0 %v1588
      %1655 = vmatmul.mubr.bf16.gmra.mrb[0].mxu0 %v1568
      %v1656 = vpop.f32.mrb[0].mxu0
      %v1657 = vadd.f32 0.0, %v1656
      %v1658 = vpop.f32.mrb[0].mxu0
      %v1659 = vpop.f32.mrb[0].mxu0
      %v1660 = vadd.f32 0.0, %v1659
      %v1661 = vpop.f32.mrb[0].mxu0
      %1662 = vdwg.mxu0
      %s1663 = scalar_lea.vmem %s4, 160
      %v1664 = vld [vmem:[%s1663] sm:$0xff]
      %v1665 = vld [vmem:[%s1663 + $0x8] sm:$0xff]
      %v1666 = vld [vmem:[%s1663 + $0x10] sm:$0xff]
      %v1667 = vld [vmem:[%s1663 + $0x18] sm:$0xff]
      %v1668 = vld [vmem:[%s1663 + $0x20] sm:$0xff]
      %v1669 = vld [vmem:[%s1663 + $0x28] sm:$0xff]
      %v1670 = vld [vmem:[%s1663 + $0x30] sm:$0xff]
      %v1671 = vld [vmem:[%s1663 + $0x38] sm:$0xff]
      %v1672 = vld [vmem:[%s1663 + $0x40] sm:$0xff]
      %v1673 = vld [vmem:[%s1663 + $0x48] sm:$0xff]
      %v1684 = vunpack.c.l.b16 %v1664
      %v1685 = vunpack.c.h.b16 %v1664
      %v1686 = vunpack.c.l.b16 %v1665
      %v1687 = vunpack.c.h.b16 %v1665
      %v1688 = vunpack.c.l.b16 %v1666
      %v1689 = vunpack.c.h.b16 %v1666
      %v1690 = vunpack.c.l.b16 %v1667
      %v1691 = vunpack.c.h.b16 %v1667
      %v1692 = vunpack.c.l.b16 %v1668
      %v1693 = vunpack.c.h.b16 %v1668
      %v1694 = vunpack.c.l.b16 %v1669
      %v1695 = vunpack.c.h.b16 %v1669
      %v1696 = vunpack.c.l.b16 %v1670
      %v1697 = vunpack.c.h.b16 %v1670
      %v1698 = vunpack.c.l.b16 %v1671
      %v1699 = vunpack.c.h.b16 %v1671
      %v1700 = vunpack.c.l.b16 %v1672
      %v1701 = vunpack.c.h.b16 %v1672
      %v1702 = vunpack.c.l.b16 %v1673
      %v1703 = vunpack.c.h.b16 %v1673
      %v1704 = vpack.c.b16 %v1686, %v1684
      %v1705 = vpack.c.b16 %v1687, %v1685
      %v1706 = vpack.c.b16 %v1690, %v1688
      %v1707 = vpack.c.b16 %v1691, %v1689
      %v1708 = vpack.c.b16 %v1694, %v1692
      %v1709 = vpack.c.b16 %v1695, %v1693
      %v1710 = vpack.c.b16 %v1698, %v1696
      %v1711 = vpack.c.b16 %v1699, %v1697
      %v1712 = vpack.c.b16 %v1702, %v1700
      %v1713 = vpack.c.b16 %v1703, %v1701
      %v1720 = vsel %vm1430, %v1705, 0
      %v1723 = vsel %vm1430, %v1707, 0
      %v1726 = vsel %vm1430, %v1709, 0
      %v1729 = vsel %vm1430, %v1711, 0
      %v1732 = vsel %vm1430, %v1713, 0
      %1734 = vmatprep.subr.bf16.mxu0 0
      %1735 = vmatpush1.bf16.msra.mxu0 %v1361
      %1736 = vmatprep.subr.bf16.mxu0 0
      %1737 = vmatpush1.bf16.msra.mxu0 %v1362
      %1738 = vmatprep.subr.bf16.mxu0 0
      %1739 = vmatpush1.bf16.msra.mxu0 %v1363
      %1740 = vmatprep.subr.bf16.mxu0 0
      %1741 = vmatpush1.bf16.msra.mxu0 %v1364
      %1742 = vmatprep.subr.bf16.mxu0 0
      %1743 = vmatpush1.bf16.msra.mxu0 %v1365
      %1744 = vmatprep.subr.bf16.mxu0 0
      %1745 = vmatpush1.bf16.msra.mxu0 %v1366
      %1746 = vmatprep.subr.bf16.mxu0 0
      %1747 = vmatpush1.bf16.msra.mxu0 %v1367
      %1748 = vmatprep.subr.bf16.mxu0 0
      %1749 = vmatpush1.bf16.msra.mxu0 %v1368
      %1750 = vmatprep.subr.bf16.mxu0 0
      %1751 = vmatpush1.bf16.msra.mxu0 %v1369
      %1752 = vmatprep.subr.bf16.mxu0 0
      %1753 = vmatpush1.bf16.msra.mxu0 %v1370
      %1754 = vmatprep.subr.bf16.mxu0 0
      %1755 = vmatpush1.bf16.msra.mxu0 %v1371
      %1756 = vmatprep.subr.bf16.mxu0 0
      %1757 = vmatpush1.bf16.msra.mxu0 %v1372
      %1758 = vmatprep.subr.bf16.mxu0 0
      %1759 = vmatpush1.bf16.msra.mxu0 %v1373
      %1760 = vmatprep.subr.bf16.mxu0 0
      %1761 = vmatpush1.bf16.msra.mxu0 %v1374
      %1762 = vmatprep.subr.bf16.mxu0 0
      %1763 = vmatpush1.bf16.msra.mxu0 0
      %1764 = vmatprep.subr.bf16.mxu0 0
      %1765 = vmatpush1.bf16.msra.mxu0 0
      %1766 = vmatprep.mubr.bf16.mxu0 %v1720
      %1767 = vmatmul.mubr.bf16.gmra.mrb[0].mxu0 %v1704
      %v1768 = vpop.f32.mrb[0].mxu0
      %v1769 = vadd.f32 0.0, %v1768
      %v1770 = vpop.f32.mrb[0].mxu0
      %v1771 = vpop.f32.mrb[0].mxu0
      %v1772 = vadd.f32 0.0, %v1771
      %v1773 = vpop.f32.mrb[0].mxu0
      %1774 = vmatprep.mubr.bf16.mxu0 %v1723
      %1775 = vmatmul.mubr.bf16.gmra.mrb[0].mxu0 %v1706
      %v1776 = vpop.f32.mrb[0].mxu0
      %v1777 = vadd.f32 0.0, %v1776
      %v1778 = vpop.f32.mrb[0].mxu0
      %v1779 = vpop.f32.mrb[0].mxu0
      %v1780 = vadd.f32 0.0, %v1779
      %v1781 = vpop.f32.mrb[0].mxu0
      %1782 = vmatprep.mubr.bf16.mxu0 %v1726
      %1783 = vmatmul.mubr.bf16.gmra.mrb[0].mxu0 %v1708
      %v1784 = vpop.f32.mrb[0].mxu0
      %v1785 = vadd.f32 0.0, %v1784
      %v1786 = vpop.f32.mrb[0].mxu0
      %v1787 = vpop.f32.mrb[0].mxu0
      %v1788 = vadd.f32 0.0, %v1787
      %v1789 = vpop.f32.mrb[0].mxu0
      %1790 = vmatprep.mubr.bf16.mxu0 %v1729
      %1791 = vmatmul.mubr.bf16.gmra.mrb[0].mxu0 %v1710
      %v1792 = vpop.f32.mrb[0].mxu0
      %v1793 = vadd.f32 0.0, %v1792
      %v1794 = vpop.f32.mrb[0].mxu0
      %v1795 = vpop.f32.mrb[0].mxu0
      %v1796 = vadd.f32 0.0, %v1795
      %v1797 = vpop.f32.mrb[0].mxu0
      %1798 = vmatprep.mubr.bf16.mxu0 %v1732
      %1799 = vmatmul.mubr.bf16.gmra.mrb[0].mxu0 %v1712
      %v1800 = vpop.f32.mrb[0].mxu0
      %v1801 = vadd.f32 0.0, %v1800
      %v1802 = vpop.f32.mrb[0].mxu0
      %v1803 = vpop.f32.mrb[0].mxu0
      %v1804 = vadd.f32 0.0, %v1803
      %v1805 = vpop.f32.mrb[0].mxu0
      %1806 = vdwg.mxu0
      %s1807 = scalar_lea.vmem %s4, 240
      %v1808 = vld [vmem:[%s1807] sm:$0xff]
      %v1809 = vld [vmem:[%s1807 + $0x8] sm:$0xff]
      %v1810 = vld [vmem:[%s1807 + $0x10] sm:$0xff]
      %v1811 = vld [vmem:[%s1807 + $0x18] sm:$0xff]
      %v1812 = vld [vmem:[%s1807 + $0x20] sm:$0xff]
      %v1813 = vld [vmem:[%s1807 + $0x28] sm:$0xff]
      %v1814 = vld [vmem:[%s1807 + $0x30] sm:$0xff]
      %v1815 = vld [vmem:[%s1807 + $0x38] sm:$0xff]
      %v1816 = vld [vmem:[%s1807 + $0x40] sm:$0xff]
      %v1817 = vld [vmem:[%s1807 + $0x48] sm:$0xff]
      %v1828 = vunpack.c.l.b16 %v1808
      %v1829 = vunpack.c.h.b16 %v1808
      %v1830 = vunpack.c.l.b16 %v1809
      %v1831 = vunpack.c.h.b16 %v1809
      %v1832 = vunpack.c.l.b16 %v1810
      %v1833 = vunpack.c.h.b16 %v1810
      %v1834 = vunpack.c.l.b16 %v1811
      %v1835 = vunpack.c.h.b16 %v1811
      %v1836 = vunpack.c.l.b16 %v1812
      %v1837 = vunpack.c.h.b16 %v1812
      %v1838 = vunpack.c.l.b16 %v1813
      %v1839 = vunpack.c.h.b16 %v1813
      %v1840 = vunpack.c.l.b16 %v1814
      %v1841 = vunpack.c.h.b16 %v1814
      %v1842 = vunpack.c.l.b16 %v1815
      %v1843 = vunpack.c.h.b16 %v1815
      %v1844 = vunpack.c.l.b16 %v1816
      %v1845 = vunpack.c.h.b16 %v1816
      %v1846 = vunpack.c.l.b16 %v1817
      %v1847 = vunpack.c.h.b16 %v1817
      %v1848 = vpack.c.b16 %v1830, %v1828
      %v1849 = vpack.c.b16 %v1831, %v1829
      %v1850 = vpack.c.b16 %v1834, %v1832
      %v1851 = vpack.c.b16 %v1835, %v1833
      %v1852 = vpack.c.b16 %v1838, %v1836
      %v1853 = vpack.c.b16 %v1839, %v1837
      %v1854 = vpack.c.b16 %v1842, %v1840
      %v1855 = vpack.c.b16 %v1843, %v1841
      %v1856 = vpack.c.b16 %v1846, %v1844
      %v1857 = vpack.c.b16 %v1847, %v1845
      %v1864 = vsel %vm1430, %v1849, 0
      %v1867 = vsel %vm1430, %v1851, 0
      %v1870 = vsel %vm1430, %v1853, 0
      %v1873 = vsel %vm1430, %v1855, 0
      %v1876 = vsel %vm1430, %v1857, 0
      %1878 = vmatprep.subr.bf16.mxu0 0
      %1879 = vmatpush1.bf16.msra.mxu0 %v1361
      %1880 = vmatprep.subr.bf16.mxu0 0
      %1881 = vmatpush1.bf16.msra.mxu0 %v1362
      %1882 = vmatprep.subr.bf16.mxu0 0
      %1883 = vmatpush1.bf16.msra.mxu0 %v1363
      %1884 = vmatprep.subr.bf16.mxu0 0
      %1885 = vmatpush1.bf16.msra.mxu0 %v1364
      %1886 = vmatprep.subr.bf16.mxu0 0
      %1887 = vmatpush1.bf16.msra.mxu0 %v1365
      %1888 = vmatprep.subr.bf16.mxu0 0
      %1889 = vmatpush1.bf16.msra.mxu0 %v1366
      %1890 = vmatprep.subr.bf16.mxu0 0
      %1891 = vmatpush1.bf16.msra.mxu0 %v1367
      %1892 = vmatprep.subr.bf16.mxu0 0
      %1893 = vmatpush1.bf16.msra.mxu0 %v1368
      %1894 = vmatprep.subr.bf16.mxu0 0
      %1895 = vmatpush1.bf16.msra.mxu0 %v1369
      %1896 = vmatprep.subr.bf16.mxu0 0
      %1897 = vmatpush1.bf16.msra.mxu0 %v1370
      %1898 = vmatprep.subr.bf16.mxu0 0
      %1899 = vmatpush1.bf16.msra.mxu0 %v1371
      %1900 = vmatprep.subr.bf16.mxu0 0
      %1901 = vmatpush1.bf16.msra.mxu0 %v1372
      %1902 = vmatprep.subr.bf16.mxu0 0
      %1903 = vmatpush1.bf16.msra.mxu0 %v1373
      %1904 = vmatprep.subr.bf16.mxu0 0
      %1905 = vmatpush1.bf16.msra.mxu0 %v1374
      %1906 = vmatprep.subr.bf16.mxu0 0
      %1907 = vmatpush1.bf16.msra.mxu0 0
      %1908 = vmatprep.subr.bf16.mxu0 0
      %1909 = vmatpush1.bf16.msra.mxu0 0
      %1910 = vmatprep.mubr.bf16.mxu0 %v1864
      %1911 = vmatmul.mubr.bf16.gmra.mrb[0].mxu0 %v1848
      %v1912 = vpop.f32.mrb[0].mxu0
      %v1913 = vadd.f32 0.0, %v1912
      %v1914 = vpop.f32.mrb[0].mxu0
      %v1915 = vpop.f32.mrb[0].mxu0
      %v1916 = vadd.f32 0.0, %v1915
      %v1917 = vpop.f32.mrb[0].mxu0
      %1918 = vmatprep.mubr.bf16.mxu0 %v1867
      %1919 = vmatmul.mubr.bf16.gmra.mrb[0].mxu0 %v1850
      %v1920 = vpop.f32.mrb[0].mxu0
      %v1921 = vadd.f32 0.0, %v1920
      %v1922 = vpop.f32.mrb[0].mxu0
      %v1923 = vpop.f32.mrb[0].mxu0
      %v1924 = vadd.f32 0.0, %v1923
      %v1925 = vpop.f32.mrb[0].mxu0
      %1926 = vmatprep.mubr.bf16.mxu0 %v1870
      %1927 = vmatmul.mubr.bf16.gmra.mrb[0].mxu0 %v1852
      %v1928 = vpop.f32.mrb[0].mxu0
      %v1929 = vadd.f32 0.0, %v1928
      %v1930 = vpop.f32.mrb[0].mxu0
      %v1931 = vpop.f32.mrb[0].mxu0
      %v1932 = vadd.f32 0.0, %v1931
      %v1933 = vpop.f32.mrb[0].mxu0
      %1934 = vmatprep.mubr.bf16.mxu0 %v1873
      %1935 = vmatmul.mubr.bf16.gmra.mrb[0].mxu0 %v1854
      %v1936 = vpop.f32.mrb[0].mxu0
      %v1937 = vadd.f32 0.0, %v1936
      %v1938 = vpop.f32.mrb[0].mxu0
      %v1939 = vpop.f32.mrb[0].mxu0
      %v1940 = vadd.f32 0.0, %v1939
      %v1941 = vpop.f32.mrb[0].mxu0
      %1942 = vmatprep.mubr.bf16.mxu0 %v1876
      %1943 = vmatmul.mubr.bf16.gmra.mrb[0].mxu0 %v1856
      %v1944 = vpop.f32.mrb[0].mxu0
      %v1945 = vadd.f32 0.0, %v1944
      %v1946 = vpop.f32.mrb[0].mxu0
      %v1947 = vpop.f32.mrb[0].mxu0
      %v1948 = vadd.f32 0.0, %v1947
      %v1949 = vpop.f32.mrb[0].mxu0
      %1950 = vdwg.mxu0
      %s1951 = scalar_lea.vmem %s4, 320
      %v1952 = vld [vmem:[%s1951] sm:$0xff]
      %v1953 = vld [vmem:[%s1951 + $0x8] sm:$0xff]
      %v1954 = vld [vmem:[%s1951 + $0x10] sm:$0xff]
      %v1955 = vld [vmem:[%s1951 + $0x18] sm:$0xff]
      %v1956 = vld [vmem:[%s1951 + $0x20] sm:$0xff]
      %v1957 = vld [vmem:[%s1951 + $0x28] sm:$0xff]
      %v1958 = vld [vmem:[%s1951 + $0x30] sm:$0xff]
      %v1959 = vld [vmem:[%s1951 + $0x38] sm:$0xff]
      %v1960 = vld [vmem:[%s1951 + $0x40] sm:$0xff]
      %v1961 = vld [vmem:[%s1951 + $0x48] sm:$0xff]
      %v1972 = vunpack.c.l.b16 %v1952
      %v1973 = vunpack.c.h.b16 %v1952
      %v1974 = vunpack.c.l.b16 %v1953
      %v1975 = vunpack.c.h.b16 %v1953
      %v1976 = vunpack.c.l.b16 %v1954
      %v1977 = vunpack.c.h.b16 %v1954
      %v1978 = vunpack.c.l.b16 %v1955
      %v1979 = vunpack.c.h.b16 %v1955
      %v1980 = vunpack.c.l.b16 %v1956
      %v1981 = vunpack.c.h.b16 %v1956
      %v1982 = vunpack.c.l.b16 %v1957
      %v1983 = vunpack.c.h.b16 %v1957
      %v1984 = vunpack.c.l.b16 %v1958
      %v1985 = vunpack.c.h.b16 %v1958
      %v1986 = vunpack.c.l.b16 %v1959
      %v1987 = vunpack.c.h.b16 %v1959
      %v1988 = vunpack.c.l.b16 %v1960
      %v1989 = vunpack.c.h.b16 %v1960
      %v1990 = vunpack.c.l.b16 %v1961
      %v1991 = vunpack.c.h.b16 %v1961
      %v1992 = vpack.c.b16 %v1974, %v1972
      %v1993 = vpack.c.b16 %v1975, %v1973
      %v1994 = vpack.c.b16 %v1978, %v1976
      %v1995 = vpack.c.b16 %v1979, %v1977
      %v1996 = vpack.c.b16 %v1982, %v1980
      %v1997 = vpack.c.b16 %v1983, %v1981
      %v1998 = vpack.c.b16 %v1986, %v1984
      %v1999 = vpack.c.b16 %v1987, %v1985
      %v2000 = vpack.c.b16 %v1990, %v1988
      %v2001 = vpack.c.b16 %v1991, %v1989
      %v2008 = vsel %vm1430, %v1993, 0
      %v2011 = vsel %vm1430, %v1995, 0
      %v2014 = vsel %vm1430, %v1997, 0
      %v2017 = vsel %vm1430, %v1999, 0
      %v2020 = vsel %vm1430, %v2001, 0
      %2022 = vmatprep.subr.bf16.mxu0 0
      %2023 = vmatpush1.bf16.msra.mxu0 %v1361
      %2024 = vmatprep.subr.bf16.mxu0 0
      %2025 = vmatpush1.bf16.msra.mxu0 %v1362
      %2026 = vmatprep.subr.bf16.mxu0 0
      %2027 = vmatpush1.bf16.msra.mxu0 %v1363
      %2028 = vmatprep.subr.bf16.mxu0 0
      %2029 = vmatpush1.bf16.msra.mxu0 %v1364
      %2030 = vmatprep.subr.bf16.mxu0 0
      %2031 = vmatpush1.bf16.msra.mxu0 %v1365
      %2032 = vmatprep.subr.bf16.mxu0 0
      %2033 = vmatpush1.bf16.msra.mxu0 %v1366
      %2034 = vmatprep.subr.bf16.mxu0 0
      %2035 = vmatpush1.bf16.msra.mxu0 %v1367
      %2036 = vmatprep.subr.bf16.mxu0 0
      %2037 = vmatpush1.bf16.msra.mxu0 %v1368
      %2038 = vmatprep.subr.bf16.mxu0 0
      %2039 = vmatpush1.bf16.msra.mxu0 %v1369
      %2040 = vmatprep.subr.bf16.mxu0 0
      %2041 = vmatpush1.bf16.msra.mxu0 %v1370
      %2042 = vmatprep.subr.bf16.mxu0 0
      %2043 = vmatpush1.bf16.msra.mxu0 %v1371
      %2044 = vmatprep.subr.bf16.mxu0 0
      %2045 = vmatpush1.bf16.msra.mxu0 %v1372
      %2046 = vmatprep.subr.bf16.mxu0 0
      %2047 = vmatpush1.bf16.msra.mxu0 %v1373
      %2048 = vmatprep.subr.bf16.mxu0 0
      %2049 = vmatpush1.bf16.msra.mxu0 %v1374
      %2050 = vmatprep.subr.bf16.mxu0 0
      %2051 = vmatpush1.bf16.msra.mxu0 0
      %2052 = vmatprep.subr.bf16.mxu0 0
      %2053 = vmatpush1.bf16.msra.mxu0 0
      %2054 = vmatprep.mubr.bf16.mxu0 %v2008
      %2055 = vmatmul.mubr.bf16.gmra.mrb[0].mxu0 %v1992
      %v2056 = vpop.f32.mrb[0].mxu0
      %v2057 = vadd.f32 0.0, %v2056
      %v2058 = vpop.f32.mrb[0].mxu0
      %v2059 = vpop.f32.mrb[0].mxu0
      %v2060 = vadd.f32 0.0, %v2059
      %v2061 = vpop.f32.mrb[0].mxu0
      %2062 = vmatprep.mubr.bf16.mxu0 %v2011
      %2063 = vmatmul.mubr.bf16.gmra.mrb[0].mxu0 %v1994
      %v2064 = vpop.f32.mrb[0].mxu0
      %v2065 = vadd.f32 0.0, %v2064
      %v2066 = vpop.f32.mrb[0].mxu0
      %v2067 = vpop.f32.mrb[0].mxu0
      %v2068 = vadd.f32 0.0, %v2067
      %v2069 = vpop.f32.mrb[0].mxu0
      %2070 = vmatprep.mubr.bf16.mxu0 %v2014
      %2071 = vmatmul.mubr.bf16.gmra.mrb[0].mxu0 %v1996
      %v2072 = vpop.f32.mrb[0].mxu0
      %v2073 = vadd.f32 0.0, %v2072
      %v2074 = vpop.f32.mrb[0].mxu0
      %v2075 = vpop.f32.mrb[0].mxu0
      %v2076 = vadd.f32 0.0, %v2075
      %v2077 = vpop.f32.mrb[0].mxu0
      %2078 = vmatprep.mubr.bf16.mxu0 %v2017
      %2079 = vmatmul.mubr.bf16.gmra.mrb[0].mxu0 %v1998
      %v2080 = vpop.f32.mrb[0].mxu0
      %v2081 = vadd.f32 0.0, %v2080
      %v2082 = vpop.f32.mrb[0].mxu0
      %v2083 = vpop.f32.mrb[0].mxu0
      %v2084 = vadd.f32 0.0, %v2083
      %v2085 = vpop.f32.mrb[0].mxu0
      %2086 = vmatprep.mubr.bf16.mxu0 %v2020
      %2087 = vmatmul.mubr.bf16.gmra.mrb[0].mxu0 %v2000
      %v2088 = vpop.f32.mrb[0].mxu0
      %v2089 = vadd.f32 0.0, %v2088
      %v2090 = vpop.f32.mrb[0].mxu0
      %v2091 = vpop.f32.mrb[0].mxu0
      %v2092 = vadd.f32 0.0, %v2091
      %v2093 = vpop.f32.mrb[0].mxu0
      %2094 = vdwg.mxu0
      %2105 = vrot.lane.b32.xlu0 %v1625, 84
      %v2106 = vpop.permute.xlu0 %2105
      %2107 = vrot.lane.b32.xlu0 %v1628, 84
      %v2108 = vpop.permute.xlu0 %2107
      %2109 = vrot.lane.b32.xlu0 %v1633, 84
      %v2110 = vpop.permute.xlu0 %2109
      %2111 = vrot.lane.b32.xlu0 %v1636, 84
      %v2112 = vpop.permute.xlu0 %2111
      %2113 = vrot.lane.b32.xlu0 %v1641, 84
      %v2114 = vpop.permute.xlu0 %2113
      %2115 = vrot.lane.b32.xlu0 %v1644, 84
      %v2116 = vpop.permute.xlu0 %2115
      %2117 = vrot.lane.b32.xlu0 %v1649, 84
      %v2118 = vpop.permute.xlu0 %2117
      %2119 = vrot.lane.b32.xlu0 %v1652, 84
      %v2120 = vpop.permute.xlu0 %2119
      %2121 = vrot.lane.b32.xlu0 %v1657, 84
      %v2122 = vpop.permute.xlu0 %2121
      %2123 = vrot.lane.b32.xlu0 %v1660, 84
      %v2124 = vpop.permute.xlu0 %2123
      %2145 = vrot.lane.b32.xlu0 %v1769, 40
      %v2146 = vpop.permute.xlu0 %2145
      %2147 = vrot.lane.b32.xlu0 %v1772, 40
      %v2148 = vpop.permute.xlu0 %2147
      %2149 = vrot.lane.b32.xlu0 %v1777, 40
      %v2150 = vpop.permute.xlu0 %2149
      %2151 = vrot.lane.b32.xlu0 %v1780, 40
      %v2152 = vpop.permute.xlu0 %2151
      %2153 = vrot.lane.b32.xlu0 %v1785, 40
      %v2154 = vpop.permute.xlu0 %2153
      %2155 = vrot.lane.b32.xlu0 %v1788, 40
      %v2156 = vpop.permute.xlu0 %2155
      %2157 = vrot.lane.b32.xlu0 %v1793, 40
      %v2158 = vpop.permute.xlu0 %2157
      %2159 = vrot.lane.b32.xlu0 %v1796, 40
      %v2160 = vpop.permute.xlu0 %2159
      %2161 = vrot.lane.b32.xlu0 %v1801, 40
      %v2162 = vpop.permute.xlu0 %2161
      %2163 = vrot.lane.b32.xlu0 %v1804, 40
      %v2164 = vpop.permute.xlu0 %2163
      %2185 = vrot.lane.b32.xlu0 %v1913, 124
      %v2186 = vpop.permute.xlu0 %2185
      %2187 = vrot.lane.b32.xlu0 %v1916, 124
      %v2188 = vpop.permute.xlu0 %2187
      %2189 = vrot.lane.b32.xlu0 %v1921, 124
      %v2190 = vpop.permute.xlu0 %2189
      %2191 = vrot.lane.b32.xlu0 %v1924, 124
      %v2192 = vpop.permute.xlu0 %2191
      %2193 = vrot.lane.b32.xlu0 %v1929, 124
      %v2194 = vpop.permute.xlu0 %2193
      %2195 = vrot.lane.b32.xlu0 %v1932, 124
      %v2196 = vpop.permute.xlu0 %2195
      %2197 = vrot.lane.b32.xlu0 %v1937, 124
      %v2198 = vpop.permute.xlu0 %2197
      %2199 = vrot.lane.b32.xlu0 %v1940, 124
      %v2200 = vpop.permute.xlu0 %2199
      %2201 = vrot.lane.b32.xlu0 %v1945, 124
      %v2202 = vpop.permute.xlu0 %2201
      %2203 = vrot.lane.b32.xlu0 %v1948, 124
      %v2204 = vpop.permute.xlu0 %2203
      %2225 = vrot.lane.b32.xlu0 %v2057, 80
      %v2226 = vpop.permute.xlu0 %2225
      %2227 = vrot.lane.b32.xlu0 %v2060, 80
      %v2228 = vpop.permute.xlu0 %2227
      %2229 = vrot.lane.b32.xlu0 %v2065, 80
      %v2230 = vpop.permute.xlu0 %2229
      %2231 = vrot.lane.b32.xlu0 %v2068, 80
      %v2232 = vpop.permute.xlu0 %2231
      %2233 = vrot.lane.b32.xlu0 %v2073, 80
      %v2234 = vpop.permute.xlu0 %2233
      %2235 = vrot.lane.b32.xlu0 %v2076, 80
      %v2236 = vpop.permute.xlu0 %2235
      %2237 = vrot.lane.b32.xlu0 %v2081, 80
      %v2238 = vpop.permute.xlu0 %2237
      %2239 = vrot.lane.b32.xlu0 %v2084, 80
      %v2240 = vpop.permute.xlu0 %2239
      %2241 = vrot.lane.b32.xlu0 %v2089, 80
      %v2242 = vpop.permute.xlu0 %2241
      %2243 = vrot.lane.b32.xlu0 %v2092, 80
      %v2244 = vpop.permute.xlu0 %2243
      %vm2255 = vcmask 687104
      %v2256 = vsel %vm2255, %v1481, %v2106
      %v2257 = vsel %vm2255, %v1484, %v2108
      %v2258 = vsel %vm2255, %v1489, %v2110
      %v2259 = vsel %vm2255, %v1492, %v2112
      %v2260 = vsel %vm2255, %v1497, %v2114
      %v2261 = vsel %vm2255, %v1500, %v2116
      %v2262 = vsel %vm2255, %v1505, %v2118
      %v2263 = vsel %vm2255, %v1508, %v2120
      %v2264 = vsel %vm2255, %v1513, %v2122
      %v2265 = vsel %vm2255, %v1516, %v2124
      %v2266 = vsel %vm1169, %v2106, %v2146
      %v2267 = vsel %vm1169, %v2108, %v2148
      %v2268 = vsel %vm1169, %v2110, %v2150
      %v2269 = vsel %vm1169, %v2112, %v2152
      %v2270 = vsel %vm1169, %v2114, %v2154
      %v2271 = vsel %vm1169, %v2116, %v2156
      %v2272 = vsel %vm1169, %v2118, %v2158
      %v2273 = vsel %vm1169, %v2120, %v2160
      %v2274 = vsel %vm1169, %v2122, %v2162
      %v2275 = vsel %vm1169, %v2124, %v2164
      %vm2276 = vcmask 1014784
      %v2277 = vsel %vm2276, %v2266, %v2186
      %v2278 = vsel %vm2276, %v2267, %v2188
      %v2279 = vsel %vm2276, %v2268, %v2190
      %v2280 = vsel %vm2276, %v2269, %v2192
      %v2281 = vsel %vm2276, %v2270, %v2194
      %v2282 = vsel %vm2276, %v2271, %v2196
      %v2283 = vsel %vm2276, %v2272, %v2198
      %v2284 = vsel %vm2276, %v2273, %v2200
      %v2285 = vsel %vm2276, %v2274, %v2202
      %v2286 = vsel %vm2276, %v2275, %v2204
      %vm2287 = vcmask 654336
      %v2288 = vsel %vm2287, %v2186, %v2226
      %v2289 = vsel %vm2287, %v2188, %v2228
      %v2290 = vsel %vm2287, %v2190, %v2230
      %v2291 = vsel %vm2287, %v2192, %v2232
      %v2292 = vsel %vm2287, %v2194, %v2234
      %v2293 = vsel %vm2287, %v2196, %v2236
      %v2294 = vsel %vm2287, %v2198, %v2238
      %v2295 = vsel %vm2287, %v2200, %v2240
      %v2296 = vsel %vm2287, %v2202, %v2242
      %v2297 = vsel %vm2287, %v2204, %v2244
      %v2298 = vpack.c.bf16 %v2257, %v2256
      %v2299 = vpack.c.bf16 %v2278, %v2277
      %v2300 = vpack.c.bf16 %v2289, %v2288
      %v2301 = vpack.c.bf16 %v2228, %v2226
      %v2302 = vpack.c.bf16 %v2259, %v2258
      %v2303 = vpack.c.bf16 %v2280, %v2279
      %v2304 = vpack.c.bf16 %v2291, %v2290
      %v2305 = vpack.c.bf16 %v2232, %v2230
      %v2306 = vpack.c.bf16 %v2261, %v2260
      %v2307 = vpack.c.bf16 %v2282, %v2281
      %v2308 = vpack.c.bf16 %v2293, %v2292
      %v2309 = vpack.c.bf16 %v2236, %v2234
      %v2310 = vpack.c.bf16 %v2263, %v2262
      %v2311 = vpack.c.bf16 %v2284, %v2283
      %v2312 = vpack.c.bf16 %v2295, %v2294
      %v2313 = vpack.c.bf16 %v2240, %v2238
      %v2314 = vpack.c.bf16 %v2265, %v2264
      %v2315 = vpack.c.bf16 %v2286, %v2285
      %v2316 = vpack.c.bf16 %v2297, %v2296
      %v2317 = vpack.c.bf16 %v2244, %v2242
      %v2318 = vld [vmem:[%s5] sm:$0xff]
      %v2319 = vld [vmem:[%s5 + $0x8] sm:$0xff]
      %v2320 = vld [vmem:[%s5 + $0x10] sm:$0xff]
      %v2321 = vld [vmem:[%s5 + $0x18] sm:$0xff]
      %v2322 = vld [vmem:[%s5 + $0x20] sm:$0xff]
      %v2323 = vld [vmem:[%s5 + $0x28] sm:$0xff]
      %v2324 = vld [vmem:[%s5 + $0x30] sm:$0xff]
      %v2325 = vld [vmem:[%s5 + $0x38] sm:$0xff]
      %v2326 = vld [vmem:[%s5 + $0x40] sm:$0xff]
      %v2327 = vld [vmem:[%s5 + $0x48] sm:$0xff]
      %v2328 = vld [vmem:[%s5 + $0x50] sm:$0xff]
      %v2329 = vld [vmem:[%s5 + $0x58] sm:$0xff]
      %v2330 = vld [vmem:[%s5 + $0x60] sm:$0xff]
      %v2331 = vld [vmem:[%s5 + $0x68] sm:$0xff]
      %v2332 = vld [vmem:[%s5 + $0x70] sm:$0xff]
      %v2333 = vld [vmem:[%s5 + $0x78] sm:$0xff]
      %v2334 = vld [vmem:[%s5 + $0x80] sm:$0xff]
      %v2335 = vld [vmem:[%s5 + $0x88] sm:$0xff]
      %v2336 = vld [vmem:[%s5 + $0x90] sm:$0xff]
      %v2337 = vld [vmem:[%s5 + $0x98] sm:$0xff]
      %v2338 = vld [vmem:[%s5 + $0xa0] sm:$0xff]
      %v2339 = vld [vmem:[%s5 + $0xa8] sm:$0xff]
      %v2340 = vld [vmem:[%s5 + $0xb0] sm:$0xff]
      %v2341 = vld [vmem:[%s5 + $0xb8] sm:$0xff]
      %v2342 = vld [vmem:[%s5 + $0xc0] sm:$0xff]
      %v2343 = vld [vmem:[%s5 + $0xc8] sm:$0xff]
      %v2344 = vld [vmem:[%s5 + $0xd0] sm:$0xff]
      %v2345 = vld [vmem:[%s5 + $0xd8] sm:$0xff]
      %v2346 = vld [vmem:[%s5 + $0xe0] sm:$0xff]
      %v2347 = vld [vmem:[%s5 + $0xe8] sm:$0xff]
      %v2348 = vld [vmem:[%s5 + $0xf0] sm:$0xff]
      %v2349 = vld [vmem:[%s5 + $0xf8] sm:$0xff]
      %v2350 = vld [vmem:[%s5 + $0x100] sm:$0xff]
      %v2351 = vld [vmem:[%s5 + $0x108] sm:$0xff]
      %v2352 = vld [vmem:[%s5 + $0x110] sm:$0xff]
      %v2353 = vld [vmem:[%s5 + $0x118] sm:$0xff]
      %v2354 = vld [vmem:[%s5 + $0x120] sm:$0xff]
      %v2355 = vld [vmem:[%s5 + $0x128] sm:$0xff]
      %v2356 = vld [vmem:[%s5 + $0x130] sm:$0xff]
      %v2357 = vld [vmem:[%s5 + $0x138] sm:$0xff]
      %v2358 = vld [vmem:[%s5 + $0x140] sm:$0xff]
      %v2359 = vld [vmem:[%s5 + $0x148] sm:$0xff]
      %v2360 = vld [vmem:[%s5 + $0x150] sm:$0xff]
      %v2361 = vld [vmem:[%s5 + $0x158] sm:$0xff]
      %v2362 = vld [vmem:[%s5 + $0x160] sm:$0xff]
      %v2363 = vld [vmem:[%s5 + $0x168] sm:$0xff]
      %v2364 = vld [vmem:[%s5 + $0x170] sm:$0xff]
      %v2365 = vld [vmem:[%s5 + $0x178] sm:$0xff]
      %v2366 = vld [vmem:[%s5 + $0x180] sm:$0xff]
      %v2367 = vld [vmem:[%s5 + $0x188] sm:$0xff]
      %v2368 = vld [vmem:[%s5 + $0x190] sm:$0xff]
      %v2369 = vld [vmem:[%s5 + $0x198] sm:$0xff]
      %v2370 = vld [vmem:[%s5 + $0x1a0] sm:$0x33]
      %v2371 = vld [vmem:[%s6] sm:$0x3]
      %v2373 = vlaneseq
      %v2374 = vshrl.u32 %v2373, 7
      %v2375 = vsub.s32 0, %v2374
      %v2376 = vrot.slane %v2371, %v2375
      %v2377 = vlaneseq
      %v2378 = vshrl.u32 %v2377, 7
      %v2379 = vsub.s32 1, %v2378
      %v2380 = vrot.slane %v2371, %v2379
      %v2436 = vunpack.c.l.b16 %v2318
      %v2437 = vunpack.c.h.b16 %v2318
      %v2438 = vunpack.c.l.b16 %v2319
      %v2439 = vunpack.c.h.b16 %v2319
      %v2440 = vunpack.c.l.b16 %v2320
      %v2441 = vunpack.c.h.b16 %v2320
      %v2442 = vunpack.c.l.b16 %v2321
      %v2443 = vunpack.c.h.b16 %v2321
      %v2444 = vunpack.c.l.b16 %v2322
      %v2445 = vunpack.c.h.b16 %v2322
      %v2446 = vunpack.c.l.b16 %v2323
      %v2447 = vunpack.c.h.b16 %v2323
      %v2448 = vunpack.c.l.b16 %v2324
      %v2449 = vunpack.c.h.b16 %v2324
      %v2450 = vunpack.c.l.b16 %v2325
      %v2451 = vunpack.c.h.b16 %v2325
      %v2452 = vunpack.c.l.b16 %v2326
      %v2453 = vunpack.c.h.b16 %v2326
      %v2454 = vunpack.c.l.b16 %v2327
      %v2455 = vunpack.c.h.b16 %v2327
      %v2456 = vunpack.c.l.b16 %v2328
      %v2457 = vunpack.c.h.b16 %v2328
      %v2458 = vunpack.c.l.b16 %v2329
      %v2459 = vunpack.c.h.b16 %v2329
      %v2460 = vunpack.c.l.b16 %v2330
      %v2461 = vunpack.c.h.b16 %v2330
      %v2462 = vunpack.c.l.b16 %v2331
      %v2463 = vunpack.c.h.b16 %v2331
      %v2464 = vunpack.c.l.b16 %v2332
      %v2465 = vunpack.c.h.b16 %v2332
      %v2466 = vunpack.c.l.b16 %v2333
      %v2467 = vunpack.c.h.b16 %v2333
      %v2468 = vunpack.c.l.b16 %v2334
      %v2469 = vunpack.c.h.b16 %v2334
      %v2470 = vunpack.c.l.b16 %v2335
      %v2471 = vunpack.c.h.b16 %v2335
      %v2472 = vunpack.c.l.b16 %v2336
      %v2473 = vunpack.c.h.b16 %v2336
      %v2474 = vunpack.c.l.b16 %v2337
      %v2475 = vunpack.c.h.b16 %v2337
      %v2476 = vunpack.c.l.b16 %v2338
      %v2477 = vunpack.c.h.b16 %v2338
      %v2478 = vunpack.c.l.b16 %v2339
      %v2479 = vunpack.c.h.b16 %v2339
      %v2480 = vunpack.c.l.b16 %v2340
      %v2481 = vunpack.c.h.b16 %v2340
      %v2482 = vunpack.c.l.b16 %v2341
      %v2483 = vunpack.c.h.b16 %v2341
      %v2484 = vunpack.c.l.b16 %v2342
      %v2485 = vunpack.c.h.b16 %v2342
      %v2486 = vunpack.c.l.b16 %v2343
      %v2487 = vunpack.c.h.b16 %v2343
      %v2488 = vunpack.c.l.b16 %v2344
      %v2489 = vunpack.c.h.b16 %v2344
      %v2490 = vunpack.c.l.b16 %v2345
      %v2491 = vunpack.c.h.b16 %v2345
      %v2492 = vunpack.c.l.b16 %v2346
      %v2493 = vunpack.c.h.b16 %v2346
      %v2494 = vunpack.c.l.b16 %v2347
      %v2495 = vunpack.c.h.b16 %v2347
      %v2496 = vunpack.c.l.b16 %v2348
      %v2497 = vunpack.c.h.b16 %v2348
      %v2498 = vunpack.c.l.b16 %v2349
      %v2499 = vunpack.c.h.b16 %v2349
      %v2500 = vunpack.c.l.b16 %v2350
      %v2501 = vunpack.c.h.b16 %v2350
      %v2502 = vunpack.c.l.b16 %v2351
      %v2503 = vunpack.c.h.b16 %v2351
      %v2504 = vunpack.c.l.b16 %v2352
      %v2505 = vunpack.c.h.b16 %v2352
      %v2506 = vunpack.c.l.b16 %v2353
      %v2507 = vunpack.c.h.b16 %v2353
      %v2508 = vunpack.c.l.b16 %v2354
      %v2509 = vunpack.c.h.b16 %v2354
      %v2510 = vunpack.c.l.b16 %v2355
      %v2511 = vunpack.c.h.b16 %v2355
      %v2512 = vunpack.c.l.b16 %v2356
      %v2513 = vunpack.c.h.b16 %v2356
      %v2514 = vunpack.c.l.b16 %v2357
      %v2515 = vunpack.c.h.b16 %v2357
      %v2516 = vunpack.c.l.b16 %v2358
      %v2517 = vunpack.c.h.b16 %v2358
      %v2518 = vunpack.c.l.b16 %v2359
      %v2519 = vunpack.c.h.b16 %v2359
      %v2520 = vunpack.c.l.b16 %v2360
      %v2521 = vunpack.c.h.b16 %v2360
      %v2522 = vunpack.c.l.b16 %v2361
      %v2523 = vunpack.c.h.b16 %v2361
      %v2524 = vunpack.c.l.b16 %v2362
      %v2525 = vunpack.c.h.b16 %v2362
      %v2526 = vunpack.c.l.b16 %v2363
      %v2527 = vunpack.c.h.b16 %v2363
      %v2528 = vunpack.c.l.b16 %v2364
      %v2529 = vunpack.c.h.b16 %v2364
      %v2530 = vunpack.c.l.b16 %v2365
      %v2531 = vunpack.c.h.b16 %v2365
      %v2532 = vunpack.c.l.b16 %v2366
      %v2533 = vunpack.c.h.b16 %v2366
      %v2534 = vunpack.c.l.b16 %v2367
      %v2535 = vunpack.c.h.b16 %v2367
      %v2536 = vunpack.c.l.b16 %v2368
      %v2537 = vunpack.c.h.b16 %v2368
      %v2538 = vunpack.c.l.b16 %v2369
      %v2539 = vunpack.c.h.b16 %v2369
      %v2540 = vunpack.c.l.b16 %v2370
      %v2541 = vunpack.c.h.b16 %v2370
      %v2542 = vpack.c.b16 %v2438, %v2436
      %v2543 = vpack.c.b16 %v2439, %v2437
      %v2544 = vpack.c.b16 %v2442, %v2440
      %v2545 = vpack.c.b16 %v2443, %v2441
      %v2546 = vpack.c.b16 %v2446, %v2444
      %v2547 = vpack.c.b16 %v2447, %v2445
      %v2548 = vpack.c.b16 %v2450, %v2448
      %v2549 = vpack.c.b16 %v2451, %v2449
      %v2550 = vpack.c.b16 %v2454, %v2452
      %v2551 = vpack.c.b16 %v2455, %v2453
      %v2552 = vpack.c.b16 %v2458, %v2456
      %v2553 = vpack.c.b16 %v2459, %v2457
      %v2554 = vpack.c.b16 %v2462, %v2460
      %v2555 = vpack.c.b16 %v2463, %v2461
      %v2556 = vpack.c.b16 %v2466, %v2464
      %v2557 = vpack.c.b16 %v2467, %v2465
      %v2558 = vpack.c.b16 %v2470, %v2468
      %v2559 = vpack.c.b16 %v2471, %v2469
      %v2560 = vpack.c.b16 %v2474, %v2472
      %v2561 = vpack.c.b16 %v2475, %v2473
      %v2562 = vpack.c.b16 %v2478, %v2476
      %v2563 = vpack.c.b16 %v2479, %v2477
      %v2564 = vpack.c.b16 %v2482, %v2480
      %v2565 = vpack.c.b16 %v2483, %v2481
      %v2566 = vpack.c.b16 %v2486, %v2484
      %v2567 = vpack.c.b16 %v2487, %v2485
      %v2568 = vpack.c.b16 %v2490, %v2488
      %v2569 = vpack.c.b16 %v2491, %v2489
      %v2570 = vpack.c.b16 %v2494, %v2492
      %v2571 = vpack.c.b16 %v2495, %v2493
      %v2572 = vpack.c.b16 %v2498, %v2496
      %v2573 = vpack.c.b16 %v2499, %v2497
      %v2574 = vpack.c.b16 %v2502, %v2500
      %v2575 = vpack.c.b16 %v2503, %v2501
      %v2576 = vpack.c.b16 %v2506, %v2504
      %v2577 = vpack.c.b16 %v2507, %v2505
      %v2578 = vpack.c.b16 %v2510, %v2508
      %v2579 = vpack.c.b16 %v2511, %v2509
      %v2580 = vpack.c.b16 %v2514, %v2512
      %v2581 = vpack.c.b16 %v2515, %v2513
      %v2582 = vpack.c.b16 %v2518, %v2516
      %v2583 = vpack.c.b16 %v2519, %v2517
      %v2584 = vpack.c.b16 %v2522, %v2520
      %v2585 = vpack.c.b16 %v2523, %v2521
      %v2586 = vpack.c.b16 %v2526, %v2524
      %v2587 = vpack.c.b16 %v2527, %v2525
      %v2588 = vpack.c.b16 %v2530, %v2528
      %v2589 = vpack.c.b16 %v2531, %v2529
      %v2590 = vpack.c.b16 %v2534, %v2532
      %v2591 = vpack.c.b16 %v2535, %v2533
      %v2592 = vpack.c.b16 %v2538, %v2536
      %v2593 = vpack.c.b16 %v2539, %v2537
      %v2594 = vpack.c.b16 %v2540, %v2540
      %v2595 = vpack.c.b16 %v2541, %v2541
      %vm2648 = vcmask 293888
      %v2650 = vsel %vm2648, %v2301, 0
      %v2653 = vsel %vm2648, %v2305, 0
      %v2656 = vsel %vm2648, %v2309, 0
      %v2659 = vsel %vm2648, %v2313, 0
      %v2662 = vsel %vm2648, %v2317, 0
      %vm2664 = vcmask 1041408
      %v2666 = vsel %vm2664, %v2594, 0
      %v2669 = vsel %vm2664, %v2595, 0
      %2671 = vmatprep.subr.bf16.mxu0 %v2543
      %2672 = vmatpush1.bf16.msra.mxu0 %v2542
      %2673 = vmatprep.subr.bf16.mxu0 %v2545
      %2674 = vmatpush1.bf16.msra.mxu0 %v2544
      %2675 = vmatprep.subr.bf16.mxu0 %v2547
      %2676 = vmatpush1.bf16.msra.mxu0 %v2546
      %2677 = vmatprep.subr.bf16.mxu0 %v2549
      %2678 = vmatpush1.bf16.msra.mxu0 %v2548
      %2679 = vmatprep.subr.bf16.mxu0 %v2551
      %2680 = vmatpush1.bf16.msra.mxu0 %v2550
      %2681 = vmatprep.subr.bf16.mxu0 %v2553
      %2682 = vmatpush1.bf16.msra.mxu0 %v2552
      %2683 = vmatprep.subr.bf16.mxu0 %v2555
      %2684 = vmatpush1.bf16.msra.mxu0 %v2554
      %2685 = vmatprep.subr.bf16.mxu0 %v2557
      %2686 = vmatpush1.bf16.msra.mxu0 %v2556
      %2687 = vmatprep.subr.bf16.mxu0 %v2559
      %2688 = vmatpush1.bf16.msra.mxu0 %v2558
      %2689 = vmatprep.subr.bf16.mxu0 %v2561
      %2690 = vmatpush1.bf16.msra.mxu0 %v2560
      %2691 = vmatprep.subr.bf16.mxu0 %v2563
      %2692 = vmatpush1.bf16.msra.mxu0 %v2562
      %2693 = vmatprep.subr.bf16.mxu0 %v2565
      %2694 = vmatpush1.bf16.msra.mxu0 %v2564
      %2695 = vmatprep.subr.bf16.mxu0 %v2567
      %2696 = vmatpush1.bf16.msra.mxu0 %v2566
      %2697 = vmatprep.subr.bf16.mxu0 %v2569
      %2698 = vmatpush1.bf16.msra.mxu0 %v2568
      %2699 = vmatprep.subr.bf16.mxu0 %v2571
      %2700 = vmatpush1.bf16.msra.mxu0 %v2570
      %2701 = vmatprep.subr.bf16.mxu0 %v2573
      %2702 = vmatpush1.bf16.msra.mxu0 %v2572
      %2703 = vmatprep.mubr.bf16.mxu0 %v2299
      %2704 = vmatmul.mubr.bf16.gmra.mrb[0].mxu0 %v2298
      %v2705 = vpop.f32.mrb[0].mxu0
      %v2706 = vadd.f32 %v2376, %v2705
      %v2707 = vpop.f32.mrb[0].mxu0
      %v2708 = vadd.f32 %v2380, %v2707
      %v2709 = vpop.f32.mrb[0].mxu0
      %v2710 = vadd.f32 %v2376, %v2709
      %v2711 = vpop.f32.mrb[0].mxu0
      %v2712 = vadd.f32 %v2380, %v2711
      %2713 = vmatprep.mubr.bf16.mxu0 %v2303
      %2714 = vmatmul.mubr.bf16.gmra.mrb[0].mxu0 %v2302
      %v2715 = vpop.f32.mrb[0].mxu0
      %v2716 = vadd.f32 %v2376, %v2715
      %v2717 = vpop.f32.mrb[0].mxu0
      %v2718 = vadd.f32 %v2380, %v2717
      %v2719 = vpop.f32.mrb[0].mxu0
      %v2720 = vadd.f32 %v2376, %v2719
      %v2721 = vpop.f32.mrb[0].mxu0
      %v2722 = vadd.f32 %v2380, %v2721
      %2723 = vmatprep.mubr.bf16.mxu0 %v2307
      %2724 = vmatmul.mubr.bf16.gmra.mrb[0].mxu0 %v2306
      %v2725 = vpop.f32.mrb[0].mxu0
      %v2726 = vadd.f32 %v2376, %v2725
      %v2727 = vpop.f32.mrb[0].mxu0
      %v2728 = vadd.f32 %v2380, %v2727
      %v2729 = vpop.f32.mrb[0].mxu0
      %v2730 = vadd.f32 %v2376, %v2729
      %v2731 = vpop.f32.mrb[0].mxu0
      %v2732 = vadd.f32 %v2380, %v2731
      %2733 = vmatprep.mubr.bf16.mxu0 %v2311
      %2734 = vmatmul.mubr.bf16.gmra.mrb[0].mxu0 %v2310
      %v2735 = vpop.f32.mrb[0].mxu0
      %v2736 = vadd.f32 %v2376, %v2735
      %v2737 = vpop.f32.mrb[0].mxu0
      %v2738 = vadd.f32 %v2380, %v2737
      %v2739 = vpop.f32.mrb[0].mxu0
      %v2740 = vadd.f32 %v2376, %v2739
      %v2741 = vpop.f32.mrb[0].mxu0
      %v2742 = vadd.f32 %v2380, %v2741
      %2743 = vmatprep.mubr.bf16.mxu0 %v2315
      %2744 = vmatmul.mubr.bf16.gmra.mrb[0].mxu0 %v2314
      %v2745 = vpop.f32.mrb[0].mxu0
      %v2746 = vadd.f32 %v2376, %v2745
      %v2747 = vpop.f32.mrb[0].mxu0
      %v2748 = vadd.f32 %v2380, %v2747
      %v2749 = vpop.f32.mrb[0].mxu0
      %v2750 = vadd.f32 %v2376, %v2749
      %v2751 = vpop.f32.mrb[0].mxu0
      %v2752 = vadd.f32 %v2380, %v2751
      %2753 = vdwg.mxu0
      %2754 = vmatprep.subr.bf16.mxu0 %v2575
      %2755 = vmatpush1.bf16.msra.mxu0 %v2574
      %2756 = vmatprep.subr.bf16.mxu0 %v2577
      %2757 = vmatpush1.bf16.msra.mxu0 %v2576
      %2758 = vmatprep.subr.bf16.mxu0 %v2579
      %2759 = vmatpush1.bf16.msra.mxu0 %v2578
      %2760 = vmatprep.subr.bf16.mxu0 %v2581
      %2761 = vmatpush1.bf16.msra.mxu0 %v2580
      %2762 = vmatprep.subr.bf16.mxu0 %v2583
      %2763 = vmatpush1.bf16.msra.mxu0 %v2582
      %2764 = vmatprep.subr.bf16.mxu0 %v2585
      %2765 = vmatpush1.bf16.msra.mxu0 %v2584
      %2766 = vmatprep.subr.bf16.mxu0 %v2587
      %2767 = vmatpush1.bf16.msra.mxu0 %v2586
      %2768 = vmatprep.subr.bf16.mxu0 %v2589
      %2769 = vmatpush1.bf16.msra.mxu0 %v2588
      %2770 = vmatprep.subr.bf16.mxu0 %v2591
      %2771 = vmatpush1.bf16.msra.mxu0 %v2590
      %2772 = vmatprep.subr.bf16.mxu0 %v2593
      %2773 = vmatpush1.bf16.msra.mxu0 %v2592
      %2774 = vmatprep.subr.bf16.mxu0 %v2669
      %2775 = vmatpush1.bf16.msra.mxu0 %v2666
      %2776 = vmatprep.subr.bf16.mxu0 0
      %2777 = vmatpush1.bf16.msra.mxu0 0
      %2778 = vmatprep.subr.bf16.mxu0 0
      %2779 = vmatpush1.bf16.msra.mxu0 0
      %2780 = vmatprep.subr.bf16.mxu0 0
      %2781 = vmatpush1.bf16.msra.mxu0 0
      %2782 = vmatprep.subr.bf16.mxu0 0
      %2783 = vmatpush1.bf16.msra.mxu0 0
      %2784 = vmatprep.subr.bf16.mxu0 0
      %2785 = vmatpush1.bf16.msra.mxu0 0
      %2786 = vmatprep.mubr.bf16.mxu0 %v2650
      %2787 = vmatmul.mubr.bf16.gmra.mrb[0].mxu0 %v2300
      %v2788 = vpop.f32.mrb[0].mxu0
      %v2789 = vadd.f32 %v2706, %v2788
      %v2790 = vpop.f32.mrb[0].mxu0
      %v2791 = vadd.f32 %v2708, %v2790
      %v2792 = vpop.f32.mrb[0].mxu0
      %v2793 = vadd.f32 %v2710, %v2792
      %v2794 = vpop.f32.mrb[0].mxu0
      %v2795 = vadd.f32 %v2712, %v2794
      %2796 = vmatprep.mubr.bf16.mxu0 %v2653
      %2797 = vmatmul.mubr.bf16.gmra.mrb[0].mxu0 %v2304
      %v2798 = vpop.f32.mrb[0].mxu0
      %v2799 = vadd.f32 %v2716, %v2798
      %v2800 = vpop.f32.mrb[0].mxu0
      %v2801 = vadd.f32 %v2718, %v2800
      %v2802 = vpop.f32.mrb[0].mxu0
      %v2803 = vadd.f32 %v2720, %v2802
      %v2804 = vpop.f32.mrb[0].mxu0
      %v2805 = vadd.f32 %v2722, %v2804
      %2806 = vmatprep.mubr.bf16.mxu0 %v2656
      %2807 = vmatmul.mubr.bf16.gmra.mrb[0].mxu0 %v2308
      %v2808 = vpop.f32.mrb[0].mxu0
      %v2809 = vadd.f32 %v2726, %v2808
      %v2810 = vpop.f32.mrb[0].mxu0
      %v2811 = vadd.f32 %v2728, %v2810
      %v2812 = vpop.f32.mrb[0].mxu0
      %v2813 = vadd.f32 %v2730, %v2812
      %v2814 = vpop.f32.mrb[0].mxu0
      %v2815 = vadd.f32 %v2732, %v2814
      %2816 = vmatprep.mubr.bf16.mxu0 %v2659
      %2817 = vmatmul.mubr.bf16.gmra.mrb[0].mxu0 %v2312
      %v2818 = vpop.f32.mrb[0].mxu0
      %v2819 = vadd.f32 %v2736, %v2818
      %v2820 = vpop.f32.mrb[0].mxu0
      %v2821 = vadd.f32 %v2738, %v2820
      %v2822 = vpop.f32.mrb[0].mxu0
      %v2823 = vadd.f32 %v2740, %v2822
      %v2824 = vpop.f32.mrb[0].mxu0
      %v2825 = vadd.f32 %v2742, %v2824
      %2826 = vmatprep.mubr.bf16.mxu0 %v2662
      %2827 = vmatmul.mubr.bf16.gmra.mrb[0].mxu0 %v2316
      %v2828 = vpop.f32.mrb[0].mxu0
      %v2829 = vadd.f32 %v2746, %v2828
      %v2830 = vpop.f32.mrb[0].mxu0
      %v2831 = vadd.f32 %v2748, %v2830
      %v2832 = vpop.f32.mrb[0].mxu0
      %v2833 = vadd.f32 %v2750, %v2832
      %v2834 = vpop.f32.mrb[0].mxu0
      %v2835 = vadd.f32 %v2752, %v2834
      %2836 = vdwg.mxu0
      %v2837 = vtanh.pop %v2789
      %v2838 = vtanh.pop %v2791
      %v2839 = vtanh.pop %v2793
      %v2840 = vtanh.pop %v2795
      %v2841 = vtanh.pop %v2799
      %v2842 = vtanh.pop %v2801
      %v2843 = vtanh.pop %v2803
      %v2844 = vtanh.pop %v2805
      %v2845 = vtanh.pop %v2809
      %v2846 = vtanh.pop %v2811
      %v2847 = vtanh.pop %v2813
      %v2848 = vtanh.pop %v2815
      %v2849 = vtanh.pop %v2819
      %v2850 = vtanh.pop %v2821
      %v2851 = vtanh.pop %v2823
      %v2852 = vtanh.pop %v2825
      %v2853 = vtanh.pop %v2829
      %v2854 = vtanh.pop %v2831
      %v2855 = vtanh.pop %v2833
      %v2856 = vtanh.pop %v2835
      %v2857 = vpack.c.bf16 %v2839, %v2837
      %v2858 = vpack.c.bf16 %v2840, %v2838
      %v2859 = vpack.c.bf16 %v2843, %v2841
      %v2860 = vpack.c.bf16 %v2844, %v2842
      %v2861 = vpack.c.bf16 %v2847, %v2845
      %v2862 = vpack.c.bf16 %v2848, %v2846
      %v2863 = vpack.c.bf16 %v2851, %v2849
      %v2864 = vpack.c.bf16 %v2852, %v2850
      %v2865 = vpack.c.bf16 %v2855, %v2853
      %v2866 = vpack.c.bf16 %v2856, %v2854
      %v2867 = vld [vmem:[%s7] sm:$0xf]
      %v2868 = vld [vmem:[%s7 + $0x4] sm:$0xf]
      %v2869 = vld [vmem:[%s7 + $0x8] sm:$0xf]
      %v2870 = vld [vmem:[%s7 + $0xc] sm:$0xf]
      %v2871 = vld [vmem:[%s7 + $0x10] sm:$0xf]
      %v2872 = vld [vmem:[%s7 + $0x14] sm:$0xf]
      %v2873 = vld [vmem:[%s7 + $0x18] sm:$0xf]
      %v2874 = vld [vmem:[%s7 + $0x1c] sm:$0xf]
      %v2875 = vld [vmem:[%s7 + $0x20] sm:$0xf]
      %v2876 = vld [vmem:[%s7 + $0x24] sm:$0xf]
      %v2877 = vld [vmem:[%s7 + $0x28] sm:$0xf]
      %v2878 = vld [vmem:[%s7 + $0x2c] sm:$0xf]
      %v2879 = vld [vmem:[%s7 + $0x30] sm:$0xf]
      %v2880 = vld [vmem:[%s7 + $0x34] sm:$0xf]
      %v2881 = vld [vmem:[%s7 + $0x38] sm:$0xf]
      %v2882 = vld [vmem:[%s7 + $0x3c] sm:$0xf]
      %v2883 = vld [vmem:[%s7 + $0x40] sm:$0xf]
      %v2884 = vld [vmem:[%s7 + $0x44] sm:$0xf]
      %v2885 = vld [vmem:[%s7 + $0x48] sm:$0xf]
      %v2886 = vld [vmem:[%s7 + $0x4c] sm:$0xf]
      %v2907 = vunpack.c.l.b16 %v2867
      %v2908 = vunpack.c.l.b16 %v2868
      %v2909 = vunpack.c.l.b16 %v2869
      %v2910 = vunpack.c.l.b16 %v2870
      %v2911 = vunpack.c.l.b16 %v2871
      %v2912 = vunpack.c.l.b16 %v2872
      %v2913 = vunpack.c.l.b16 %v2873
      %v2914 = vunpack.c.l.b16 %v2874
      %v2915 = vunpack.c.l.b16 %v2875
      %v2916 = vunpack.c.l.b16 %v2876
      %v2917 = vunpack.c.l.b16 %v2877
      %v2918 = vunpack.c.l.b16 %v2878
      %v2919 = vunpack.c.l.b16 %v2879
      %v2920 = vunpack.c.l.b16 %v2880
      %v2921 = vunpack.c.l.b16 %v2881
      %v2922 = vunpack.c.l.b16 %v2882
      %v2923 = vunpack.c.l.b16 %v2883
      %v2924 = vunpack.c.l.b16 %v2884
      %v2925 = vunpack.c.l.b16 %v2885
      %v2926 = vunpack.c.l.b16 %v2886
      %v2927 = vpack.c.b16 %v2908, %v2907
      %v2928 = vpack.c.b16 %v2910, %v2909
      %v2929 = vpack.c.b16 %v2912, %v2911
      %v2930 = vpack.c.b16 %v2914, %v2913
      %v2931 = vpack.c.b16 %v2916, %v2915
      %v2932 = vpack.c.b16 %v2918, %v2917
      %v2933 = vpack.c.b16 %v2920, %v2919
      %v2934 = vpack.c.b16 %v2922, %v2921
      %v2935 = vpack.c.b16 %v2924, %v2923
      %v2936 = vpack.c.b16 %v2926, %v2925
      %v2948 = vsel %vm785, %v2858, 0
      %v2951 = vsel %vm785, %v2860, 0
      %v2954 = vsel %vm785, %v2862, 0
      %v2957 = vsel %vm785, %v2864, 0
      %v2960 = vsel %vm785, %v2866, 0
      %2962 = vmatprep.subr.bf16.mxu0 0
      %2963 = vmatpush1.bf16.msra.mxu0 %v2927
      %2964 = vmatprep.subr.bf16.mxu0 0
      %2965 = vmatpush1.bf16.msra.mxu0 %v2928
      %2966 = vmatprep.subr.bf16.mxu0 0
      %2967 = vmatpush1.bf16.msra.mxu0 %v2929
      %2968 = vmatprep.subr.bf16.mxu0 0
      %2969 = vmatpush1.bf16.msra.mxu0 %v2930
      %2970 = vmatprep.subr.bf16.mxu0 0
      %2971 = vmatpush1.bf16.msra.mxu0 %v2931
      %2972 = vmatprep.subr.bf16.mxu0 0
      %2973 = vmatpush1.bf16.msra.mxu0 %v2932
      %2974 = vmatprep.subr.bf16.mxu0 0
      %2975 = vmatpush1.bf16.msra.mxu0 %v2933
      %2976 = vmatprep.subr.bf16.mxu0 0
      %2977 = vmatpush1.bf16.msra.mxu0 %v2934
      %2978 = vmatprep.subr.bf16.mxu0 0
      %2979 = vmatpush1.bf16.msra.mxu0 %v2935
      %2980 = vmatprep.subr.bf16.mxu0 0
      %2981 = vmatpush1.bf16.msra.mxu0 %v2936
      %2982 = vmatprep.subr.bf16.mxu0 0
      %2983 = vmatpush1.bf16.msra.mxu0 0
      %2984 = vmatprep.subr.bf16.mxu0 0
      %2985 = vmatpush1.bf16.msra.mxu0 0
      %2986 = vmatprep.subr.bf16.mxu0 0
      %2987 = vmatpush1.bf16.msra.mxu0 0
      %2988 = vmatprep.subr.bf16.mxu0 0
      %2989 = vmatpush1.bf16.msra.mxu0 0
      %2990 = vmatprep.subr.bf16.mxu0 0
      %2991 = vmatpush1.bf16.msra.mxu0 0
      %2992 = vmatprep.subr.bf16.mxu0 0
      %2993 = vmatpush1.bf16.msra.mxu0 0
      %2994 = vmatprep.mubr.bf16.mxu0 %v2948
      %2995 = vmatmul.mubr.bf16.gmra.mrb[0].mxu0 %v2857
      %v2996 = vpop.f32.mrb[0].mxu0
      %v2997 = vadd.f32 0.0, %v2996
      %v2998 = vpop.f32.mrb[0].mxu0
      %v2999 = vpop.f32.mrb[0].mxu0
      %v3000 = vadd.f32 0.0, %v2999
      %v3001 = vpop.f32.mrb[0].mxu0
      %3002 = vmatprep.mubr.bf16.mxu0 %v2951
      %3003 = vmatmul.mubr.bf16.gmra.mrb[0].mxu0 %v2859
      %v3004 = vpop.f32.mrb[0].mxu0
      %v3005 = vadd.f32 0.0, %v3004
      %v3006 = vpop.f32.mrb[0].mxu0
      %v3007 = vpop.f32.mrb[0].mxu0
      %v3008 = vadd.f32 0.0, %v3007
      %v3009 = vpop.f32.mrb[0].mxu0
      %3010 = vmatprep.mubr.bf16.mxu0 %v2954
      %3011 = vmatmul.mubr.bf16.gmra.mrb[0].mxu0 %v2861
      %v3012 = vpop.f32.mrb[0].mxu0
      %v3013 = vadd.f32 0.0, %v3012
      %v3014 = vpop.f32.mrb[0].mxu0
      %v3015 = vpop.f32.mrb[0].mxu0
      %v3016 = vadd.f32 0.0, %v3015
      %v3017 = vpop.f32.mrb[0].mxu0
      %3018 = vmatprep.mubr.bf16.mxu0 %v2957
      %3019 = vmatmul.mubr.bf16.gmra.mrb[0].mxu0 %v2863
      %v3020 = vpop.f32.mrb[0].mxu0
      %v3021 = vadd.f32 0.0, %v3020
      %v3022 = vpop.f32.mrb[0].mxu0
      %v3023 = vpop.f32.mrb[0].mxu0
      %v3024 = vadd.f32 0.0, %v3023
      %v3025 = vpop.f32.mrb[0].mxu0
      %3026 = vmatprep.mubr.bf16.mxu0 %v2960
      %3027 = vmatmul.mubr.bf16.gmra.mrb[0].mxu0 %v2865
      %v3028 = vpop.f32.mrb[0].mxu0
      %v3029 = vadd.f32 0.0, %v3028
      %v3030 = vpop.f32.mrb[0].mxu0
      %v3031 = vpop.f32.mrb[0].mxu0
      %v3032 = vadd.f32 0.0, %v3031
      %v3033 = vpop.f32.mrb[0].mxu0
      %3034 = vdwg.mxu0
      %v3035 = vpack.c.bf16 %v3000, %v2997
      %v3036 = vpack.c.bf16 %v3008, %v3005
      %v3037 = vpack.c.bf16 %v3016, %v3013
      %v3038 = vpack.c.bf16 %v3024, %v3021
      %v3039 = vpack.c.bf16 %v3032, %v3029
      %v3040 = vld [vmem:[%s8] sm:$0xf]
      %v3042 = vsel %vm2287, %v3040, 0
      %3044 = vmatprep.subr.bf16.mxu0 0
      %3045 = vmatpush1.bf16.msra.mxu0 %v3035
      %3046 = vmatprep.subr.bf16.mxu0 0
      %3047 = vmatpush1.bf16.msra.mxu0 %v3036
      %3048 = vmatprep.subr.bf16.mxu0 0
      %3049 = vmatpush1.bf16.msra.mxu0 %v3037
      %3050 = vmatprep.subr.bf16.mxu0 0
      %3051 = vmatpush1.bf16.msra.mxu0 %v3038
      %3052 = vmatprep.subr.bf16.mxu0 0
      %3053 = vmatpush1.bf16.msra.mxu0 %v3039
      %3054 = vmatprep.subr.bf16.mxu0 0
      %3055 = vmatpush1.bf16.msra.mxu0 0
      %3056 = vmatprep.subr.bf16.mxu0 0
      %3057 = vmatpush1.bf16.msra.mxu0 0
      %3058 = vmatprep.subr.bf16.mxu0 0
      %3059 = vmatpush1.bf16.msra.mxu0 0
      %3060 = vmatprep.subr.bf16.mxu0 0
      %3061 = vmatpush1.bf16.msra.mxu0 0
      %3062 = vmatprep.subr.bf16.mxu0 0
      %3063 = vmatpush1.bf16.msra.mxu0 0
      %3064 = vmatprep.subr.bf16.mxu0 0
      %3065 = vmatpush1.bf16.msra.mxu0 0
      %3066 = vmatprep.subr.bf16.mxu0 0
      %3067 = vmatpush1.bf16.msra.mxu0 0
      %3068 = vmatprep.subr.bf16.mxu0 0
      %3069 = vmatpush1.bf16.msra.mxu0 0
      %3070 = vmatprep.subr.bf16.mxu0 0
      %3071 = vmatpush1.bf16.msra.mxu0 0
      %3072 = vmatprep.subr.bf16.mxu0 0
      %3073 = vmatpush1.bf16.msra.mxu0 0
      %3074 = vmatprep.subr.bf16.mxu0 0
      %3075 = vmatpush1.bf16.msra.mxu0 0
      %3076 = vmatprep.mubr.bf16.mxu0 0
      %3077 = vmatmul.mubr.bf16.gmra.mrb[0].mxu0 %v3042
      %v3078 = vpop.f32.mrb[0].mxu0
      %v3079 = vadd.f32 0.0, %v3078
      %v3080 = vpop.f32.mrb[0].mxu0
      %v3081 = vpop.f32.mrb[0].mxu0
      %v3082 = vpop.f32.mrb[0].mxu0
      %3083 = vdwg.mxu0
      %s3084 = scalar_lea.vmem %s8, 4
      %v3085 = vld [vmem:[%s3084] sm:$0xf]
      %v3087 = vsel %vm2287, %v3085, 0
      %3089 = vmatprep.subr.bf16.mxu0 0
      %3090 = vmatpush1.bf16.msra.mxu0 %v3035
      %3091 = vmatprep.subr.bf16.mxu0 0
      %3092 = vmatpush1.bf16.msra.mxu0 %v3036
      %3093 = vmatprep.subr.bf16.mxu0 0
      %3094 = vmatpush1.bf16.msra.mxu0 %v3037
      %3095 = vmatprep.subr.bf16.mxu0 0
      %3096 = vmatpush1.bf16.msra.mxu0 %v3038
      %3097 = vmatprep.subr.bf16.mxu0 0
      %3098 = vmatpush1.bf16.msra.mxu0 %v3039
      %3099 = vmatprep.subr.bf16.mxu0 0
      %3100 = vmatpush1.bf16.msra.mxu0 0
      %3101 = vmatprep.subr.bf16.mxu0 0
      %3102 = vmatpush1.bf16.msra.mxu0 0
      %3103 = vmatprep.subr.bf16.mxu0 0
      %3104 = vmatpush1.bf16.msra.mxu0 0
      %3105 = vmatprep.subr.bf16.mxu0 0
      %3106 = vmatpush1.bf16.msra.mxu0 0
      %3107 = vmatprep.subr.bf16.mxu0 0
      %3108 = vmatpush1.bf16.msra.mxu0 0
      %3109 = vmatprep.subr.bf16.mxu0 0
      %3110 = vmatpush1.bf16.msra.mxu0 0
      %3111 = vmatprep.subr.bf16.mxu0 0
      %3112 = vmatpush1.bf16.msra.mxu0 0
      %3113 = vmatprep.subr.bf16.mxu0 0
      %3114 = vmatpush1.bf16.msra.mxu0 0
      %3115 = vmatprep.subr.bf16.mxu0 0
      %3116 = vmatpush1.bf16.msra.mxu0 0
      %3117 = vmatprep.subr.bf16.mxu0 0
      %3118 = vmatpush1.bf16.msra.mxu0 0
      %3119 = vmatprep.subr.bf16.mxu0 0
      %3120 = vmatpush1.bf16.msra.mxu0 0
      %3121 = vmatprep.mubr.bf16.mxu0 0
      %3122 = vmatmul.mubr.bf16.gmra.mrb[0].mxu0 %v3087
      %v3123 = vpop.f32.mrb[0].mxu0
      %v3124 = vadd.f32 0.0, %v3123
      %v3125 = vpop.f32.mrb[0].mxu0
      %v3126 = vpop.f32.mrb[0].mxu0
      %v3127 = vpop.f32.mrb[0].mxu0
      %3128 = vdwg.mxu0
      %s3129 = scalar_lea.vmem %s8, 8
      %v3130 = vld [vmem:[%s3129] sm:$0xf]
      %v3132 = vsel %vm2287, %v3130, 0
      %3134 = vmatprep.subr.bf16.mxu0 0
      %3135 = vmatpush1.bf16.msra.mxu0 %v3035
      %3136 = vmatprep.subr.bf16.mxu0 0
      %3137 = vmatpush1.bf16.msra.mxu0 %v3036
      %3138 = vmatprep.subr.bf16.mxu0 0
      %3139 = vmatpush1.bf16.msra.mxu0 %v3037
      %3140 = vmatprep.subr.bf16.mxu0 0
      %3141 = vmatpush1.bf16.msra.mxu0 %v3038
      %3142 = vmatprep.subr.bf16.mxu0 0
      %3143 = vmatpush1.bf16.msra.mxu0 %v3039
      %3144 = vmatprep.subr.bf16.mxu0 0
      %3145 = vmatpush1.bf16.msra.mxu0 0
      %3146 = vmatprep.subr.bf16.mxu0 0
      %3147 = vmatpush1.bf16.msra.mxu0 0
      %3148 = vmatprep.subr.bf16.mxu0 0
      %3149 = vmatpush1.bf16.msra.mxu0 0
      %3150 = vmatprep.subr.bf16.mxu0 0
      %3151 = vmatpush1.bf16.msra.mxu0 0
      %3152 = vmatprep.subr.bf16.mxu0 0
      %3153 = vmatpush1.bf16.msra.mxu0 0
      %3154 = vmatprep.subr.bf16.mxu0 0
      %3155 = vmatpush1.bf16.msra.mxu0 0
      %3156 = vmatprep.subr.bf16.mxu0 0
      %3157 = vmatpush1.bf16.msra.mxu0 0
      %3158 = vmatprep.subr.bf16.mxu0 0
      %3159 = vmatpush1.bf16.msra.mxu0 0
      %3160 = vmatprep.subr.bf16.mxu0 0
      %3161 = vmatpush1.bf16.msra.mxu0 0
      %3162 = vmatprep.subr.bf16.mxu0 0
      %3163 = vmatpush1.bf16.msra.mxu0 0
      %3164 = vmatprep.subr.bf16.mxu0 0
      %3165 = vmatpush1.bf16.msra.mxu0 0
      %3166 = vmatprep.mubr.bf16.mxu0 0
      %3167 = vmatmul.mubr.bf16.gmra.mrb[0].mxu0 %v3132
      %v3168 = vpop.f32.mrb[0].mxu0
      %v3169 = vadd.f32 0.0, %v3168
      %v3170 = vpop.f32.mrb[0].mxu0
      %v3171 = vpop.f32.mrb[0].mxu0
      %v3172 = vpop.f32.mrb[0].mxu0
      %3173 = vdwg.mxu0
      %s3174 = scalar_lea.vmem %s8, 12
      %v3175 = vld [vmem:[%s3174] sm:$0xf]
      %v3177 = vsel %vm2287, %v3175, 0
      %3179 = vmatprep.subr.bf16.mxu0 0
      %3180 = vmatpush1.bf16.msra.mxu0 %v3035
      %3181 = vmatprep.subr.bf16.mxu0 0
      %3182 = vmatpush1.bf16.msra.mxu0 %v3036
      %3183 = vmatprep.subr.bf16.mxu0 0
      %3184 = vmatpush1.bf16.msra.mxu0 %v3037
      %3185 = vmatprep.subr.bf16.mxu0 0
      %3186 = vmatpush1.bf16.msra.mxu0 %v3038
      %3187 = vmatprep.subr.bf16.mxu0 0
      %3188 = vmatpush1.bf16.msra.mxu0 %v3039
      %3189 = vmatprep.subr.bf16.mxu0 0
      %3190 = vmatpush1.bf16.msra.mxu0 0
      %3191 = vmatprep.subr.bf16.mxu0 0
      %3192 = vmatpush1.bf16.msra.mxu0 0
      %3193 = vmatprep.subr.bf16.mxu0 0
      %3194 = vmatpush1.bf16.msra.mxu0 0
      %3195 = vmatprep.subr.bf16.mxu0 0
      %3196 = vmatpush1.bf16.msra.mxu0 0
      %3197 = vmatprep.subr.bf16.mxu0 0
      %3198 = vmatpush1.bf16.msra.mxu0 0
      %3199 = vmatprep.subr.bf16.mxu0 0
      %3200 = vmatpush1.bf16.msra.mxu0 0
      %3201 = vmatprep.subr.bf16.mxu0 0
      %3202 = vmatpush1.bf16.msra.mxu0 0
      %3203 = vmatprep.subr.bf16.mxu0 0
      %3204 = vmatpush1.bf16.msra.mxu0 0
      %3205 = vmatprep.subr.bf16.mxu0 0
      %3206 = vmatpush1.bf16.msra.mxu0 0
      %3207 = vmatprep.subr.bf16.mxu0 0
      %3208 = vmatpush1.bf16.msra.mxu0 0
      %3209 = vmatprep.subr.bf16.mxu0 0
      %3210 = vmatpush1.bf16.msra.mxu0 0
      %3211 = vmatprep.mubr.bf16.mxu0 0
      %3212 = vmatmul.mubr.bf16.gmra.mrb[0].mxu0 %v3177
      %v3213 = vpop.f32.mrb[0].mxu0
      %v3214 = vadd.f32 0.0, %v3213
      %v3215 = vpop.f32.mrb[0].mxu0
      %v3216 = vpop.f32.mrb[0].mxu0
      %v3217 = vpop.f32.mrb[0].mxu0
      %3218 = vdwg.mxu0
      %s3219 = scalar_lea.vmem %s8, 16
      %v3220 = vld [vmem:[%s3219] sm:$0xf]
      %v3222 = vsel %vm2287, %v3220, 0
      %3224 = vmatprep.subr.bf16.mxu0 0
      %3225 = vmatpush1.bf16.msra.mxu0 %v3035
      %3226 = vmatprep.subr.bf16.mxu0 0
      %3227 = vmatpush1.bf16.msra.mxu0 %v3036
      %3228 = vmatprep.subr.bf16.mxu0 0
      %3229 = vmatpush1.bf16.msra.mxu0 %v3037
      %3230 = vmatprep.subr.bf16.mxu0 0
      %3231 = vmatpush1.bf16.msra.mxu0 %v3038
      %3232 = vmatprep.subr.bf16.mxu0 0
      %3233 = vmatpush1.bf16.msra.mxu0 %v3039
      %3234 = vmatprep.subr.bf16.mxu0 0
      %3235 = vmatpush1.bf16.msra.mxu0 0
      %3236 = vmatprep.subr.bf16.mxu0 0
      %3237 = vmatpush1.bf16.msra.mxu0 0
      %3238 = vmatprep.subr.bf16.mxu0 0
      %3239 = vmatpush1.bf16.msra.mxu0 0
      %3240 = vmatprep.subr.bf16.mxu0 0
      %3241 = vmatpush1.bf16.msra.mxu0 0
      %3242 = vmatprep.subr.bf16.mxu0 0
      %3243 = vmatpush1.bf16.msra.mxu0 0
      %3244 = vmatprep.subr.bf16.mxu0 0
      %3245 = vmatpush1.bf16.msra.mxu0 0
      %3246 = vmatprep.subr.bf16.mxu0 0
      %3247 = vmatpush1.bf16.msra.mxu0 0
      %3248 = vmatprep.subr.bf16.mxu0 0
      %3249 = vmatpush1.bf16.msra.mxu0 0
      %3250 = vmatprep.subr.bf16.mxu0 0
      %3251 = vmatpush1.bf16.msra.mxu0 0
      %3252 = vmatprep.subr.bf16.mxu0 0
      %3253 = vmatpush1.bf16.msra.mxu0 0
      %3254 = vmatprep.subr.bf16.mxu0 0
      %3255 = vmatpush1.bf16.msra.mxu0 0
      %3256 = vmatprep.mubr.bf16.mxu0 0
      %3257 = vmatmul.mubr.bf16.gmra.mrb[0].mxu0 %v3222
      %v3258 = vpop.f32.mrb[0].mxu0
      %v3259 = vadd.f32 0.0, %v3258
      %v3260 = vpop.f32.mrb[0].mxu0
      %v3261 = vpop.f32.mrb[0].mxu0
      %v3262 = vpop.f32.mrb[0].mxu0
      %3263 = vdwg.mxu0
      %3265 = vrot.lane.b32.xlu0 %v3124, 80
      %v3266 = vpop.permute.xlu0 %3265
      %3269 = vrot.lane.b32.xlu0 %v3169, 32
      %v3270 = vpop.permute.xlu0 %3269
      %3273 = vrot.lane.b32.xlu0 %v3214, 112
      %v3274 = vpop.permute.xlu0 %3273
      %3277 = vrot.lane.b32.xlu0 %v3259, 64
      %v3278 = vpop.permute.xlu0 %3277
      %v3280 = vsel %vm2287, %v3079, %v3266
      %v3281 = vsel %vm785, %v3266, %v3270
      %vm3282 = vcmask 916480
      %v3283 = vsel %vm3282, %v3281, %v3274
      %vm3284 = vcmask 523264
      %v3285 = vsel %vm3284, %v3274, %v3278
      %v3286 = vpack.c.bf16 %v3280, %v3280
      %v3287 = vpack.c.bf16 %v3283, %v3283
      %v3288 = vpack.c.bf16 %v3285, %v3285
      %v3289 = vpack.c.bf16 %v3278, %v3278
      %v3290 = vld [vmem:[%s9] sm:$0xf]
      %v3291 = vld [vmem:[%s9 + $0x4] sm:$0xf]
      %v3292 = vld [vmem:[%s9 + $0x8] sm:$0xf]
      %v3293 = vld [vmem:[%s9 + $0xc] sm:$0xf]
      %v3294 = vld [vmem:[%s9 + $0x10] sm:$0xf]
      %v3295 = vld [vmem:[%s9 + $0x14] sm:$0xf]
      %v3296 = vld [vmem:[%s9 + $0x18] sm:$0xf]
      %v3297 = vld [vmem:[%s9 + $0x1c] sm:$0xf]
      %v3298 = vld [vmem:[%s9 + $0x20] sm:$0xf]
      %v3299 = vld [vmem:[%s9 + $0x24] sm:$0xf]
      %v3300 = vld [vmem:[%s9 + $0x28] sm:$0xf]
      %v3301 = vld [vmem:[%s9 + $0x2c] sm:$0xf]
      %v3302 = vld [vmem:[%s9 + $0x30] sm:$0xf]
      %v3303 = vld [vmem:[%s9 + $0x34] sm:$0xf]
      %v3304 = vld [vmem:[%s9 + $0x38] sm:$0xf]
      %v3305 = vld [vmem:[%s9 + $0x3c] sm:$0xf]
      %v3306 = vld [vmem:[%s9 + $0x40] sm:$0xf]
      %v3307 = vld [vmem:[%s9 + $0x44] sm:$0xf]
      %v3308 = vld [vmem:[%s9 + $0x48] sm:$0xf]
      %v3309 = vld [vmem:[%s9 + $0x4c] sm:$0xf]
      %v3310 = vld [vmem:[%s9 + $0x50] sm:$0xf]
      %v3311 = vld [vmem:[%s9 + $0x54] sm:$0xf]
      %v3312 = vld [vmem:[%s9 + $0x58] sm:$0xf]
      %v3313 = vld [vmem:[%s9 + $0x5c] sm:$0xf]
      %v3314 = vld [vmem:[%s9 + $0x60] sm:$0xf]
      %v3315 = vld [vmem:[%s9 + $0x64] sm:$0xf]
      %v3316 = vld [vmem:[%s9 + $0x68] sm:$0xf]
      %v3317 = vld [vmem:[%s9 + $0x6c] sm:$0xf]
      %v3318 = vld [vmem:[%s9 + $0x70] sm:$0xf]
      %v3319 = vld [vmem:[%s9 + $0x74] sm:$0xf]
      %v3320 = vld [vmem:[%s9 + $0x78] sm:$0xf]
      %v3321 = vld [vmem:[%s9 + $0x7c] sm:$0xf]
      %v3322 = vld [vmem:[%s9 + $0x80] sm:$0xf]
      %v3323 = vld [vmem:[%s9 + $0x84] sm:$0xf]
      %v3324 = vld [vmem:[%s9 + $0x88] sm:$0xf]
      %v3325 = vld [vmem:[%s9 + $0x8c] sm:$0xf]
      %v3326 = vld [vmem:[%s9 + $0x90] sm:$0xf]
      %v3327 = vld [vmem:[%s9 + $0x94] sm:$0xf]
      %v3328 = vld [vmem:[%s9 + $0x98] sm:$0xf]
      %v3329 = vld [vmem:[%s9 + $0x9c] sm:$0xf]
      %v3330 = vld [vmem:[%s9 + $0xa0] sm:$0xf]
      %v3331 = vld [vmem:[%s9 + $0xa4] sm:$0xf]
      %v3332 = vld [vmem:[%s9 + $0xa8] sm:$0xf]
      %v3333 = vld [vmem:[%s9 + $0xac] sm:$0xf]
      %v3334 = vld [vmem:[%s9 + $0xb0] sm:$0xf]
      %v3335 = vld [vmem:[%s9 + $0xb4] sm:$0xf]
      %v3336 = vld [vmem:[%s9 + $0xb8] sm:$0xf]
      %v3337 = vld [vmem:[%s9 + $0xbc] sm:$0xf]
      %v3338 = vld [vmem:[%s9 + $0xc0] sm:$0xf]
      %v3339 = vld [vmem:[%s9 + $0xc4] sm:$0xf]
      %v3340 = vld [vmem:[%s10] sm:$0x1]
      %v3342 = vlaneseq
      %v3343 = vshrl.u32 %v3342, 7
      %v3344 = vsub.s32 0, %v3343
      %v3345 = vrot.slane %v3340, %v3344
      %v3397 = vunpack.c.l.b16 %v3290
      %v3398 = vunpack.c.l.b16 %v3291
      %v3399 = vunpack.c.l.b16 %v3292
      %v3400 = vunpack.c.l.b16 %v3293
      %v3401 = vunpack.c.l.b16 %v3294
      %v3402 = vunpack.c.l.b16 %v3295
      %v3403 = vunpack.c.l.b16 %v3296
      %v3404 = vunpack.c.l.b16 %v3297
      %v3405 = vunpack.c.l.b16 %v3298
      %v3406 = vunpack.c.l.b16 %v3299
      %v3407 = vunpack.c.l.b16 %v3300
      %v3408 = vunpack.c.l.b16 %v3301
      %v3409 = vunpack.c.l.b16 %v3302
      %v3410 = vunpack.c.l.b16 %v3303
      %v3411 = vunpack.c.l.b16 %v3304
      %v3412 = vunpack.c.l.b16 %v3305
      %v3413 = vunpack.c.l.b16 %v3306
      %v3414 = vunpack.c.l.b16 %v3307
      %v3415 = vunpack.c.l.b16 %v3308
      %v3416 = vunpack.c.l.b16 %v3309
      %v3417 = vunpack.c.l.b16 %v3310
      %v3418 = vunpack.c.l.b16 %v3311
      %v3419 = vunpack.c.l.b16 %v3312
      %v3420 = vunpack.c.l.b16 %v3313
      %v3421 = vunpack.c.l.b16 %v3314
      %v3422 = vunpack.c.l.b16 %v3315
      %v3423 = vunpack.c.l.b16 %v3316
      %v3424 = vunpack.c.l.b16 %v3317
      %v3425 = vunpack.c.l.b16 %v3318
      %v3426 = vunpack.c.l.b16 %v3319
      %v3427 = vunpack.c.l.b16 %v3320
      %v3428 = vunpack.c.l.b16 %v3321
      %v3429 = vunpack.c.l.b16 %v3322
      %v3430 = vunpack.c.l.b16 %v3323
      %v3431 = vunpack.c.l.b16 %v3324
      %v3432 = vunpack.c.l.b16 %v3325
      %v3433 = vunpack.c.l.b16 %v3326
      %v3434 = vunpack.c.l.b16 %v3327
      %v3435 = vunpack.c.l.b16 %v3328
      %v3436 = vunpack.c.l.b16 %v3329
      %v3437 = vunpack.c.l.b16 %v3330
      %v3438 = vunpack.c.l.b16 %v3331
      %v3439 = vunpack.c.l.b16 %v3332
      %v3440 = vunpack.c.l.b16 %v3333
      %v3441 = vunpack.c.l.b16 %v3334
      %v3442 = vunpack.c.l.b16 %v3335
      %v3443 = vunpack.c.l.b16 %v3336
      %v3444 = vunpack.c.l.b16 %v3337
      %v3445 = vunpack.c.l.b16 %v3338
      %v3446 = vunpack.c.l.b16 %v3339
      %v3447 = vpack.c.b16 %v3398, %v3397
      %v3448 = vpack.c.b16 %v3400, %v3399
      %v3449 = vpack.c.b16 %v3402, %v3401
      %v3450 = vpack.c.b16 %v3404, %v3403
      %v3451 = vpack.c.b16 %v3406, %v3405
      %v3452 = vpack.c.b16 %v3408, %v3407
      %v3453 = vpack.c.b16 %v3410, %v3409
      %v3454 = vpack.c.b16 %v3412, %v3411
      %v3455 = vpack.c.b16 %v3414, %v3413
      %v3456 = vpack.c.b16 %v3416, %v3415
      %v3457 = vpack.c.b16 %v3418, %v3417
      %v3458 = vpack.c.b16 %v3420, %v3419
      %v3459 = vpack.c.b16 %v3422, %v3421
      %v3460 = vpack.c.b16 %v3424, %v3423
      %v3461 = vpack.c.b16 %v3426, %v3425
      %v3462 = vpack.c.b16 %v3428, %v3427
      %v3463 = vpack.c.b16 %v3430, %v3429
      %v3464 = vpack.c.b16 %v3432, %v3431
      %v3465 = vpack.c.b16 %v3434, %v3433
      %v3466 = vpack.c.b16 %v3436, %v3435
      %v3467 = vpack.c.b16 %v3438, %v3437
      %v3468 = vpack.c.b16 %v3440, %v3439
      %v3469 = vpack.c.b16 %v3442, %v3441
      %v3470 = vpack.c.b16 %v3444, %v3443
      %v3471 = vpack.c.b16 %v3446, %v3445
      %vm3497 = vcmask 130048
      %v3499 = vsel %vm3497, %v3289, 0
      %3501 = vmatprep.subr.bf16.mxu0 0
      %3502 = vmatpush1.bf16.msra.mxu0 %v3447
      %3503 = vmatprep.subr.bf16.mxu0 0
      %3504 = vmatpush1.bf16.msra.mxu0 %v3448
      %3505 = vmatprep.subr.bf16.mxu0 0
      %3506 = vmatpush1.bf16.msra.mxu0 %v3449
      %3507 = vmatprep.subr.bf16.mxu0 0
      %3508 = vmatpush1.bf16.msra.mxu0 %v3450
      %3509 = vmatprep.subr.bf16.mxu0 0
      %3510 = vmatpush1.bf16.msra.mxu0 %v3451
      %3511 = vmatprep.subr.bf16.mxu0 0
      %3512 = vmatpush1.bf16.msra.mxu0 %v3452
      %3513 = vmatprep.subr.bf16.mxu0 0
      %3514 = vmatpush1.bf16.msra.mxu0 %v3453
      %3515 = vmatprep.subr.bf16.mxu0 0
      %3516 = vmatpush1.bf16.msra.mxu0 %v3454
      %3517 = vmatprep.subr.bf16.mxu0 0
      %3518 = vmatpush1.bf16.msra.mxu0 %v3455
      %3519 = vmatprep.subr.bf16.mxu0 0
      %3520 = vmatpush1.bf16.msra.mxu0 %v3456
      %3521 = vmatprep.subr.bf16.mxu0 0
      %3522 = vmatpush1.bf16.msra.mxu0 %v3457
      %3523 = vmatprep.subr.bf16.mxu0 0
      %3524 = vmatpush1.bf16.msra.mxu0 %v3458
      %3525 = vmatprep.subr.bf16.mxu0 0
      %3526 = vmatpush1.bf16.msra.mxu0 %v3459
      %3527 = vmatprep.subr.bf16.mxu0 0
      %3528 = vmatpush1.bf16.msra.mxu0 %v3460
      %3529 = vmatprep.subr.bf16.mxu0 0
      %3530 = vmatpush1.bf16.msra.mxu0 %v3461
      %3531 = vmatprep.subr.bf16.mxu0 0
      %3532 = vmatpush1.bf16.msra.mxu0 %v3462
      %3533 = vmatprep.mubr.bf16.mxu0 %v3287
      %3534 = vmatmul.mubr.bf16.gmra.mrb[0].mxu0 %v3286
      %v3535 = vpop.f32.mrb[0].mxu0
      %v3536 = vadd.f32 %v3345, %v3535
      %v3537 = vpop.f32.mrb[0].mxu0
      %v3538 = vpop.f32.mrb[0].mxu0
      %v3539 = vpop.f32.mrb[0].mxu0
      %3540 = vdwg.mxu0
      %3541 = vmatprep.subr.bf16.mxu0 0
      %3542 = vmatpush1.bf16.msra.mxu0 %v3463
      %3543 = vmatprep.subr.bf16.mxu0 0
      %3544 = vmatpush1.bf16.msra.mxu0 %v3464
      %3545 = vmatprep.subr.bf16.mxu0 0
      %3546 = vmatpush1.bf16.msra.mxu0 %v3465
      %3547 = vmatprep.subr.bf16.mxu0 0
      %3548 = vmatpush1.bf16.msra.mxu0 %v3466
      %3549 = vmatprep.subr.bf16.mxu0 0
      %3550 = vmatpush1.bf16.msra.mxu0 %v3467
      %3551 = vmatprep.subr.bf16.mxu0 0
      %3552 = vmatpush1.bf16.msra.mxu0 %v3468
      %3553 = vmatprep.subr.bf16.mxu0 0
      %3554 = vmatpush1.bf16.msra.mxu0 %v3469
      %3555 = vmatprep.subr.bf16.mxu0 0
      %3556 = vmatpush1.bf16.msra.mxu0 %v3470
      %3557 = vmatprep.subr.bf16.mxu0 0
      %3558 = vmatpush1.bf16.msra.mxu0 %v3471
      %3559 = vmatprep.subr.bf16.mxu0 0
      %3560 = vmatpush1.bf16.msra.mxu0 0
      %3561 = vmatprep.subr.bf16.mxu0 0
      %3562 = vmatpush1.bf16.msra.mxu0 0
      %3563 = vmatprep.subr.bf16.mxu0 0
      %3564 = vmatpush1.bf16.msra.mxu0 0
      %3565 = vmatprep.subr.bf16.mxu0 0
      %3566 = vmatpush1.bf16.msra.mxu0 0
      %3567 = vmatprep.subr.bf16.mxu0 0
      %3568 = vmatpush1.bf16.msra.mxu0 0
      %3569 = vmatprep.subr.bf16.mxu0 0
      %3570 = vmatpush1.bf16.msra.mxu0 0
      %3571 = vmatprep.subr.bf16.mxu0 0
      %3572 = vmatpush1.bf16.msra.mxu0 0
      %3573 = vmatprep.mubr.bf16.mxu0 %v3499
      %3574 = vmatmul.mubr.bf16.gmra.mrb[0].mxu0 %v3288
      %v3575 = vpop.f32.mrb[0].mxu0
      %v3576 = vadd.f32 %v3536, %v3575
      %v3577 = vpop.f32.mrb[0].mxu0
      %v3578 = vpop.f32.mrb[0].mxu0
      %v3579 = vpop.f32.mrb[0].mxu0
      %3580 = vdwg.mxu0
      %v3581 = vtanh.pop %v3576
      %v3582 = vpack.c.bf16 %v3581, %v3581
      %v3583 = vld [vmem:[%s11] sm:$0xf]
      %v3584 = vld [vmem:[%s11 + $0x4] sm:$0xf]
      %v3585 = vld [vmem:[%s11 + $0x8] sm:$0xf]
      %v3586 = vld [vmem:[%s11 + $0xc] sm:$0xf]
      %v3587 = vld [vmem:[%s11 + $0x10] sm:$0xf]
      %v3588 = vld [vmem:[%s11 + $0x14] sm:$0xf]
      %v3589 = vld [vmem:[%s11 + $0x18] sm:$0xf]
      %v3590 = vld [vmem:[%s11 + $0x1c] sm:$0xf]
      %v3591 = vld [vmem:[%s11 + $0x20] sm:$0xf]
      %v3592 = vld [vmem:[%s11 + $0x24] sm:$0xf]
      %v3593 = vld [vmem:[%s11 + $0x28] sm:$0xf]
      %v3594 = vld [vmem:[%s11 + $0x2c] sm:$0xf]
      %v3595 = vld [vmem:[%s11 + $0x30] sm:$0xf]
      %v3596 = vld [vmem:[%s11 + $0x34] sm:$0xf]
      %v3597 = vld [vmem:[%s11 + $0x38] sm:$0xf]
      %v3598 = vld [vmem:[%s12] sm:$0x1]
      %v3600 = vlaneseq
      %v3601 = vshrl.u32 %v3600, 7
      %v3602 = vsub.s32 0, %v3601
      %v3603 = vrot.slane %v3598, %v3602
      %v3620 = vunpack.c.l.b16 %v3583
      %v3621 = vunpack.c.l.b16 %v3584
      %v3622 = vunpack.c.l.b16 %v3585
      %v3623 = vunpack.c.l.b16 %v3586
      %v3624 = vunpack.c.l.b16 %v3587
      %v3625 = vunpack.c.l.b16 %v3588
      %v3626 = vunpack.c.l.b16 %v3589
      %v3627 = vunpack.c.l.b16 %v3590
      %v3628 = vunpack.c.l.b16 %v3591
      %v3629 = vunpack.c.l.b16 %v3592
      %v3630 = vunpack.c.l.b16 %v3593
      %v3631 = vunpack.c.l.b16 %v3594
      %v3632 = vunpack.c.l.b16 %v3595
      %v3633 = vunpack.c.l.b16 %v3596
      %v3634 = vunpack.c.l.b16 %v3597
      %v3635 = vpack.c.b16 %v3621, %v3620
      %v3636 = vpack.c.b16 %v3623, %v3622
      %v3637 = vpack.c.b16 %v3625, %v3624
      %v3638 = vpack.c.b16 %v3627, %v3626
      %v3639 = vpack.c.b16 %v3629, %v3628
      %v3640 = vpack.c.b16 %v3631, %v3630
      %v3641 = vpack.c.b16 %v3633, %v3632
      %v3642 = vpack.c.b16 %v3634, %v3634
      %vm3650 = vcmask 982016
      %v3652 = vsel %vm3650, %v3582, 0
      %v3655 = vsel %vm1212, %v3642, 0
      %3657 = vmatprep.subr.bf16.mxu0 0
      %3658 = vmatpush1.bf16.msra.mxu0 %v3635
      %3659 = vmatprep.subr.bf16.mxu0 0
      %3660 = vmatpush1.bf16.msra.mxu0 %v3636
      %3661 = vmatprep.subr.bf16.mxu0 0
      %3662 = vmatpush1.bf16.msra.mxu0 %v3637
      %3663 = vmatprep.subr.bf16.mxu0 0
      %3664 = vmatpush1.bf16.msra.mxu0 %v3638
      %3665 = vmatprep.subr.bf16.mxu0 0
      %3666 = vmatpush1.bf16.msra.mxu0 %v3639
      %3667 = vmatprep.subr.bf16.mxu0 0
      %3668 = vmatpush1.bf16.msra.mxu0 %v3640
      %3669 = vmatprep.subr.bf16.mxu0 0
      %3670 = vmatpush1.bf16.msra.mxu0 %v3641
      %3671 = vmatprep.subr.bf16.mxu0 0
      %3672 = vmatpush1.bf16.msra.mxu0 %v3655
      %3673 = vmatprep.subr.bf16.mxu0 0
      %3674 = vmatpush1.bf16.msra.mxu0 0
      %3675 = vmatprep.subr.bf16.mxu0 0
      %3676 = vmatpush1.bf16.msra.mxu0 0
      %3677 = vmatprep.subr.bf16.mxu0 0
      %3678 = vmatpush1.bf16.msra.mxu0 0
      %3679 = vmatprep.subr.bf16.mxu0 0
      %3680 = vmatpush1.bf16.msra.mxu0 0
      %3681 = vmatprep.subr.bf16.mxu0 0
      %3682 = vmatpush1.bf16.msra.mxu0 0
      %3683 = vmatprep.subr.bf16.mxu0 0
      %3684 = vmatpush1.bf16.msra.mxu0 0
      %3685 = vmatprep.subr.bf16.mxu0 0
      %3686 = vmatpush1.bf16.msra.mxu0 0
      %3687 = vmatprep.subr.bf16.mxu0 0
      %3688 = vmatpush1.bf16.msra.mxu0 0
      %3689 = vmatprep.mubr.bf16.mxu0 0
      %3690 = vmatmul.mubr.bf16.gmra.mrb[0].mxu0 %v3652
      %v3691 = vpop.f32.mrb[0].mxu0
      %v3692 = vadd.f32 %v3603, %v3691
      %v3693 = vpop.f32.mrb[0].mxu0
      %v3694 = vpop.f32.mrb[0].mxu0
      %v3695 = vpop.f32.mrb[0].mxu0
      %3696 = vdwg.mxu0
      %v3697 = vtanh.pop %v3692
      %v3698 = vpack.c.bf16 %v3697, %v3697
      %v3699 = vld [vmem:[%s13] sm:$0xf]
      %v3700 = vld [vmem:[%s13 + $0x4] sm:$0xf]
      %v3701 = vld [vmem:[%s13 + $0x8] sm:$0xf]
      %v3702 = vld [vmem:[%s13 + $0xc] sm:$0xf]
      %v3703 = vld [vmem:[%s13 + $0x10] sm:$0xf]
      %v3704 = vld [vmem:[%s13 + $0x14] sm:$0xf]
      %v3705 = vld [vmem:[%s13 + $0x18] sm:$0xf]
      %v3706 = vld [vmem:[%s13 + $0x1c] sm:$0xf]
      %v3707 = vld [vmem:[%s13 + $0x20] sm:$0xf]
      %v3708 = vld [vmem:[%s13 + $0x24] sm:$0xf]
      %v3709 = vld [vmem:[%s13 + $0x28] sm:$0x3]
      %v3710 = vld [vmem:[%s14] sm:$0x1]
      %v3712 = vlaneseq
      %v3713 = vshrl.u32 %v3712, 7
      %v3714 = vsub.s32 0, %v3713
      %v3715 = vrot.slane %v3710, %v3714
      %v3728 = vunpack.c.l.b16 %v3699
      %v3729 = vunpack.c.l.b16 %v3700
      %v3730 = vunpack.c.l.b16 %v3701
      %v3731 = vunpack.c.l.b16 %v3702
      %v3732 = vunpack.c.l.b16 %v3703
      %v3733 = vunpack.c.l.b16 %v3704
      %v3734 = vunpack.c.l.b16 %v3705
      %v3735 = vunpack.c.l.b16 %v3706
      %v3736 = vunpack.c.l.b16 %v3707
      %v3737 = vunpack.c.l.b16 %v3708
      %v3738 = vunpack.c.l.b16 %v3709
      %v3739 = vpack.c.b16 %v3729, %v3728
      %v3740 = vpack.c.b16 %v3731, %v3730
      %v3741 = vpack.c.b16 %v3733, %v3732
      %v3742 = vpack.c.b16 %v3735, %v3734
      %v3743 = vpack.c.b16 %v3737, %v3736
      %v3744 = vpack.c.b16 %v3738, %v3738
      %v3751 = vsel %vm2255, %v3698, 0
      %v3754 = vsel %vm2664, %v3744, 0
      %3756 = vmatprep.subr.bf16.mxu0 0
      %3757 = vmatpush1.bf16.msra.mxu0 %v3739
      %3758 = vmatprep.subr.bf16.mxu0 0
      %3759 = vmatpush1.bf16.msra.mxu0 %v3740
      %3760 = vmatprep.subr.bf16.mxu0 0
      %3761 = vmatpush1.bf16.msra.mxu0 %v3741
      %3762 = vmatprep.subr.bf16.mxu0 0
      %3763 = vmatpush1.bf16.msra.mxu0 %v3742
      %3764 = vmatprep.subr.bf16.mxu0 0
      %3765 = vmatpush1.bf16.msra.mxu0 %v3743
      %3766 = vmatprep.subr.bf16.mxu0 0
      %3767 = vmatpush1.bf16.msra.mxu0 %v3754
      %3768 = vmatprep.subr.bf16.mxu0 0
      %3769 = vmatpush1.bf16.msra.mxu0 0
      %3770 = vmatprep.subr.bf16.mxu0 0
      %3771 = vmatpush1.bf16.msra.mxu0 0
      %3772 = vmatprep.subr.bf16.mxu0 0
      %3773 = vmatpush1.bf16.msra.mxu0 0
      %3774 = vmatprep.subr.bf16.mxu0 0
      %3775 = vmatpush1.bf16.msra.mxu0 0
      %3776 = vmatprep.subr.bf16.mxu0 0
      %3777 = vmatpush1.bf16.msra.mxu0 0
      %3778 = vmatprep.subr.bf16.mxu0 0
      %3779 = vmatpush1.bf16.msra.mxu0 0
      %3780 = vmatprep.subr.bf16.mxu0 0
      %3781 = vmatpush1.bf16.msra.mxu0 0
      %3782 = vmatprep.subr.bf16.mxu0 0
      %3783 = vmatpush1.bf16.msra.mxu0 0
      %3784 = vmatprep.subr.bf16.mxu0 0
      %3785 = vmatpush1.bf16.msra.mxu0 0
      %3786 = vmatprep.subr.bf16.mxu0 0
      %3787 = vmatpush1.bf16.msra.mxu0 0
      %3788 = vmatprep.mubr.bf16.mxu0 0
      %3789 = vmatmul.mubr.bf16.gmra.mrb[0].mxu0 %v3751
      %v3790 = vpop.f32.mrb[0].mxu0
      %v3791 = vadd.f32 %v3715, %v3790
      %v3792 = vpop.f32.mrb[0].mxu0
      %v3793 = vpop.f32.mrb[0].mxu0
      %v3794 = vpop.f32.mrb[0].mxu0
      %3795 = vdwg.mxu0
      %vm3796 = vcmask 80896
      %v3797 = vsel %vm3796, %v3791, -inf
      %3798 = vmax.xlane.f32.xlu0 %v3797
      %v3799 = vpop.xlane.xlu0 %3798
      %v3800 = vsub.f32 %v3791, %v3799
      %v3801 = vmul.f32 %v3800, 1.442695
      %v3802 = vpow.pop %v3801
      %v3803 = vsel %vm3796, %v3802, 0.0
      %3804 = vadd.xlane.f32.xlu0 %v3803
      %v3805 = vpop.xlane.xlu0 %3804
      %v3806 = vrcp.pop %v3805
      %v3807 = vmul.f32 %v3802, %v3806
      %3809 = vrot.lane.b32.xlu0 %v3807, 10
      %v3810 = vpop.permute.xlu0 %3809
      %v3812 = vsel %vm3796, %v3791, %v3810
      %vm3813 = vcmask 162816
      %3814 = vst.msk [vmem:[%s497] sm:$0xff] %vm3813, %v3812
      %p3815 = scmp.lt.s32.totalorder %s26, 1
      %s3816 = scalar_select %p3815, %s26, 1
      %s3817 = smul.addr %s3816, 8
      %s3818 = scalar_lea.vmem %s15, %s3817
      // Predicated region
      $region81: #{lenet5_forward.1} parent=79 // pred_check
        %p3819 = pneg %p364
      $region82: #{lenet5_forward.1} parent=79 // pred_check_branch
        %3821 = sbr.rel (%p3819) target = $region84
      $region83: #{lenet5_forward.1} parent=79 // pred_region
        _
      $region84: #{lenet5_forward.1} parent=79 // pred_fallthru
        _
    $region80: #{lenet5_forward.1} parent=5 // pred_fallthru
      _
    %p3822 = scmp.le.s32.totalorder 2, %s21
    // Predicated region
    $region85: #{lenet5_forward.1} parent=5 // pred_check
      %p3823 = pneg %p3822
    $region86: #{lenet5_forward.1} parent=5 // pred_check_branch
      %3825 = sbr.rel (%p3823) target = $region88
    $region87: #{lenet5_forward.1} parent=5 // pred_region
      %s3826 = ssub.s32 %s21, 2
      // Predicated region
      $region89: #{lenet5_forward.1} parent=87 // pred_check
        %p3827 = pneg %p370
      $region90: #{lenet5_forward.1} parent=87 // pred_check_branch
        %3829 = sbr.rel (%p3827) target = $region92
      $region91: #{lenet5_forward.1} parent=87 // pred_region
        %p3830 = scmp.lt.s32.totalorder %s27, 1
        %s3831 = scalar_select %p3830, %s27, 1
        %s3832 = smul.addr %s3831, 8
        %s3833 = scalar_lea.vmem %s15, %s3832
      $region92: #{lenet5_forward.1} parent=87 // pred_fallthru
        _
    $region88: #{lenet5_forward.1} parent=5 // pred_fallthru
      _
  $region6: #{lenet5_forward.1} parent=0 // loop_footer
    %s25 = sadd.s32 1, %s21
  $region7: #{lenet5_forward.1} parent=0 // loop_footer_branch
    %20 = sbr.rel target = $region3
  $region8: #{lenet5_forward.1} parent=0 // loop_exit
    _

</llo_original>
